<compile_context>
chip_gen: v7x
topology: tpu7x:2x2x1
jax: 0.10.0
libtpu: 0.0.40
codegen_flags: <defaults>
</compile_context>

<pallas_src>
import math
import jax
import jax.numpy as jnp
from jax.experimental import pallas as pl
from jax.experimental.pallas import tpu as pltpu

# ----- small synthetic config -----
B = 2                      # batch
C = 3                      # channels
IMG = 16                   # image size
PATCH = 8                  # patch size
GRID = IMG // PATCH
N_PATCH = GRID * GRID      # 4 patches
SEQ = N_PATCH + 1          # 5 tokens (CLS + patches)
ROWS = B * SEQ             # batch folded into rows
HID = 32                   # hidden size
N_HEADS = 2
HEAD_D = HID // N_HEADS
MLP = 64                   # intermediate size
N_LAYERS = 2
EPS = 1e-12                # HF ViT layernorm eps
PATCH_DIM = C * PATCH * PATCH


# --------------------------- fused Pallas kernel -----------------------------

def _vit_fused_kernel(patches_ref, pw_ref, ebias_ref, abias_ref, hmask_ref, sel_ref,
                      ln1g_ref, ln1b_ref, wq_ref, bq_ref, wk_ref, bk_ref,
                      wv_ref, bv_ref, wo_ref, bo_ref, ln2g_ref, ln2b_ref,
                      w1_ref, b1_ref, w2_ref, b2_ref,
                      lng_ref, lnb_ref, poolw_ref, poolb_ref,
                      seq_ref, pool_ref):
    # ---- patch embedding (+ pre-folded cls/pos/bias) ----
    x = jnp.dot(patches_ref[...], pw_ref[...],
                preferred_element_type=jnp.float32) + ebias_ref[...]

    abias = abias_ref[...]                       # (ROWS, ROWS) batch block-diag bias
    scale = 1.0 / math.sqrt(HEAD_D)

    def layernorm(h, g, b):
        mu = jnp.mean(h, axis=-1, keepdims=True)
        var = jnp.mean((h - mu) ** 2, axis=-1, keepdims=True)
        return (h - mu) * jax.lax.rsqrt(var + EPS) * g + b

    # static unroll over layers: all weights stay VMEM-resident
    for li in range(N_LAYERS):
        # --- self attention (pre-LN) ---
        h = layernorm(x, ln1g_ref[li], ln1b_ref[li])
        q = jnp.dot(h, wq_ref[li], preferred_element_type=jnp.float32) + bq_ref[li]
        k = jnp.dot(h, wk_ref[li], preferred_element_type=jnp.float32) + bk_ref[li]
        v = jnp.dot(h, wv_ref[li], preferred_element_type=jnp.float32) + bv_ref[li]

        ctx = jnp.zeros((ROWS, HID), jnp.float32)
        for hi in range(N_HEADS):                # heads via full-lane masking
            hm = hmask_ref[hi]                   # (1, HID), 1.0 on this head's lanes
            s = jax.lax.dot_general(q, k * hm, (((1,), (1,)), ((), ())),
                                    preferred_element_type=jnp.float32)
            s = s * scale + abias                # block cross-batch attention
            s = s - jnp.max(s, axis=-1, keepdims=True)
            e = jnp.exp(s)
            inv = pl.reciprocal(jnp.sum(e, axis=-1, keepdims=True), approx=False)
            p = e * inv
            ctx = ctx + jnp.dot(p, v * hm, preferred_element_type=jnp.float32)

        x = x + jnp.dot(ctx, wo_ref[li], preferred_element_type=jnp.float32) + bo_ref[li]

        # --- MLP (pre-LN) ---
        h = layernorm(x, ln2g_ref[li], ln2b_ref[li])
        m = jnp.dot(h, w1_ref[li], preferred_element_type=jnp.float32) + b1_ref[li]
        # TODO(synk): tanh-approx GELU; PyTorch/HF ViT uses exact erf GELU.
        m = jax.nn.gelu(m)
        x = x + jnp.dot(m, w2_ref[li], preferred_element_type=jnp.float32) + b2_ref[li]

    # ---- final layernorm + pooler (CLS rows picked by constant one-hot matmul) ----
    xf = layernorm(x, lng_ref[...], lnb_ref[...])
    seq_ref[...] = xf
    cls_tok = jnp.dot(sel_ref[...], xf, preferred_element_type=jnp.float32)   # (B, HID)
    pool_ref[...] = jnp.tanh(
        jnp.dot(cls_tok, poolw_ref[...], preferred_element_type=jnp.float32)
        + poolb_ref[...])


# --------------------------- wrapper ------------------------------------------

def _to_patches(pixel_values):
    # NCHW -> (B, N_PATCH, C*P*P) with (C, ph, pw) flattening order (Conv2d-compatible)
    x = pixel_values.astype(jnp.float32)
    x = x.reshape(B, C, GRID, PATCH, GRID, PATCH)
    x = x.transpose(0, 2, 4, 1, 3, 5)
    return x.reshape(B, N_PATCH, PATCH_DIM)


def mrsv_vit_forward(pixel_values, params):
    patches = _to_patches(pixel_values)                                   # (B, N_PATCH, PD)
    # zero row per batch at token 0 (CLS placeholder); its projection is 0 and the
    # CLS embedding comes in via embed_bias below.
    patches_rows = jnp.pad(patches, ((0, 0), (1, 0), (0, 0))).reshape(ROWS, PATCH_DIM)

    # constant-folded additive embedding term: pos + patch_b, with cls replacing
    # patch_b on CLS rows (so CLS rows become cls + pos[0]).
    tok = jnp.arange(ROWS) % SEQ
    cls_ind = (tok == 0).astype(jnp.float32)[:, None]                      # (ROWS, 1)
    pos_tiled = jnp.tile(params["pos"][0], (B, 1))                         # (ROWS, HID)
    embed_bias = (pos_tiled + params["patch_b"]
                  + cls_ind * (params["cls"] - params["patch_b"]))

    # additive attention bias: 0 within a batch, -1e9 across batches
    batch_id = jnp.arange(ROWS) // SEQ
    attn_bias = jnp.where(batch_id[:, None] == batch_id[None, :],
                          0.0, -1e9).astype(jnp.float32)                   # (ROWS, ROWS)

    # per-head lane masks (1.0 on that head's HID lanes)
    lane = jnp.arange(HID)
    head_mask = jnp.stack(
        [(lane // HEAD_D == h).astype(jnp.float32)[None, :] for h in range(N_HEADS)],
        axis=0)                                                            # (N_HEADS, 1, HID)

    # one-hot selector of CLS rows for the pooler
    cls_sel = (jnp.arange(B)[:, None] * SEQ
               == jnp.arange(ROWS)[None, :]).astype(jnp.float32)           # (B, ROWS)

    # stack per-layer params along a leading layer axis
    stacked = [jnp.stack([lp[j] for lp in params["layers"]], axis=0) for j in range(16)]

    inputs = [patches_rows, params["patch_w"], embed_bias, attn_bias, head_mask, cls_sel,
              *stacked,
              params["ln_g"], params["ln_b"], params["pool_w"], params["pool_b"]]

    def full_spec(a):
        nd = a.ndim
        return pl.BlockSpec(a.shape, lambda i, nd=nd: (0,) * nd)

    seq_flat, pooled = pl.pallas_call(
        _vit_fused_kernel,
        out_shape=(jax.ShapeDtypeStruct((ROWS, HID), jnp.float32),
                   jax.ShapeDtypeStruct((B, HID), jnp.float32)),
        grid=(1,),
        in_specs=[full_spec(a) for a in inputs],
        out_specs=(pl.BlockSpec((ROWS, HID), lambda i: (0, 0)),
                   pl.BlockSpec((B, HID), lambda i: (0, 0))),
        compiler_params=pltpu.CompilerParams(dimension_semantics=("arbitrary",)),
    )(*inputs)

    # (B*SEQ, HID) -> (B, SEQ, HID): pure metadata reshape on the XLA side
    return seq_flat.reshape(B, SEQ, HID), pooled


# --------------------------- parameters ---------------------------------------

def init_params(key):
    ks = iter(jax.random.split(key, 32))

    def nrm(shape, scale=0.02):
        return (scale * jax.random.normal(next(ks), shape)).astype(jnp.float32)

    def zeros(shape):
        return jnp.zeros(shape, jnp.float32)

    def ones(shape):
        return jnp.ones(shape, jnp.float32)

    params = {
        "patch_w": nrm((PATCH_DIM, HID)),
        "patch_b": zeros((1, HID)),
        "cls": nrm((1, HID)),
        "pos": nrm((1, SEQ, HID)),
        "ln_g": ones((1, HID)),
        "ln_b": zeros((1, HID)),
        "pool_w": nrm((HID, HID)),
        "pool_b": zeros((1, HID)),
    }
    layers = []
    for _ in range(N_LAYERS):
        layers.append((
            ones((1, HID)), zeros((1, HID)),            # ln_before gamma/beta
            nrm((HID, HID)), zeros((1, HID)),           # q
            nrm((HID, HID)), zeros((1, HID)),           # k
            nrm((HID, HID)), zeros((1, HID)),           # v
            nrm((HID, HID)), zeros((1, HID)),           # attn output proj
            ones((1, HID)), zeros((1, HID)),            # ln_after gamma/beta
            nrm((HID, MLP)), zeros((1, MLP)),           # mlp intermediate
            nrm((MLP, HID)), zeros((1, HID)),           # mlp output
        ))
    params["layers"] = layers
    return params


# --------------------------- pure-JAX reference --------------------------------

def reference_forward(pixel_values, params):
    x = _to_patches(pixel_values)
    proj = x @ params["patch_w"] + params["patch_b"][0]
    cls = jnp.broadcast_to(params["cls"][None], (B, 1, HID))
    h = jnp.concatenate([cls, proj], axis=1) + params["pos"]

    def ln(h, g, b):
        mu = h.mean(-1, keepdims=True)
        var = ((h - mu) ** 2).mean(-1, keepdims=True)
        return (h - mu) * jax.lax.rsqrt(var + EPS) * g[0] + b[0]

    for (l1g, l1b, wq, bq, wk, bk, wv, bv, wo, bo,
         l2g, l2b, w1, b1, w2, b2) in params["layers"]:
        z = ln(h, l1g, l1b)
        q = (z @ wq + bq[0]).reshape(B, SEQ, N_HEADS, HEAD_D).transpose(0, 2, 1, 3)
        k = (z @ wk + bk[0]).reshape(B, SEQ, N_HEADS, HEAD_D).transpose(0, 2, 1, 3)
        v = (z @ wv + bv[0]).reshape(B, SEQ, N_HEADS, HEAD_D).transpose(0, 2, 1, 3)
        s = jnp.einsum("bhqd,bhkd->bhqk", q, k) / math.sqrt(HEAD_D)
        p = jax.nn.softmax(s, axis=-1)
        ctx = jnp.einsum("bhqk,bhkd->bhqd", p, v).transpose(0, 2, 1, 3).reshape(B, SEQ, HID)
        h = h + ctx @ wo + bo[0]
        z = ln(h, l2g, l2b)
        h = h + jax.nn.gelu(z @ w1 + b1[0]) @ w2 + b2[0]

    seq_out = ln(h, params["ln_g"], params["ln_b"])
    pooled = jnp.tanh(seq_out[:, 0, :] @ params["pool_w"] + params["pool_b"][0])
    return seq_out, pooled


# --------------------------- main ----------------------------------------------

if __name__ == "__main__":
    key = jax.random.PRNGKey(0)
    kx, kp = jax.random.split(key)
    pixel_values = jax.random.normal(kx, (B, C, IMG, IMG), jnp.float32)
    params = init_params(kp)

    seq_out, pooled = mrsv_vit_forward(pixel_values, params)
    jax.block_until_ready((seq_out, pooled))

    ref_seq, ref_pool = reference_forward(pixel_values, params)
    assert seq_out.shape == (B, SEQ, HID) and pooled.shape == (B, HID)
    assert jnp.allclose(seq_out, ref_seq, atol=1e-4, rtol=1e-4), "sequence_output mismatch"
    assert jnp.allclose(pooled, ref_pool, atol=1e-4, rtol=1e-4), "pooler_output mismatch"
    print("KERNEL_OK")
</pallas_src>

<mosaic_0001>
module attributes {stable_mosaic.version = 11 : i64} {
  func.func @_vit_fused_kernel(%arg0: i32, %arg1: memref<10x192xf32, #tpu.memory_space<vmem>>, %arg2: memref<192x32xf32, #tpu.memory_space<vmem>>, %arg3: memref<10x32xf32, #tpu.memory_space<vmem>>, %arg4: memref<10x10xf32, #tpu.memory_space<vmem>>, %arg5: memref<2x1x32xf32, #tpu.memory_space<vmem>>, %arg6: memref<2x10xf32, #tpu.memory_space<vmem>>, %arg7: memref<2x1x32xf32, #tpu.memory_space<vmem>>, %arg8: memref<2x1x32xf32, #tpu.memory_space<vmem>>, %arg9: memref<2x32x32xf32, #tpu.memory_space<vmem>>, %arg10: memref<2x1x32xf32, #tpu.memory_space<vmem>>, %arg11: memref<2x32x32xf32, #tpu.memory_space<vmem>>, %arg12: memref<2x1x32xf32, #tpu.memory_space<vmem>>, %arg13: memref<2x32x32xf32, #tpu.memory_space<vmem>>, %arg14: memref<2x1x32xf32, #tpu.memory_space<vmem>>, %arg15: memref<2x32x32xf32, #tpu.memory_space<vmem>>, %arg16: memref<2x1x32xf32, #tpu.memory_space<vmem>>, %arg17: memref<2x1x32xf32, #tpu.memory_space<vmem>>, %arg18: memref<2x1x32xf32, #tpu.memory_space<vmem>>, %arg19: memref<2x32x64xf32, #tpu.memory_space<vmem>>, %arg20: memref<2x1x64xf32, #tpu.memory_space<vmem>>, %arg21: memref<2x64x32xf32, #tpu.memory_space<vmem>>, %arg22: memref<2x1x32xf32, #tpu.memory_space<vmem>>, %arg23: memref<1x32xf32, #tpu.memory_space<vmem>>, %arg24: memref<1x32xf32, #tpu.memory_space<vmem>>, %arg25: memref<32x32xf32, #tpu.memory_space<vmem>>, %arg26: memref<1x32xf32, #tpu.memory_space<vmem>>, %arg27: memref<10x32xf32, #tpu.memory_space<vmem>>, %arg28: memref<2x32xf32, #tpu.memory_space<vmem>>) attributes {dimension_semantics = [#tpu.dimension_semantics<arbitrary>], iteration_bounds = array<i64: 1>, scalar_prefetch = 0 : i64, scratch_operands = 0 : i64, tpu.core_type = #tpu.core_type<tc>, window_params = [{pipeline_mode = #tpu.pipeline_mode<synchronous>, transform_indices = @transform_0, window_bounds = array<i64: 10, 192>}, {pipeline_mode = #tpu.pipeline_mode<synchronous>, transform_indices = @transform_1, window_bounds = array<i64: 192, 32>}, {pipeline_mode = #tpu.pipeline_mode<synchronous>, transform_indices = @transform_2, window_bounds = array<i64: 10, 32>}, {pipeline_mode = #tpu.pipeline_mode<synchronous>, transform_indices = @transform_3, window_bounds = array<i64: 10, 10>}, {pipeline_mode = #tpu.pipeline_mode<synchronous>, transform_indices = @transform_4, window_bounds = array<i64: 2, 1, 32>}, {pipeline_mode = #tpu.pipeline_mode<synchronous>, transform_indices = @transform_5, window_bounds = array<i64: 2, 10>}, {pipeline_mode = #tpu.pipeline_mode<synchronous>, transform_indices = @transform_6, window_bounds = array<i64: 2, 1, 32>}, {pipeline_mode = #tpu.pipeline_mode<synchronous>, transform_indices = @transform_7, window_bounds = array<i64: 2, 1, 32>}, {pipeline_mode = #tpu.pipeline_mode<synchronous>, transform_indices = @transform_8, window_bounds = array<i64: 2, 32, 32>}, {pipeline_mode = #tpu.pipeline_mode<synchronous>, transform_indices = @transform_9, window_bounds = array<i64: 2, 1, 32>}, {pipeline_mode = #tpu.pipeline_mode<synchronous>, transform_indices = @transform_10, window_bounds = array<i64: 2, 32, 32>}, {pipeline_mode = #tpu.pipeline_mode<synchronous>, transform_indices = @transform_11, window_bounds = array<i64: 2, 1, 32>}, {pipeline_mode = #tpu.pipeline_mode<synchronous>, transform_indices = @transform_12, window_bounds = array<i64: 2, 32, 32>}, {pipeline_mode = #tpu.pipeline_mode<synchronous>, transform_indices = @transform_13, window_bounds = array<i64: 2, 1, 32>}, {pipeline_mode = #tpu.pipeline_mode<synchronous>, transform_indices = @transform_14, window_bounds = array<i64: 2, 32, 32>}, {pipeline_mode = #tpu.pipeline_mode<synchronous>, transform_indices = @transform_15, window_bounds = array<i64: 2, 1, 32>}, {pipeline_mode = #tpu.pipeline_mode<synchronous>, transform_indices = @transform_16, window_bounds = array<i64: 2, 1, 32>}, {pipeline_mode = #tpu.pipeline_mode<synchronous>, transform_indices = @transform_17, window_bounds = array<i64: 2, 1, 32>}, {pipeline_mode = #tpu.pipeline_mode<synchronous>, transform_indices = @transform_18, window_bounds = array<i64: 2, 32, 64>}, {pipeline_mode = #tpu.pipeline_mode<synchronous>, transform_indices = @transform_19, window_bounds = array<i64: 2, 1, 64>}, {pipeline_mode = #tpu.pipeline_mode<synchronous>, transform_indices = @transform_20, window_bounds = array<i64: 2, 64, 32>}, {pipeline_mode = #tpu.pipeline_mode<synchronous>, transform_indices = @transform_21, window_bounds = array<i64: 2, 1, 32>}, {pipeline_mode = #tpu.pipeline_mode<synchronous>, transform_indices = @transform_22, window_bounds = array<i64: 1, 32>}, {pipeline_mode = #tpu.pipeline_mode<synchronous>, transform_indices = @transform_23, window_bounds = array<i64: 1, 32>}, {pipeline_mode = #tpu.pipeline_mode<synchronous>, transform_indices = @transform_24, window_bounds = array<i64: 32, 32>}, {pipeline_mode = #tpu.pipeline_mode<synchronous>, transform_indices = @transform_25, window_bounds = array<i64: 1, 32>}, {pipeline_mode = #tpu.pipeline_mode<synchronous>, transform_indices = @transform_26, window_bounds = array<i64: 10, 32>}, {pipeline_mode = #tpu.pipeline_mode<synchronous>, transform_indices = @transform_27, window_bounds = array<i64: 2, 32>}]} {
    %c0 = arith.constant 0 : index
    %c0_0 = arith.constant 0 : index
    %0 = vector.load %arg1[%c0, %c0_0] : memref<10x192xf32, #tpu.memory_space<vmem>>, vector<10x192xf32>
    %c0_1 = arith.constant 0 : index
    %c0_2 = arith.constant 0 : index
    %1 = vector.load %arg2[%c0_1, %c0_2] : memref<192x32xf32, #tpu.memory_space<vmem>>, vector<192x32xf32>
    %cst = arith.constant dense<0.000000e+00> : vector<10x32xf32>
    %2 = tpu.matmul %0, %1, %cst {dimension_numbers = #tpu.dot_dimension_numbers<[1], [0], [0], [1], [0, 0, 1, 1], [], []>} : vector<10x192xf32>, vector<192x32xf32>, vector<10x32xf32> -> vector<10x32xf32>
    %c0_3 = arith.constant 0 : index
    %c0_4 = arith.constant 0 : index
    %3 = vector.load %arg3[%c0_3, %c0_4] : memref<10x32xf32, #tpu.memory_space<vmem>>, vector<10x32xf32>
    %4 = arith.addf %2, %3 : vector<10x32xf32>
    %c0_5 = arith.constant 0 : index
    %c0_6 = arith.constant 0 : index
    %5 = vector.load %arg4[%c0_5, %c0_6] : memref<10x10xf32, #tpu.memory_space<vmem>>, vector<10x10xf32>
    %c0_7 = arith.constant 0 : index
    %c0_8 = arith.constant 0 : index
    %c0_9 = arith.constant 0 : index
    %6 = vector.load %arg7[%c0_7, %c0_8, %c0_9] : memref<2x1x32xf32, #tpu.memory_space<vmem>>, vector<1x1x32xf32>
    %7 = vector.shape_cast %6 : vector<1x1x32xf32> to vector<1x32xf32>
    %c0_10 = arith.constant 0 : index
    %c0_11 = arith.constant 0 : index
    %c0_12 = arith.constant 0 : index
    %8 = vector.load %arg8[%c0_10, %c0_11, %c0_12] : memref<2x1x32xf32, #tpu.memory_space<vmem>>, vector<1x1x32xf32>
    %9 = vector.shape_cast %8 : vector<1x1x32xf32> to vector<1x32xf32>
    %cst_13 = arith.constant dense<0.000000e+00> : vector<10xf32>
    %10 = vector.multi_reduction <add>, %4, %cst_13 [1] : vector<10x32xf32> to vector<10xf32>
    %11 = vector.shape_cast %10 : vector<10xf32> to vector<10x1xf32>
    %cst_14 = arith.constant 3.200000e+01 : f32
    %12 = vector.broadcast %cst_14 : f32 to vector<10x1xf32>
    %13 = arith.divf %11, %12 : vector<10x1xf32>
    %14 = vector.broadcast %13 : vector<10x1xf32> to vector<10x32xf32>
    %15 = arith.subf %4, %14 : vector<10x32xf32>
    %16 = arith.mulf %15, %15 : vector<10x32xf32>
    %cst_15 = arith.constant dense<0.000000e+00> : vector<10xf32>
    %17 = vector.multi_reduction <add>, %16, %cst_15 [1] : vector<10x32xf32> to vector<10xf32>
    %18 = vector.shape_cast %17 : vector<10xf32> to vector<10x1xf32>
    %cst_16 = arith.constant 3.200000e+01 : f32
    %19 = vector.broadcast %cst_16 : f32 to vector<10x1xf32>
    %20 = arith.divf %18, %19 : vector<10x1xf32>
    %21 = vector.broadcast %13 : vector<10x1xf32> to vector<10x32xf32>
    %22 = arith.subf %4, %21 : vector<10x32xf32>
    %cst_17 = arith.constant 9.99999996E-13 : f32
    %23 = vector.broadcast %cst_17 : f32 to vector<10x1xf32>
    %24 = arith.addf %20, %23 : vector<10x1xf32>
    %25 = math.rsqrt %24 : vector<10x1xf32>
    %26 = vector.broadcast %25 : vector<10x1xf32> to vector<10x32xf32>
    %27 = arith.mulf %22, %26 : vector<10x32xf32>
    %28 = vector.broadcast %7 : vector<1x32xf32> to vector<10x32xf32>
    %29 = arith.mulf %27, %28 : vector<10x32xf32>
    %30 = vector.broadcast %9 : vector<1x32xf32> to vector<10x32xf32>
    %31 = arith.addf %29, %30 : vector<10x32xf32>
    %c0_18 = arith.constant 0 : index
    %c0_19 = arith.constant 0 : index
    %c0_20 = arith.constant 0 : index
    %32 = vector.load %arg9[%c0_18, %c0_19, %c0_20] : memref<2x32x32xf32, #tpu.memory_space<vmem>>, vector<1x32x32xf32>
    %33 = vector.shape_cast %32 : vector<1x32x32xf32> to vector<32x32xf32>
    %cst_21 = arith.constant dense<0.000000e+00> : vector<10x32xf32>
    %34 = tpu.matmul %31, %33, %cst_21 {dimension_numbers = #tpu.dot_dimension_numbers<[1], [0], [0], [1], [0, 0, 1, 1], [], []>} : vector<10x32xf32>, vector<32x32xf32>, vector<10x32xf32> -> vector<10x32xf32>
    %c0_22 = arith.constant 0 : index
    %c0_23 = arith.constant 0 : index
    %c0_24 = arith.constant 0 : index
    %35 = vector.load %arg10[%c0_22, %c0_23, %c0_24] : memref<2x1x32xf32, #tpu.memory_space<vmem>>, vector<1x1x32xf32>
    %36 = vector.shape_cast %35 : vector<1x1x32xf32> to vector<1x32xf32>
    %37 = vector.broadcast %36 : vector<1x32xf32> to vector<10x32xf32>
    %38 = arith.addf %34, %37 : vector<10x32xf32>
    %c0_25 = arith.constant 0 : index
    %c0_26 = arith.constant 0 : index
    %c0_27 = arith.constant 0 : index
    %39 = vector.load %arg11[%c0_25, %c0_26, %c0_27] : memref<2x32x32xf32, #tpu.memory_space<vmem>>, vector<1x32x32xf32>
    %40 = vector.shape_cast %39 : vector<1x32x32xf32> to vector<32x32xf32>
    %cst_28 = arith.constant dense<0.000000e+00> : vector<10x32xf32>
    %41 = tpu.matmul %31, %40, %cst_28 {dimension_numbers = #tpu.dot_dimension_numbers<[1], [0], [0], [1], [0, 0, 1, 1], [], []>} : vector<10x32xf32>, vector<32x32xf32>, vector<10x32xf32> -> vector<10x32xf32>
    %c0_29 = arith.constant 0 : index
    %c0_30 = arith.constant 0 : index
    %c0_31 = arith.constant 0 : index
    %42 = vector.load %arg12[%c0_29, %c0_30, %c0_31] : memref<2x1x32xf32, #tpu.memory_space<vmem>>, vector<1x1x32xf32>
    %43 = vector.shape_cast %42 : vector<1x1x32xf32> to vector<1x32xf32>
    %44 = vector.broadcast %43 : vector<1x32xf32> to vector<10x32xf32>
    %45 = arith.addf %41, %44 : vector<10x32xf32>
    %c0_32 = arith.constant 0 : index
    %c0_33 = arith.constant 0 : index
    %c0_34 = arith.constant 0 : index
    %46 = vector.load %arg13[%c0_32, %c0_33, %c0_34] : memref<2x32x32xf32, #tpu.memory_space<vmem>>, vector<1x32x32xf32>
    %47 = vector.shape_cast %46 : vector<1x32x32xf32> to vector<32x32xf32>
    %cst_35 = arith.constant dense<0.000000e+00> : vector<10x32xf32>
    %48 = tpu.matmul %31, %47, %cst_35 {dimension_numbers = #tpu.dot_dimension_numbers<[1], [0], [0], [1], [0, 0, 1, 1], [], []>} : vector<10x32xf32>, vector<32x32xf32>, vector<10x32xf32> -> vector<10x32xf32>
    %c0_36 = arith.constant 0 : index
    %c0_37 = arith.constant 0 : index
    %c0_38 = arith.constant 0 : index
    %49 = vector.load %arg14[%c0_36, %c0_37, %c0_38] : memref<2x1x32xf32, #tpu.memory_space<vmem>>, vector<1x1x32xf32>
    %50 = vector.shape_cast %49 : vector<1x1x32xf32> to vector<1x32xf32>
    %51 = vector.broadcast %50 : vector<1x32xf32> to vector<10x32xf32>
    %52 = arith.addf %48, %51 : vector<10x32xf32>
    %cst_39 = arith.constant 0.000000e+00 : f32
    %53 = vector.broadcast %cst_39 : f32 to vector<10x32xf32>
    %c0_40 = arith.constant 0 : index
    %c0_41 = arith.constant 0 : index
    %c0_42 = arith.constant 0 : index
    %54 = vector.load %arg5[%c0_40, %c0_41, %c0_42] : memref<2x1x32xf32, #tpu.memory_space<vmem>>, vector<1x1x32xf32>
    %55 = vector.shape_cast %54 : vector<1x1x32xf32> to vector<1x32xf32>
    %56 = vector.broadcast %55 : vector<1x32xf32> to vector<10x32xf32>
    %57 = arith.mulf %45, %56 : vector<10x32xf32>
    %cst_43 = arith.constant dense<0.000000e+00> : vector<10x10xf32>
    %58 = tpu.matmul %38, %57, %cst_43 {dimension_numbers = #tpu.dot_dimension_numbers<[1], [1], [0], [0], [0, 0, 1, 0], [], []>} : vector<10x32xf32>, vector<10x32xf32>, vector<10x10xf32> -> vector<10x10xf32>
    %cst_44 = arith.constant 2.500000e-01 : f32
    %59 = vector.broadcast %cst_44 : f32 to vector<10x10xf32>
    %60 = arith.mulf %58, %59 : vector<10x10xf32>
    %61 = arith.addf %60, %5 : vector<10x10xf32>
    %cst_45 = arith.constant dense<0xFF800000> : vector<10xf32>
    %62 = vector.multi_reduction <maximumf>, %61, %cst_45 [1] : vector<10x10xf32> to vector<10xf32>
    %63 = vector.shape_cast %62 : vector<10xf32> to vector<10x1xf32>
    %64 = vector.broadcast %63 : vector<10x1xf32> to vector<10x10xf32>
    %65 = arith.subf %61, %64 : vector<10x10xf32>
    %66 = math.exp %65 : vector<10x10xf32>
    %cst_46 = arith.constant dense<0.000000e+00> : vector<10xf32>
    %67 = vector.multi_reduction <add>, %66, %cst_46 [1] : vector<10x10xf32> to vector<10xf32>
    %68 = vector.shape_cast %67 : vector<10xf32> to vector<10x1xf32>
    %69 = tpu.reciprocal %68 : vector<10x1xf32> -> vector<10x1xf32>
    %70 = vector.broadcast %69 : vector<10x1xf32> to vector<10x10xf32>
    %71 = arith.mulf %66, %70 : vector<10x10xf32>
    %72 = vector.broadcast %55 : vector<1x32xf32> to vector<10x32xf32>
    %73 = arith.mulf %52, %72 : vector<10x32xf32>
    %cst_47 = arith.constant dense<0.000000e+00> : vector<10x32xf32>
    %74 = tpu.matmul %71, %73, %cst_47 {dimension_numbers = #tpu.dot_dimension_numbers<[1], [0], [0], [1], [0, 0, 1, 1], [], []>} : vector<10x10xf32>, vector<10x32xf32>, vector<10x32xf32> -> vector<10x32xf32>
    %75 = arith.addf %53, %74 : vector<10x32xf32>
    %c1 = arith.constant 1 : index
    %c0_48 = arith.constant 0 : index
    %c0_49 = arith.constant 0 : index
    %76 = vector.load %arg5[%c1, %c0_48, %c0_49] : memref<2x1x32xf32, #tpu.memory_space<vmem>>, vector<1x1x32xf32>
    %77 = vector.shape_cast %76 : vector<1x1x32xf32> to vector<1x32xf32>
    %78 = vector.broadcast %77 : vector<1x32xf32> to vector<10x32xf32>
    %79 = arith.mulf %45, %78 : vector<10x32xf32>
    %cst_50 = arith.constant dense<0.000000e+00> : vector<10x10xf32>
    %80 = tpu.matmul %38, %79, %cst_50 {dimension_numbers = #tpu.dot_dimension_numbers<[1], [1], [0], [0], [0, 0, 1, 0], [], []>} : vector<10x32xf32>, vector<10x32xf32>, vector<10x10xf32> -> vector<10x10xf32>
    %cst_51 = arith.constant 2.500000e-01 : f32
    %81 = vector.broadcast %cst_51 : f32 to vector<10x10xf32>
    %82 = arith.mulf %80, %81 : vector<10x10xf32>
    %83 = arith.addf %82, %5 : vector<10x10xf32>
    %cst_52 = arith.constant dense<0xFF800000> : vector<10xf32>
    %84 = vector.multi_reduction <maximumf>, %83, %cst_52 [1] : vector<10x10xf32> to vector<10xf32>
    %85 = vector.shape_cast %84 : vector<10xf32> to vector<10x1xf32>
    %86 = vector.broadcast %85 : vector<10x1xf32> to vector<10x10xf32>
    %87 = arith.subf %83, %86 : vector<10x10xf32>
    %88 = math.exp %87 : vector<10x10xf32>
    %cst_53 = arith.constant dense<0.000000e+00> : vector<10xf32>
    %89 = vector.multi_reduction <add>, %88, %cst_53 [1] : vector<10x10xf32> to vector<10xf32>
    %90 = vector.shape_cast %89 : vector<10xf32> to vector<10x1xf32>
    %91 = tpu.reciprocal %90 : vector<10x1xf32> -> vector<10x1xf32>
    %92 = vector.broadcast %91 : vector<10x1xf32> to vector<10x10xf32>
    %93 = arith.mulf %88, %92 : vector<10x10xf32>
    %94 = vector.broadcast %77 : vector<1x32xf32> to vector<10x32xf32>
    %95 = arith.mulf %52, %94 : vector<10x32xf32>
    %cst_54 = arith.constant dense<0.000000e+00> : vector<10x32xf32>
    %96 = tpu.matmul %93, %95, %cst_54 {dimension_numbers = #tpu.dot_dimension_numbers<[1], [0], [0], [1], [0, 0, 1, 1], [], []>} : vector<10x10xf32>, vector<10x32xf32>, vector<10x32xf32> -> vector<10x32xf32>
    %97 = arith.addf %75, %96 : vector<10x32xf32>
    %c0_55 = arith.constant 0 : index
    %c0_56 = arith.constant 0 : index
    %c0_57 = arith.constant 0 : index
    %98 = vector.load %arg15[%c0_55, %c0_56, %c0_57] : memref<2x32x32xf32, #tpu.memory_space<vmem>>, vector<1x32x32xf32>
    %99 = vector.shape_cast %98 : vector<1x32x32xf32> to vector<32x32xf32>
    %cst_58 = arith.constant dense<0.000000e+00> : vector<10x32xf32>
    %100 = tpu.matmul %97, %99, %cst_58 {dimension_numbers = #tpu.dot_dimension_numbers<[1], [0], [0], [1], [0, 0, 1, 1], [], []>} : vector<10x32xf32>, vector<32x32xf32>, vector<10x32xf32> -> vector<10x32xf32>
    %101 = arith.addf %4, %100 : vector<10x32xf32>
    %c0_59 = arith.constant 0 : index
    %c0_60 = arith.constant 0 : index
    %c0_61 = arith.constant 0 : index
    %102 = vector.load %arg16[%c0_59, %c0_60, %c0_61] : memref<2x1x32xf32, #tpu.memory_space<vmem>>, vector<1x1x32xf32>
    %103 = vector.shape_cast %102 : vector<1x1x32xf32> to vector<1x32xf32>
    %104 = vector.broadcast %103 : vector<1x32xf32> to vector<10x32xf32>
    %105 = arith.addf %101, %104 : vector<10x32xf32>
    %c0_62 = arith.constant 0 : index
    %c0_63 = arith.constant 0 : index
    %c0_64 = arith.constant 0 : index
    %106 = vector.load %arg17[%c0_62, %c0_63, %c0_64] : memref<2x1x32xf32, #tpu.memory_space<vmem>>, vector<1x1x32xf32>
    %107 = vector.shape_cast %106 : vector<1x1x32xf32> to vector<1x32xf32>
    %c0_65 = arith.constant 0 : index
    %c0_66 = arith.constant 0 : index
    %c0_67 = arith.constant 0 : index
    %108 = vector.load %arg18[%c0_65, %c0_66, %c0_67] : memref<2x1x32xf32, #tpu.memory_space<vmem>>, vector<1x1x32xf32>
    %109 = vector.shape_cast %108 : vector<1x1x32xf32> to vector<1x32xf32>
    %cst_68 = arith.constant dense<0.000000e+00> : vector<10xf32>
    %110 = vector.multi_reduction <add>, %105, %cst_68 [1] : vector<10x32xf32> to vector<10xf32>
    %111 = vector.shape_cast %110 : vector<10xf32> to vector<10x1xf32>
    %cst_69 = arith.constant 3.200000e+01 : f32
    %112 = vector.broadcast %cst_69 : f32 to vector<10x1xf32>
    %113 = arith.divf %111, %112 : vector<10x1xf32>
    %114 = vector.broadcast %113 : vector<10x1xf32> to vector<10x32xf32>
    %115 = arith.subf %105, %114 : vector<10x32xf32>
    %116 = arith.mulf %115, %115 : vector<10x32xf32>
    %cst_70 = arith.constant dense<0.000000e+00> : vector<10xf32>
    %117 = vector.multi_reduction <add>, %116, %cst_70 [1] : vector<10x32xf32> to vector<10xf32>
    %118 = vector.shape_cast %117 : vector<10xf32> to vector<10x1xf32>
    %cst_71 = arith.constant 3.200000e+01 : f32
    %119 = vector.broadcast %cst_71 : f32 to vector<10x1xf32>
    %120 = arith.divf %118, %119 : vector<10x1xf32>
    %121 = vector.broadcast %113 : vector<10x1xf32> to vector<10x32xf32>
    %122 = arith.subf %105, %121 : vector<10x32xf32>
    %cst_72 = arith.constant 9.99999996E-13 : f32
    %123 = vector.broadcast %cst_72 : f32 to vector<10x1xf32>
    %124 = arith.addf %120, %123 : vector<10x1xf32>
    %125 = math.rsqrt %124 : vector<10x1xf32>
    %126 = vector.broadcast %125 : vector<10x1xf32> to vector<10x32xf32>
    %127 = arith.mulf %122, %126 : vector<10x32xf32>
    %128 = vector.broadcast %107 : vector<1x32xf32> to vector<10x32xf32>
    %129 = arith.mulf %127, %128 : vector<10x32xf32>
    %130 = vector.broadcast %109 : vector<1x32xf32> to vector<10x32xf32>
    %131 = arith.addf %129, %130 : vector<10x32xf32>
    %c0_73 = arith.constant 0 : index
    %c0_74 = arith.constant 0 : index
    %c0_75 = arith.constant 0 : index
    %132 = vector.load %arg19[%c0_73, %c0_74, %c0_75] : memref<2x32x64xf32, #tpu.memory_space<vmem>>, vector<1x32x64xf32>
    %133 = vector.shape_cast %132 : vector<1x32x64xf32> to vector<32x64xf32>
    %cst_76 = arith.constant dense<0.000000e+00> : vector<10x64xf32>
    %134 = tpu.matmul %131, %133, %cst_76 {dimension_numbers = #tpu.dot_dimension_numbers<[1], [0], [0], [1], [0, 0, 1, 1], [], []>} : vector<10x32xf32>, vector<32x64xf32>, vector<10x64xf32> -> vector<10x64xf32>
    %c0_77 = arith.constant 0 : index
    %c0_78 = arith.constant 0 : index
    %c0_79 = arith.constant 0 : index
    %135 = vector.load %arg20[%c0_77, %c0_78, %c0_79] : memref<2x1x64xf32, #tpu.memory_space<vmem>>, vector<1x1x64xf32>
    %136 = vector.shape_cast %135 : vector<1x1x64xf32> to vector<1x64xf32>
    %137 = vector.broadcast %136 : vector<1x64xf32> to vector<10x64xf32>
    %138 = arith.addf %134, %137 : vector<10x64xf32>
    %139 = arith.mulf %138, %138 : vector<10x64xf32>
    %140 = arith.mulf %138, %139 : vector<10x64xf32>
    %cst_80 = arith.constant 4.471500e-02 : f32
    %141 = vector.broadcast %cst_80 : f32 to vector<10x64xf32>
    %142 = arith.mulf %141, %140 : vector<10x64xf32>
    %143 = arith.addf %138, %142 : vector<10x64xf32>
    %cst_81 = arith.constant 0.797884583 : f32
    %144 = vector.broadcast %cst_81 : f32 to vector<10x64xf32>
    %145 = arith.mulf %144, %143 : vector<10x64xf32>
    %146 = math.tanh %145 : vector<10x64xf32>
    %cst_82 = arith.constant 1.000000e+00 : f32
    %147 = vector.broadcast %cst_82 : f32 to vector<10x64xf32>
    %148 = arith.addf %147, %146 : vector<10x64xf32>
    %cst_83 = arith.constant 5.000000e-01 : f32
    %149 = vector.broadcast %cst_83 : f32 to vector<10x64xf32>
    %150 = arith.mulf %149, %148 : vector<10x64xf32>
    %151 = arith.mulf %138, %150 : vector<10x64xf32>
    %c0_84 = arith.constant 0 : index
    %c0_85 = arith.constant 0 : index
    %c0_86 = arith.constant 0 : index
    %152 = vector.load %arg21[%c0_84, %c0_85, %c0_86] : memref<2x64x32xf32, #tpu.memory_space<vmem>>, vector<1x64x32xf32>
    %153 = vector.shape_cast %152 : vector<1x64x32xf32> to vector<64x32xf32>
    %cst_87 = arith.constant dense<0.000000e+00> : vector<10x32xf32>
    %154 = tpu.matmul %151, %153, %cst_87 {dimension_numbers = #tpu.dot_dimension_numbers<[1], [0], [0], [1], [0, 0, 1, 1], [], []>} : vector<10x64xf32>, vector<64x32xf32>, vector<10x32xf32> -> vector<10x32xf32>
    %155 = arith.addf %105, %154 : vector<10x32xf32>
    %c0_88 = arith.constant 0 : index
    %c0_89 = arith.constant 0 : index
    %c0_90 = arith.constant 0 : index
    %156 = vector.load %arg22[%c0_88, %c0_89, %c0_90] : memref<2x1x32xf32, #tpu.memory_space<vmem>>, vector<1x1x32xf32>
    %157 = vector.shape_cast %156 : vector<1x1x32xf32> to vector<1x32xf32>
    %158 = vector.broadcast %157 : vector<1x32xf32> to vector<10x32xf32>
    %159 = arith.addf %155, %158 : vector<10x32xf32>
    %c1_91 = arith.constant 1 : index
    %c0_92 = arith.constant 0 : index
    %c0_93 = arith.constant 0 : index
    %160 = vector.load %arg7[%c1_91, %c0_92, %c0_93] : memref<2x1x32xf32, #tpu.memory_space<vmem>>, vector<1x1x32xf32>
    %161 = vector.shape_cast %160 : vector<1x1x32xf32> to vector<1x32xf32>
    %c1_94 = arith.constant 1 : index
    %c0_95 = arith.constant 0 : index
    %c0_96 = arith.constant 0 : index
    %162 = vector.load %arg8[%c1_94, %c0_95, %c0_96] : memref<2x1x32xf32, #tpu.memory_space<vmem>>, vector<1x1x32xf32>
    %163 = vector.shape_cast %162 : vector<1x1x32xf32> to vector<1x32xf32>
    %cst_97 = arith.constant dense<0.000000e+00> : vector<10xf32>
    %164 = vector.multi_reduction <add>, %159, %cst_97 [1] : vector<10x32xf32> to vector<10xf32>
    %165 = vector.shape_cast %164 : vector<10xf32> to vector<10x1xf32>
    %cst_98 = arith.constant 3.200000e+01 : f32
    %166 = vector.broadcast %cst_98 : f32 to vector<10x1xf32>
    %167 = arith.divf %165, %166 : vector<10x1xf32>
    %168 = vector.broadcast %167 : vector<10x1xf32> to vector<10x32xf32>
    %169 = arith.subf %159, %168 : vector<10x32xf32>
    %170 = arith.mulf %169, %169 : vector<10x32xf32>
    %cst_99 = arith.constant dense<0.000000e+00> : vector<10xf32>
    %171 = vector.multi_reduction <add>, %170, %cst_99 [1] : vector<10x32xf32> to vector<10xf32>
    %172 = vector.shape_cast %171 : vector<10xf32> to vector<10x1xf32>
    %cst_100 = arith.constant 3.200000e+01 : f32
    %173 = vector.broadcast %cst_100 : f32 to vector<10x1xf32>
    %174 = arith.divf %172, %173 : vector<10x1xf32>
    %175 = vector.broadcast %167 : vector<10x1xf32> to vector<10x32xf32>
    %176 = arith.subf %159, %175 : vector<10x32xf32>
    %cst_101 = arith.constant 9.99999996E-13 : f32
    %177 = vector.broadcast %cst_101 : f32 to vector<10x1xf32>
    %178 = arith.addf %174, %177 : vector<10x1xf32>
    %179 = math.rsqrt %178 : vector<10x1xf32>
    %180 = vector.broadcast %179 : vector<10x1xf32> to vector<10x32xf32>
    %181 = arith.mulf %176, %180 : vector<10x32xf32>
    %182 = vector.broadcast %161 : vector<1x32xf32> to vector<10x32xf32>
    %183 = arith.mulf %181, %182 : vector<10x32xf32>
    %184 = vector.broadcast %163 : vector<1x32xf32> to vector<10x32xf32>
    %185 = arith.addf %183, %184 : vector<10x32xf32>
    %c1_102 = arith.constant 1 : index
    %c0_103 = arith.constant 0 : index
    %c0_104 = arith.constant 0 : index
    %186 = vector.load %arg9[%c1_102, %c0_103, %c0_104] : memref<2x32x32xf32, #tpu.memory_space<vmem>>, vector<1x32x32xf32>
    %187 = vector.shape_cast %186 : vector<1x32x32xf32> to vector<32x32xf32>
    %cst_105 = arith.constant dense<0.000000e+00> : vector<10x32xf32>
    %188 = tpu.matmul %185, %187, %cst_105 {dimension_numbers = #tpu.dot_dimension_numbers<[1], [0], [0], [1], [0, 0, 1, 1], [], []>} : vector<10x32xf32>, vector<32x32xf32>, vector<10x32xf32> -> vector<10x32xf32>
    %c1_106 = arith.constant 1 : index
    %c0_107 = arith.constant 0 : index
    %c0_108 = arith.constant 0 : index
    %189 = vector.load %arg10[%c1_106, %c0_107, %c0_108] : memref<2x1x32xf32, #tpu.memory_space<vmem>>, vector<1x1x32xf32>
    %190 = vector.shape_cast %189 : vector<1x1x32xf32> to vector<1x32xf32>
    %191 = vector.broadcast %190 : vector<1x32xf32> to vector<10x32xf32>
    %192 = arith.addf %188, %191 : vector<10x32xf32>
    %c1_109 = arith.constant 1 : index
    %c0_110 = arith.constant 0 : index
    %c0_111 = arith.constant 0 : index
    %193 = vector.load %arg11[%c1_109, %c0_110, %c0_111] : memref<2x32x32xf32, #tpu.memory_space<vmem>>, vector<1x32x32xf32>
    %194 = vector.shape_cast %193 : vector<1x32x32xf32> to vector<32x32xf32>
    %cst_112 = arith.constant dense<0.000000e+00> : vector<10x32xf32>
    %195 = tpu.matmul %185, %194, %cst_112 {dimension_numbers = #tpu.dot_dimension_numbers<[1], [0], [0], [1], [0, 0, 1, 1], [], []>} : vector<10x32xf32>, vector<32x32xf32>, vector<10x32xf32> -> vector<10x32xf32>
    %c1_113 = arith.constant 1 : index
    %c0_114 = arith.constant 0 : index
    %c0_115 = arith.constant 0 : index
    %196 = vector.load %arg12[%c1_113, %c0_114, %c0_115] : memref<2x1x32xf32, #tpu.memory_space<vmem>>, vector<1x1x32xf32>
    %197 = vector.shape_cast %196 : vector<1x1x32xf32> to vector<1x32xf32>
    %198 = vector.broadcast %197 : vector<1x32xf32> to vector<10x32xf32>
    %199 = arith.addf %195, %198 : vector<10x32xf32>
    %c1_116 = arith.constant 1 : index
    %c0_117 = arith.constant 0 : index
    %c0_118 = arith.constant 0 : index
    %200 = vector.load %arg13[%c1_116, %c0_117, %c0_118] : memref<2x32x32xf32, #tpu.memory_space<vmem>>, vector<1x32x32xf32>
    %201 = vector.shape_cast %200 : vector<1x32x32xf32> to vector<32x32xf32>
    %cst_119 = arith.constant dense<0.000000e+00> : vector<10x32xf32>
    %202 = tpu.matmul %185, %201, %cst_119 {dimension_numbers = #tpu.dot_dimension_numbers<[1], [0], [0], [1], [0, 0, 1, 1], [], []>} : vector<10x32xf32>, vector<32x32xf32>, vector<10x32xf32> -> vector<10x32xf32>
    %c1_120 = arith.constant 1 : index
    %c0_121 = arith.constant 0 : index
    %c0_122 = arith.constant 0 : index
    %203 = vector.load %arg14[%c1_120, %c0_121, %c0_122] : memref<2x1x32xf32, #tpu.memory_space<vmem>>, vector<1x1x32xf32>
    %204 = vector.shape_cast %203 : vector<1x1x32xf32> to vector<1x32xf32>
    %205 = vector.broadcast %204 : vector<1x32xf32> to vector<10x32xf32>
    %206 = arith.addf %202, %205 : vector<10x32xf32>
    %cst_123 = arith.constant 0.000000e+00 : f32
    %207 = vector.broadcast %cst_123 : f32 to vector<10x32xf32>
    %c0_124 = arith.constant 0 : index
    %c0_125 = arith.constant 0 : index
    %c0_126 = arith.constant 0 : index
    %208 = vector.load %arg5[%c0_124, %c0_125, %c0_126] : memref<2x1x32xf32, #tpu.memory_space<vmem>>, vector<1x1x32xf32>
    %209 = vector.shape_cast %208 : vector<1x1x32xf32> to vector<1x32xf32>
    %210 = vector.broadcast %209 : vector<1x32xf32> to vector<10x32xf32>
    %211 = arith.mulf %199, %210 : vector<10x32xf32>
    %cst_127 = arith.constant dense<0.000000e+00> : vector<10x10xf32>
    %212 = tpu.matmul %192, %211, %cst_127 {dimension_numbers = #tpu.dot_dimension_numbers<[1], [1], [0], [0], [0, 0, 1, 0], [], []>} : vector<10x32xf32>, vector<10x32xf32>, vector<10x10xf32> -> vector<10x10xf32>
    %cst_128 = arith.constant 2.500000e-01 : f32
    %213 = vector.broadcast %cst_128 : f32 to vector<10x10xf32>
    %214 = arith.mulf %212, %213 : vector<10x10xf32>
    %215 = arith.addf %214, %5 : vector<10x10xf32>
    %cst_129 = arith.constant dense<0xFF800000> : vector<10xf32>
    %216 = vector.multi_reduction <maximumf>, %215, %cst_129 [1] : vector<10x10xf32> to vector<10xf32>
    %217 = vector.shape_cast %216 : vector<10xf32> to vector<10x1xf32>
    %218 = vector.broadcast %217 : vector<10x1xf32> to vector<10x10xf32>
    %219 = arith.subf %215, %218 : vector<10x10xf32>
    %220 = math.exp %219 : vector<10x10xf32>
    %cst_130 = arith.constant dense<0.000000e+00> : vector<10xf32>
    %221 = vector.multi_reduction <add>, %220, %cst_130 [1] : vector<10x10xf32> to vector<10xf32>
    %222 = vector.shape_cast %221 : vector<10xf32> to vector<10x1xf32>
    %223 = tpu.reciprocal %222 : vector<10x1xf32> -> vector<10x1xf32>
    %224 = vector.broadcast %223 : vector<10x1xf32> to vector<10x10xf32>
    %225 = arith.mulf %220, %224 : vector<10x10xf32>
    %226 = vector.broadcast %209 : vector<1x32xf32> to vector<10x32xf32>
    %227 = arith.mulf %206, %226 : vector<10x32xf32>
    %cst_131 = arith.constant dense<0.000000e+00> : vector<10x32xf32>
    %228 = tpu.matmul %225, %227, %cst_131 {dimension_numbers = #tpu.dot_dimension_numbers<[1], [0], [0], [1], [0, 0, 1, 1], [], []>} : vector<10x10xf32>, vector<10x32xf32>, vector<10x32xf32> -> vector<10x32xf32>
    %229 = arith.addf %207, %228 : vector<10x32xf32>
    %c1_132 = arith.constant 1 : index
    %c0_133 = arith.constant 0 : index
    %c0_134 = arith.constant 0 : index
    %230 = vector.load %arg5[%c1_132, %c0_133, %c0_134] : memref<2x1x32xf32, #tpu.memory_space<vmem>>, vector<1x1x32xf32>
    %231 = vector.shape_cast %230 : vector<1x1x32xf32> to vector<1x32xf32>
    %232 = vector.broadcast %231 : vector<1x32xf32> to vector<10x32xf32>
    %233 = arith.mulf %199, %232 : vector<10x32xf32>
    %cst_135 = arith.constant dense<0.000000e+00> : vector<10x10xf32>
    %234 = tpu.matmul %192, %233, %cst_135 {dimension_numbers = #tpu.dot_dimension_numbers<[1], [1], [0], [0], [0, 0, 1, 0], [], []>} : vector<10x32xf32>, vector<10x32xf32>, vector<10x10xf32> -> vector<10x10xf32>
    %cst_136 = arith.constant 2.500000e-01 : f32
    %235 = vector.broadcast %cst_136 : f32 to vector<10x10xf32>
    %236 = arith.mulf %234, %235 : vector<10x10xf32>
    %237 = arith.addf %236, %5 : vector<10x10xf32>
    %cst_137 = arith.constant dense<0xFF800000> : vector<10xf32>
    %238 = vector.multi_reduction <maximumf>, %237, %cst_137 [1] : vector<10x10xf32> to vector<10xf32>
    %239 = vector.shape_cast %238 : vector<10xf32> to vector<10x1xf32>
    %240 = vector.broadcast %239 : vector<10x1xf32> to vector<10x10xf32>
    %241 = arith.subf %237, %240 : vector<10x10xf32>
    %242 = math.exp %241 : vector<10x10xf32>
    %cst_138 = arith.constant dense<0.000000e+00> : vector<10xf32>
    %243 = vector.multi_reduction <add>, %242, %cst_138 [1] : vector<10x10xf32> to vector<10xf32>
    %244 = vector.shape_cast %243 : vector<10xf32> to vector<10x1xf32>
    %245 = tpu.reciprocal %244 : vector<10x1xf32> -> vector<10x1xf32>
    %246 = vector.broadcast %245 : vector<10x1xf32> to vector<10x10xf32>
    %247 = arith.mulf %242, %246 : vector<10x10xf32>
    %248 = vector.broadcast %231 : vector<1x32xf32> to vector<10x32xf32>
    %249 = arith.mulf %206, %248 : vector<10x32xf32>
    %cst_139 = arith.constant dense<0.000000e+00> : vector<10x32xf32>
    %250 = tpu.matmul %247, %249, %cst_139 {dimension_numbers = #tpu.dot_dimension_numbers<[1], [0], [0], [1], [0, 0, 1, 1], [], []>} : vector<10x10xf32>, vector<10x32xf32>, vector<10x32xf32> -> vector<10x32xf32>
    %251 = arith.addf %229, %250 : vector<10x32xf32>
    %c1_140 = arith.constant 1 : index
    %c0_141 = arith.constant 0 : index
    %c0_142 = arith.constant 0 : index
    %252 = vector.load %arg15[%c1_140, %c0_141, %c0_142] : memref<2x32x32xf32, #tpu.memory_space<vmem>>, vector<1x32x32xf32>
    %253 = vector.shape_cast %252 : vector<1x32x32xf32> to vector<32x32xf32>
    %cst_143 = arith.constant dense<0.000000e+00> : vector<10x32xf32>
    %254 = tpu.matmul %251, %253, %cst_143 {dimension_numbers = #tpu.dot_dimension_numbers<[1], [0], [0], [1], [0, 0, 1, 1], [], []>} : vector<10x32xf32>, vector<32x32xf32>, vector<10x32xf32> -> vector<10x32xf32>
    %255 = arith.addf %159, %254 : vector<10x32xf32>
    %c1_144 = arith.constant 1 : index
    %c0_145 = arith.constant 0 : index
    %c0_146 = arith.constant 0 : index
    %256 = vector.load %arg16[%c1_144, %c0_145, %c0_146] : memref<2x1x32xf32, #tpu.memory_space<vmem>>, vector<1x1x32xf32>
    %257 = vector.shape_cast %256 : vector<1x1x32xf32> to vector<1x32xf32>
    %258 = vector.broadcast %257 : vector<1x32xf32> to vector<10x32xf32>
    %259 = arith.addf %255, %258 : vector<10x32xf32>
    %c1_147 = arith.constant 1 : index
    %c0_148 = arith.constant 0 : index
    %c0_149 = arith.constant 0 : index
    %260 = vector.load %arg17[%c1_147, %c0_148, %c0_149] : memref<2x1x32xf32, #tpu.memory_space<vmem>>, vector<1x1x32xf32>
    %261 = vector.shape_cast %260 : vector<1x1x32xf32> to vector<1x32xf32>
    %c1_150 = arith.constant 1 : index
    %c0_151 = arith.constant 0 : index
    %c0_152 = arith.constant 0 : index
    %262 = vector.load %arg18[%c1_150, %c0_151, %c0_152] : memref<2x1x32xf32, #tpu.memory_space<vmem>>, vector<1x1x32xf32>
    %263 = vector.shape_cast %262 : vector<1x1x32xf32> to vector<1x32xf32>
    %cst_153 = arith.constant dense<0.000000e+00> : vector<10xf32>
    %264 = vector.multi_reduction <add>, %259, %cst_153 [1] : vector<10x32xf32> to vector<10xf32>
    %265 = vector.shape_cast %264 : vector<10xf32> to vector<10x1xf32>
    %cst_154 = arith.constant 3.200000e+01 : f32
    %266 = vector.broadcast %cst_154 : f32 to vector<10x1xf32>
    %267 = arith.divf %265, %266 : vector<10x1xf32>
    %268 = vector.broadcast %267 : vector<10x1xf32> to vector<10x32xf32>
    %269 = arith.subf %259, %268 : vector<10x32xf32>
    %270 = arith.mulf %269, %269 : vector<10x32xf32>
    %cst_155 = arith.constant dense<0.000000e+00> : vector<10xf32>
    %271 = vector.multi_reduction <add>, %270, %cst_155 [1] : vector<10x32xf32> to vector<10xf32>
    %272 = vector.shape_cast %271 : vector<10xf32> to vector<10x1xf32>
    %cst_156 = arith.constant 3.200000e+01 : f32
    %273 = vector.broadcast %cst_156 : f32 to vector<10x1xf32>
    %274 = arith.divf %272, %273 : vector<10x1xf32>
    %275 = vector.broadcast %267 : vector<10x1xf32> to vector<10x32xf32>
    %276 = arith.subf %259, %275 : vector<10x32xf32>
    %cst_157 = arith.constant 9.99999996E-13 : f32
    %277 = vector.broadcast %cst_157 : f32 to vector<10x1xf32>
    %278 = arith.addf %274, %277 : vector<10x1xf32>
    %279 = math.rsqrt %278 : vector<10x1xf32>
    %280 = vector.broadcast %279 : vector<10x1xf32> to vector<10x32xf32>
    %281 = arith.mulf %276, %280 : vector<10x32xf32>
    %282 = vector.broadcast %261 : vector<1x32xf32> to vector<10x32xf32>
    %283 = arith.mulf %281, %282 : vector<10x32xf32>
    %284 = vector.broadcast %263 : vector<1x32xf32> to vector<10x32xf32>
    %285 = arith.addf %283, %284 : vector<10x32xf32>
    %c1_158 = arith.constant 1 : index
    %c0_159 = arith.constant 0 : index
    %c0_160 = arith.constant 0 : index
    %286 = vector.load %arg19[%c1_158, %c0_159, %c0_160] : memref<2x32x64xf32, #tpu.memory_space<vmem>>, vector<1x32x64xf32>
    %287 = vector.shape_cast %286 : vector<1x32x64xf32> to vector<32x64xf32>
    %cst_161 = arith.constant dense<0.000000e+00> : vector<10x64xf32>
    %288 = tpu.matmul %285, %287, %cst_161 {dimension_numbers = #tpu.dot_dimension_numbers<[1], [0], [0], [1], [0, 0, 1, 1], [], []>} : vector<10x32xf32>, vector<32x64xf32>, vector<10x64xf32> -> vector<10x64xf32>
    %c1_162 = arith.constant 1 : index
    %c0_163 = arith.constant 0 : index
    %c0_164 = arith.constant 0 : index
    %289 = vector.load %arg20[%c1_162, %c0_163, %c0_164] : memref<2x1x64xf32, #tpu.memory_space<vmem>>, vector<1x1x64xf32>
    %290 = vector.shape_cast %289 : vector<1x1x64xf32> to vector<1x64xf32>
    %291 = vector.broadcast %290 : vector<1x64xf32> to vector<10x64xf32>
    %292 = arith.addf %288, %291 : vector<10x64xf32>
    %293 = arith.mulf %292, %292 : vector<10x64xf32>
    %294 = arith.mulf %292, %293 : vector<10x64xf32>
    %cst_165 = arith.constant 4.471500e-02 : f32
    %295 = vector.broadcast %cst_165 : f32 to vector<10x64xf32>
    %296 = arith.mulf %295, %294 : vector<10x64xf32>
    %297 = arith.addf %292, %296 : vector<10x64xf32>
    %cst_166 = arith.constant 0.797884583 : f32
    %298 = vector.broadcast %cst_166 : f32 to vector<10x64xf32>
    %299 = arith.mulf %298, %297 : vector<10x64xf32>
    %300 = math.tanh %299 : vector<10x64xf32>
    %cst_167 = arith.constant 1.000000e+00 : f32
    %301 = vector.broadcast %cst_167 : f32 to vector<10x64xf32>
    %302 = arith.addf %301, %300 : vector<10x64xf32>
    %cst_168 = arith.constant 5.000000e-01 : f32
    %303 = vector.broadcast %cst_168 : f32 to vector<10x64xf32>
    %304 = arith.mulf %303, %302 : vector<10x64xf32>
    %305 = arith.mulf %292, %304 : vector<10x64xf32>
    %c1_169 = arith.constant 1 : index
    %c0_170 = arith.constant 0 : index
    %c0_171 = arith.constant 0 : index
    %306 = vector.load %arg21[%c1_169, %c0_170, %c0_171] : memref<2x64x32xf32, #tpu.memory_space<vmem>>, vector<1x64x32xf32>
    %307 = vector.shape_cast %306 : vector<1x64x32xf32> to vector<64x32xf32>
    %cst_172 = arith.constant dense<0.000000e+00> : vector<10x32xf32>
    %308 = tpu.matmul %305, %307, %cst_172 {dimension_numbers = #tpu.dot_dimension_numbers<[1], [0], [0], [1], [0, 0, 1, 1], [], []>} : vector<10x64xf32>, vector<64x32xf32>, vector<10x32xf32> -> vector<10x32xf32>
    %309 = arith.addf %259, %308 : vector<10x32xf32>
    %c1_173 = arith.constant 1 : index
    %c0_174 = arith.constant 0 : index
    %c0_175 = arith.constant 0 : index
    %310 = vector.load %arg22[%c1_173, %c0_174, %c0_175] : memref<2x1x32xf32, #tpu.memory_space<vmem>>, vector<1x1x32xf32>
    %311 = vector.shape_cast %310 : vector<1x1x32xf32> to vector<1x32xf32>
    %312 = vector.broadcast %311 : vector<1x32xf32> to vector<10x32xf32>
    %313 = arith.addf %309, %312 : vector<10x32xf32>
    %c0_176 = arith.constant 0 : index
    %c0_177 = arith.constant 0 : index
    %314 = vector.load %arg23[%c0_176, %c0_177] : memref<1x32xf32, #tpu.memory_space<vmem>>, vector<1x32xf32>
    %c0_178 = arith.constant 0 : index
    %c0_179 = arith.constant 0 : index
    %315 = vector.load %arg24[%c0_178, %c0_179] : memref<1x32xf32, #tpu.memory_space<vmem>>, vector<1x32xf32>
    %cst_180 = arith.constant dense<0.000000e+00> : vector<10xf32>
    %316 = vector.multi_reduction <add>, %313, %cst_180 [1] : vector<10x32xf32> to vector<10xf32>
    %317 = vector.shape_cast %316 : vector<10xf32> to vector<10x1xf32>
    %cst_181 = arith.constant 3.200000e+01 : f32
    %318 = vector.broadcast %cst_181 : f32 to vector<10x1xf32>
    %319 = arith.divf %317, %318 : vector<10x1xf32>
    %320 = vector.broadcast %319 : vector<10x1xf32> to vector<10x32xf32>
    %321 = arith.subf %313, %320 : vector<10x32xf32>
    %322 = arith.mulf %321, %321 : vector<10x32xf32>
    %cst_182 = arith.constant dense<0.000000e+00> : vector<10xf32>
    %323 = vector.multi_reduction <add>, %322, %cst_182 [1] : vector<10x32xf32> to vector<10xf32>
    %324 = vector.shape_cast %323 : vector<10xf32> to vector<10x1xf32>
    %cst_183 = arith.constant 3.200000e+01 : f32
    %325 = vector.broadcast %cst_183 : f32 to vector<10x1xf32>
    %326 = arith.divf %324, %325 : vector<10x1xf32>
    %327 = vector.broadcast %319 : vector<10x1xf32> to vector<10x32xf32>
    %328 = arith.subf %313, %327 : vector<10x32xf32>
    %cst_184 = arith.constant 9.99999996E-13 : f32
    %329 = vector.broadcast %cst_184 : f32 to vector<10x1xf32>
    %330 = arith.addf %326, %329 : vector<10x1xf32>
    %331 = math.rsqrt %330 : vector<10x1xf32>
    %332 = vector.broadcast %331 : vector<10x1xf32> to vector<10x32xf32>
    %333 = arith.mulf %328, %332 : vector<10x32xf32>
    %334 = vector.broadcast %314 : vector<1x32xf32> to vector<10x32xf32>
    %335 = arith.mulf %333, %334 : vector<10x32xf32>
    %336 = vector.broadcast %315 : vector<1x32xf32> to vector<10x32xf32>
    %337 = arith.addf %335, %336 : vector<10x32xf32>
    %c0_185 = arith.constant 0 : index
    %c0_186 = arith.constant 0 : index
    %338 = vector.load %arg27[%c0_185, %c0_186] : memref<10x32xf32, #tpu.memory_space<vmem>>, vector<10x32xf32>
    tpu.vector_store %arg27[%c0_185, %c0_186], %337 {strides = array<i32>} : memref<10x32xf32, #tpu.memory_space<vmem>>, vector<10x32xf32>,
    %c0_187 = arith.constant 0 : index
    %c0_188 = arith.constant 0 : index
    %339 = vector.load %arg6[%c0_187, %c0_188] : memref<2x10xf32, #tpu.memory_space<vmem>>, vector<2x10xf32>
    %cst_189 = arith.constant dense<0.000000e+00> : vector<2x32xf32>
    %340 = tpu.matmul %339, %337, %cst_189 {dimension_numbers = #tpu.dot_dimension_numbers<[1], [0], [0], [1], [0, 0, 1, 1], [], []>} : vector<2x10xf32>, vector<10x32xf32>, vector<2x32xf32> -> vector<2x32xf32>
    %c0_190 = arith.constant 0 : index
    %c0_191 = arith.constant 0 : index
    %341 = vector.load %arg25[%c0_190, %c0_191] : memref<32x32xf32, #tpu.memory_space<vmem>>, vector<32x32xf32>
    %cst_192 = arith.constant dense<0.000000e+00> : vector<2x32xf32>
    %342 = tpu.matmul %340, %341, %cst_192 {dimension_numbers = #tpu.dot_dimension_numbers<[1], [0], [0], [1], [0, 0, 1, 1], [], []>} : vector<2x32xf32>, vector<32x32xf32>, vector<2x32xf32> -> vector<2x32xf32>
    %c0_193 = arith.constant 0 : index
    %c0_194 = arith.constant 0 : index
    %343 = vector.load %arg26[%c0_193, %c0_194] : memref<1x32xf32, #tpu.memory_space<vmem>>, vector<1x32xf32>
    %344 = vector.broadcast %343 : vector<1x32xf32> to vector<2x32xf32>
    %345 = arith.addf %342, %344 : vector<2x32xf32>
    %346 = math.tanh %345 : vector<2x32xf32>
    %c0_195 = arith.constant 0 : index
    %c0_196 = arith.constant 0 : index
    %347 = vector.load %arg28[%c0_195, %c0_196] : memref<2x32xf32, #tpu.memory_space<vmem>>, vector<2x32xf32>
    tpu.vector_store %arg28[%c0_195, %c0_196], %346 {strides = array<i32>} : memref<2x32xf32, #tpu.memory_space<vmem>>, vector<2x32xf32>,
    return
  }
  func.func @transform_0(%arg0: i32) -> (i32, i32) {
    %c0_i32 = arith.constant 0 : i32
    %c0_i32_0 = arith.constant 0 : i32
    %c0_i32_1 = arith.constant 0 : i32
    return %c0_i32, %c0_i32_0 : i32, i32
  }
  func.func @transform_1(%arg0: i32) -> (i32, i32) {
    %c0_i32 = arith.constant 0 : i32
    %c0_i32_0 = arith.constant 0 : i32
    %c0_i32_1 = arith.constant 0 : i32
    return %c0_i32, %c0_i32_0 : i32, i32
  }
  func.func @transform_2(%arg0: i32) -> (i32, i32) {
    %c0_i32 = arith.constant 0 : i32
    %c0_i32_0 = arith.constant 0 : i32
    %c0_i32_1 = arith.constant 0 : i32
    return %c0_i32, %c0_i32_0 : i32, i32
  }
  func.func @transform_3(%arg0: i32) -> (i32, i32) {
    %c0_i32 = arith.constant 0 : i32
    %c0_i32_0 = arith.constant 0 : i32
    %c0_i32_1 = arith.constant 0 : i32
    return %c0_i32, %c0_i32_0 : i32, i32
  }
  func.func @transform_4(%arg0: i32) -> (i32, i32, i32) {
    %c0_i32 = arith.constant 0 : i32
    %c0_i32_0 = arith.constant 0 : i32
    %c0_i32_1 = arith.constant 0 : i32
    %c0_i32_2 = arith.constant 0 : i32
    return %c0_i32, %c0_i32_0, %c0_i32_1 : i32, i32, i32
  }
  func.func @transform_5(%arg0: i32) -> (i32, i32) {
    %c0_i32 = arith.constant 0 : i32
    %c0_i32_0 = arith.constant 0 : i32
    %c0_i32_1 = arith.constant 0 : i32
    return %c0_i32, %c0_i32_0 : i32, i32
  }
  func.func @transform_6(%arg0: i32) -> (i32, i32, i32) {
    %c0_i32 = arith.constant 0 : i32
    %c0_i32_0 = arith.constant 0 : i32
    %c0_i32_1 = arith.constant 0 : i32
    %c0_i32_2 = arith.constant 0 : i32
    return %c0_i32, %c0_i32_0, %c0_i32_1 : i32, i32, i32
  }
  func.func @transform_7(%arg0: i32) -> (i32, i32, i32) {
    %c0_i32 = arith.constant 0 : i32
    %c0_i32_0 = arith.constant 0 : i32
    %c0_i32_1 = arith.constant 0 : i32
    %c0_i32_2 = arith.constant 0 : i32
    return %c0_i32, %c0_i32_0, %c0_i32_1 : i32, i32, i32
  }
  func.func @transform_8(%arg0: i32) -> (i32, i32, i32) {
    %c0_i32 = arith.constant 0 : i32
    %c0_i32_0 = arith.constant 0 : i32
    %c0_i32_1 = arith.constant 0 : i32
    %c0_i32_2 = arith.constant 0 : i32
    return %c0_i32, %c0_i32_0, %c0_i32_1 : i32, i32, i32
  }
  func.func @transform_9(%arg0: i32) -> (i32, i32, i32) {
    %c0_i32 = arith.constant 0 : i32
    %c0_i32_0 = arith.constant 0 : i32
    %c0_i32_1 = arith.constant 0 : i32
    %c0_i32_2 = arith.constant 0 : i32
    return %c0_i32, %c0_i32_0, %c0_i32_1 : i32, i32, i32
  }
  func.func @transform_10(%arg0: i32) -> (i32, i32, i32) {
    %c0_i32 = arith.constant 0 : i32
    %c0_i32_0 = arith.constant 0 : i32
    %c0_i32_1 = arith.constant 0 : i32
    %c0_i32_2 = arith.constant 0 : i32
    return %c0_i32, %c0_i32_0, %c0_i32_1 : i32, i32, i32
  }
  func.func @transform_11(%arg0: i32) -> (i32, i32, i32) {
    %c0_i32 = arith.constant 0 : i32
    %c0_i32_0 = arith.constant 0 : i32
    %c0_i32_1 = arith.constant 0 : i32
    %c0_i32_2 = arith.constant 0 : i32
    return %c0_i32, %c0_i32_0, %c0_i32_1 : i32, i32, i32
  }
  func.func @transform_12(%arg0: i32) -> (i32, i32, i32) {
    %c0_i32 = arith.constant 0 : i32
    %c0_i32_0 = arith.constant 0 : i32
    %c0_i32_1 = arith.constant 0 : i32
    %c0_i32_2 = arith.constant 0 : i32
    return %c0_i32, %c0_i32_0, %c0_i32_1 : i32, i32, i32
  }
  func.func @transform_13(%arg0: i32) -> (i32, i32, i32) {
    %c0_i32 = arith.constant 0 : i32
    %c0_i32_0 = arith.constant 0 : i32
    %c0_i32_1 = arith.constant 0 : i32
    %c0_i32_2 = arith.constant 0 : i32
    return %c0_i32, %c0_i32_0, %c0_i32_1 : i32, i32, i32
  }
  func.func @transform_14(%arg0: i32) -> (i32, i32, i32) {
    %c0_i32 = arith.constant 0 : i32
    %c0_i32_0 = arith.constant 0 : i32
    %c0_i32_1 = arith.constant 0 : i32
    %c0_i32_2 = arith.constant 0 : i32
    return %c0_i32, %c0_i32_0, %c0_i32_1 : i32, i32, i32
  }
  func.func @transform_15(%arg0: i32) -> (i32, i32, i32) {
    %c0_i32 = arith.constant 0 : i32
    %c0_i32_0 = arith.constant 0 : i32
    %c0_i32_1 = arith.constant 0 : i32
    %c0_i32_2 = arith.constant 0 : i32
    return %c0_i32, %c0_i32_0, %c0_i32_1 : i32, i32, i32
  }
  func.func @transform_16(%arg0: i32) -> (i32, i32, i32) {
    %c0_i32 = arith.constant 0 : i32
    %c0_i32_0 = arith.constant 0 : i32
    %c0_i32_1 = arith.constant 0 : i32
    %c0_i32_2 = arith.constant 0 : i32
    return %c0_i32, %c0_i32_0, %c0_i32_1 : i32, i32, i32
  }
  func.func @transform_17(%arg0: i32) -> (i32, i32, i32) {
    %c0_i32 = arith.constant 0 : i32
    %c0_i32_0 = arith.constant 0 : i32
    %c0_i32_1 = arith.constant 0 : i32
    %c0_i32_2 = arith.constant 0 : i32
    return %c0_i32, %c0_i32_0, %c0_i32_1 : i32, i32, i32
  }
  func.func @transform_18(%arg0: i32) -> (i32, i32, i32) {
    %c0_i32 = arith.constant 0 : i32
    %c0_i32_0 = arith.constant 0 : i32
    %c0_i32_1 = arith.constant 0 : i32
    %c0_i32_2 = arith.constant 0 : i32
    return %c0_i32, %c0_i32_0, %c0_i32_1 : i32, i32, i32
  }
  func.func @transform_19(%arg0: i32) -> (i32, i32, i32) {
    %c0_i32 = arith.constant 0 : i32
    %c0_i32_0 = arith.constant 0 : i32
    %c0_i32_1 = arith.constant 0 : i32
    %c0_i32_2 = arith.constant 0 : i32
    return %c0_i32, %c0_i32_0, %c0_i32_1 : i32, i32, i32
  }
  func.func @transform_20(%arg0: i32) -> (i32, i32, i32) {
    %c0_i32 = arith.constant 0 : i32
    %c0_i32_0 = arith.constant 0 : i32
    %c0_i32_1 = arith.constant 0 : i32
    %c0_i32_2 = arith.constant 0 : i32
    return %c0_i32, %c0_i32_0, %c0_i32_1 : i32, i32, i32
  }
  func.func @transform_21(%arg0: i32) -> (i32, i32, i32) {
    %c0_i32 = arith.constant 0 : i32
    %c0_i32_0 = arith.constant 0 : i32
    %c0_i32_1 = arith.constant 0 : i32
    %c0_i32_2 = arith.constant 0 : i32
    return %c0_i32, %c0_i32_0, %c0_i32_1 : i32, i32, i32
  }
  func.func @transform_22(%arg0: i32) -> (i32, i32) {
    %c0_i32 = arith.constant 0 : i32
    %c0_i32_0 = arith.constant 0 : i32
    %c0_i32_1 = arith.constant 0 : i32
    return %c0_i32, %c0_i32_0 : i32, i32
  }
  func.func @transform_23(%arg0: i32) -> (i32, i32) {
    %c0_i32 = arith.constant 0 : i32
    %c0_i32_0 = arith.constant 0 : i32
    %c0_i32_1 = arith.constant 0 : i32
    return %c0_i32, %c0_i32_0 : i32, i32
  }
  func.func @transform_24(%arg0: i32) -> (i32, i32) {
    %c0_i32 = arith.constant 0 : i32
    %c0_i32_0 = arith.constant 0 : i32
    %c0_i32_1 = arith.constant 0 : i32
    return %c0_i32, %c0_i32_0 : i32, i32
  }
  func.func @transform_25(%arg0: i32) -> (i32, i32) {
    %c0_i32 = arith.constant 0 : i32
    %c0_i32_0 = arith.constant 0 : i32
    %c0_i32_1 = arith.constant 0 : i32
    return %c0_i32, %c0_i32_0 : i32, i32
  }
  func.func @transform_26(%arg0: i32) -> (i32, i32) {
    %c0_i32 = arith.constant 0 : i32
    %c0_i32_0 = arith.constant 0 : i32
    %c0_i32_1 = arith.constant 0 : i32
    return %c0_i32, %c0_i32_0 : i32, i32
  }
  func.func @transform_27(%arg0: i32) -> (i32, i32) {
    %c0_i32 = arith.constant 0 : i32
    %c0_i32_0 = arith.constant 0 : i32
    %c0_i32_1 = arith.constant 0 : i32
    return %c0_i32, %c0_i32_0 : i32, i32
  }
}

</mosaic_0001>

<llo_original>
// kernel: tpu_custom_call.1
$region0: #{tpu_custom_call.1}
  #allocation0 [shape = 'u32[]', space=smem, size = 0x4, offset = 0x4, fixed_abs, tag = 'smem constant byte address 0x4 - core index']
  #allocation1 [shape = 'u32[144,128]{1,0:T(1,128)}', space=vmem, size = 0x12000, scoped, tag = 'internal scratch']
  %s0 = inlined_call_operand.vmem [shape: f32[10,192], index: 0, kind: input, shape index: {}]
  %s1 = inlined_call_operand.vmem [shape: f32[192,32], index: 1, kind: input, shape index: {}]
  %s2 = inlined_call_operand.hbm [shape: f32[10,32], index: 2, kind: input, shape index: {}]
  %s3 = inlined_call_operand.hbm [shape: f32[10,10], index: 3, kind: input, shape index: {}]
  %s4 = inlined_call_operand.vmem [shape: f32[2,1,32], index: 4, kind: input, shape index: {}]
  %s5 = inlined_call_operand.vmem [shape: f32[2,10], index: 5, kind: input, shape index: {}]
  %s6 = inlined_call_operand.vmem [shape: f32[2,1,32], index: 6, kind: input, shape index: {}]
  %s7 = inlined_call_operand.vmem [shape: f32[2,1,32], index: 7, kind: input, shape index: {}]
  %s8 = inlined_call_operand.vmem [shape: f32[2,32,32], index: 8, kind: input, shape index: {}]
  %s9 = inlined_call_operand.vmem [shape: f32[2,1,32], index: 9, kind: input, shape index: {}]
  %s10 = inlined_call_operand.vmem [shape: f32[2,32,32], index: 10, kind: input, shape index: {}]
  %s11 = inlined_call_operand.hbm [shape: f32[2,1,32], index: 11, kind: input, shape index: {}]
  %s12 = inlined_call_operand.vmem [shape: f32[2,32,32], index: 12, kind: input, shape index: {}]
  %s13 = inlined_call_operand.hbm [shape: f32[2,1,32], index: 13, kind: input, shape index: {}]
  %s14 = inlined_call_operand.vmem [shape: f32[2,32,32], index: 14, kind: input, shape index: {}]
  %s15 = inlined_call_operand.hbm [shape: f32[2,1,32], index: 15, kind: input, shape index: {}]
  %s16 = inlined_call_operand.hbm [shape: f32[2,1,32], index: 16, kind: input, shape index: {}]
  %s17 = inlined_call_operand.hbm [shape: f32[2,1,32], index: 17, kind: input, shape index: {}]
  %s18 = inlined_call_operand.vmem [shape: f32[2,32,64], index: 18, kind: input, shape index: {}]
  %s19 = inlined_call_operand.hbm [shape: f32[2,1,64], index: 19, kind: input, shape index: {}]
  %s20 = inlined_call_operand.vmem [shape: f32[2,64,32], index: 20, kind: input, shape index: {}]
  %s21 = inlined_call_operand.hbm [shape: f32[2,1,32], index: 21, kind: input, shape index: {}]
  %s22 = inlined_call_operand.vmem [shape: f32[1,32], index: 22, kind: input, shape index: {}]
  %s23 = inlined_call_operand.vmem [shape: f32[1,32], index: 23, kind: input, shape index: {}]
  %s24 = inlined_call_operand.vmem [shape: f32[32,32], index: 24, kind: input, shape index: {}]
  %s25 = inlined_call_operand.vmem [shape: f32[1,32], index: 25, kind: input, shape index: {}]
  %s26 = inlined_call_operand.hbm [shape: f32[10,32], index: 26, kind: output, shape index: {0}]
  %s27 = inlined_call_operand.hbm [shape: f32[2,32], index: 27, kind: output, shape index: {1}]
  %28 = xla_tuple %s26, %s27
  %s29 = sld [smem:[#allocation0]]
  $region158: #{tpu_custom_call.1} parent=0
    _
  %s31 = ssub.s32 1, %s29
  %s32 = scalar_select 0, %s31, %s29
  $region1: #{tpu_custom_call.1} parent=0
    #allocation2 [shape = 'u8[8192]{0}', space=vmem, size = 0x2000, scoped, tag = 'input window, operand 2, single buffered']
    #allocation3 [shape = 's32[1]{0}', space=sflag, size = 0x4, scoped, tag = 'scoped memory for tpu_custom_call.1']
    #allocation4 [shape = 's32[1]{0}', space=sflag, size = 0x4, scoped, tag = 'scoped memory for tpu_custom_call.1']
    #allocation5 [shape = 'u8[8192]{0}', space=vmem, size = 0x2000, scoped, tag = 'input window, operand 3, single buffered']
    #allocation6 [shape = 's32[1]{0}', space=sflag, size = 0x4, scoped, tag = 'scoped memory for tpu_custom_call.1']
    #allocation7 [shape = 'u8[1024]{0}', space=vmem, size = 0x400, scoped, tag = 'input window, operand 11, single buffered']
    #allocation8 [shape = 'u8[1024]{0}', space=vmem, size = 0x400, scoped, tag = 'input window, operand 13, single buffered']
    #allocation9 [shape = 's32[1]{0}', space=sflag, size = 0x4, scoped, tag = 'scoped memory for tpu_custom_call.1']
    #allocation10 [shape = 'u8[1024]{0}', space=vmem, size = 0x400, scoped, tag = 'input window, operand 15, single buffered']
    #allocation11 [shape = 'u8[1024]{0}', space=vmem, size = 0x400, scoped, tag = 'input window, operand 16, single buffered']
    #allocation12 [shape = 's32[1]{0}', space=sflag, size = 0x4, scoped, tag = 'scoped memory for tpu_custom_call.1']
    #allocation13 [shape = 'u8[1024]{0}', space=vmem, size = 0x400, scoped, tag = 'input window, operand 17, single buffered']
    #allocation14 [shape = 'u8[1024]{0}', space=vmem, size = 0x400, scoped, tag = 'input window, operand 19, single buffered']
    #allocation15 [shape = 's32[1]{0}', space=sflag, size = 0x4, scoped, tag = 'scoped memory for tpu_custom_call.1']
    #allocation16 [shape = 'u8[1024]{0}', space=vmem, size = 0x400, scoped, tag = 'input window, operand 21, single buffered']
    #allocation17 [shape = 'u8[8192]{0}', space=vmem, size = 0x2000, scoped, tag = 'output window, operand 0, single buffered']
    #allocation18 [shape = 'u8[1024]{0}', space=vmem, size = 0x400, scoped, tag = 'output window, operand 1, single buffered']
    #allocation19 [shape = 's32[1]{0}', space=sflag, size = 0x4, scoped, tag = 'scoped memory for tpu_custom_call.1']
    %33 = vsyncpa [#allocation3], 0
    %34 = vsyncpa [#allocation6], 0
    %35 = vsyncpa [#allocation9], 0
    %36 = vsyncpa [#allocation12], 0
    %37 = vsyncpa [#allocation15], 0
    %38 = vsyncpa [#allocation4], 0
    %39 = vsyncpa [#allocation19], 0
    // Predicated region
    $region2: #{tpu_custom_call.1} parent=1 // pred_check
      _
    $region3: #{tpu_custom_call.1} parent=1 // pred_check_branch
      %41 = sbr.rel (0) target = $region5
    $region4: #{tpu_custom_call.1} parent=1 // pred_region
      _
    $region5: #{tpu_custom_call.1} parent=1 // pred_fallthru
      _
    // Predicated region
    $region6: #{tpu_custom_call.1} parent=1 // pred_check
      _
    $region7: #{tpu_custom_call.1} parent=1 // pred_check_branch
      %43 = sbr.rel (0) target = $region9
    $region8: #{tpu_custom_call.1} parent=1 // pred_region
      _
    $region9: #{tpu_custom_call.1} parent=1 // pred_fallthru
      _
    // Predicated region
    $region10: #{tpu_custom_call.1} parent=1 // pred_check
      _
    $region11: #{tpu_custom_call.1} parent=1 // pred_check_branch
      %45 = sbr.rel (0) target = $region13
    $region12: #{tpu_custom_call.1} parent=1 // pred_region
      %s47 = ssub.s32 256, 256
      %48 = vsyncadd [#allocation3], %s47
      %s49 = sshll.u32 [#allocation2], 4
      %s50 = int_to_ptr.vmem [resolvable:$true] %s49
      %55 = dma.hbm_to_vmem [thread:$0]  %s2, 256, %s50, [#allocation3], 128, 128, 8
    $region13: #{tpu_custom_call.1} parent=1 // pred_fallthru
      _
    // Predicated region
    $region14: #{tpu_custom_call.1} parent=1 // pred_check
      _
    $region15: #{tpu_custom_call.1} parent=1 // pred_check_branch
      %57 = sbr.rel (0) target = $region17
    $region16: #{tpu_custom_call.1} parent=1 // pred_region
      %s59 = ssub.s32 256, 256
      %60 = vsyncadd [#allocation6], %s59
      %s61 = sshll.u32 [#allocation5], 4
      %s62 = int_to_ptr.vmem [resolvable:$true] %s61
      %67 = dma.hbm_to_vmem [thread:$0]  %s3, 256, %s62, [#allocation6], 128, 128, 8
    $region17: #{tpu_custom_call.1} parent=1 // pred_fallthru
      _
    // Predicated region
    $region18: #{tpu_custom_call.1} parent=1 // pred_check
      _
    $region19: #{tpu_custom_call.1} parent=1 // pred_check_branch
      %69 = sbr.rel (0) target = $region21
    $region20: #{tpu_custom_call.1} parent=1 // pred_region
      _
    $region21: #{tpu_custom_call.1} parent=1 // pred_fallthru
      _
    // Predicated region
    $region22: #{tpu_custom_call.1} parent=1 // pred_check
      _
    $region23: #{tpu_custom_call.1} parent=1 // pred_check_branch
      %71 = sbr.rel (0) target = $region25
    $region24: #{tpu_custom_call.1} parent=1 // pred_region
      _
    $region25: #{tpu_custom_call.1} parent=1 // pred_fallthru
      _
    // Predicated region
    $region26: #{tpu_custom_call.1} parent=1 // pred_check
      _
    $region27: #{tpu_custom_call.1} parent=1 // pred_check_branch
      %73 = sbr.rel (0) target = $region29
    $region28: #{tpu_custom_call.1} parent=1 // pred_region
      _
    $region29: #{tpu_custom_call.1} parent=1 // pred_fallthru
      _
    // Predicated region
    $region30: #{tpu_custom_call.1} parent=1 // pred_check
      _
    $region31: #{tpu_custom_call.1} parent=1 // pred_check_branch
      %75 = sbr.rel (0) target = $region33
    $region32: #{tpu_custom_call.1} parent=1 // pred_region
      _
    $region33: #{tpu_custom_call.1} parent=1 // pred_fallthru
      _
    // Predicated region
    $region34: #{tpu_custom_call.1} parent=1 // pred_check
      _
    $region35: #{tpu_custom_call.1} parent=1 // pred_check_branch
      %77 = sbr.rel (0) target = $region37
    $region36: #{tpu_custom_call.1} parent=1 // pred_region
      _
    $region37: #{tpu_custom_call.1} parent=1 // pred_fallthru
      _
    // Predicated region
    $region38: #{tpu_custom_call.1} parent=1 // pred_check
      _
    $region39: #{tpu_custom_call.1} parent=1 // pred_check_branch
      %79 = sbr.rel (0) target = $region41
    $region40: #{tpu_custom_call.1} parent=1 // pred_region
      _
    $region41: #{tpu_custom_call.1} parent=1 // pred_fallthru
      _
    // Predicated region
    $region42: #{tpu_custom_call.1} parent=1 // pred_check
      _
    $region43: #{tpu_custom_call.1} parent=1 // pred_check_branch
      %81 = sbr.rel (0) target = $region45
    $region44: #{tpu_custom_call.1} parent=1 // pred_region
      _
    $region45: #{tpu_custom_call.1} parent=1 // pred_fallthru
      _
    // Predicated region
    $region46: #{tpu_custom_call.1} parent=1 // pred_check
      _
    $region47: #{tpu_custom_call.1} parent=1 // pred_check_branch
      %83 = sbr.rel (0) target = $region49
    $region48: #{tpu_custom_call.1} parent=1 // pred_region
      %s85 = ssub.s32 32, 32
      %86 = vsyncadd [#allocation6], %s85
      %s87 = sshll.u32 [#allocation7], 4
      %s88 = int_to_ptr.vmem [resolvable:$true] %s87
      %93 = dma.hbm_to_vmem [thread:$0]  %s11, 32, %s88, [#allocation6], 16, 16, 1
    $region49: #{tpu_custom_call.1} parent=1 // pred_fallthru
      _
    // Predicated region
    $region50: #{tpu_custom_call.1} parent=1 // pred_check
      _
    $region51: #{tpu_custom_call.1} parent=1 // pred_check_branch
      %95 = sbr.rel (0) target = $region53
    $region52: #{tpu_custom_call.1} parent=1 // pred_region
      _
    $region53: #{tpu_custom_call.1} parent=1 // pred_fallthru
      _
    // Predicated region
    $region54: #{tpu_custom_call.1} parent=1 // pred_check
      _
    $region55: #{tpu_custom_call.1} parent=1 // pred_check_branch
      %97 = sbr.rel (0) target = $region57
    $region56: #{tpu_custom_call.1} parent=1 // pred_region
      %s99 = ssub.s32 32, 32
      %100 = vsyncadd [#allocation9], %s99
      %s101 = sshll.u32 [#allocation8], 4
      %s102 = int_to_ptr.vmem [resolvable:$true] %s101
      %107 = dma.hbm_to_vmem [thread:$0]  %s13, 32, %s102, [#allocation9], 16, 16, 1
    $region57: #{tpu_custom_call.1} parent=1 // pred_fallthru
      _
    // Predicated region
    $region58: #{tpu_custom_call.1} parent=1 // pred_check
      _
    $region59: #{tpu_custom_call.1} parent=1 // pred_check_branch
      %109 = sbr.rel (0) target = $region61
    $region60: #{tpu_custom_call.1} parent=1 // pred_region
      _
    $region61: #{tpu_custom_call.1} parent=1 // pred_fallthru
      _
    // Predicated region
    $region62: #{tpu_custom_call.1} parent=1 // pred_check
      _
    $region63: #{tpu_custom_call.1} parent=1 // pred_check_branch
      %111 = sbr.rel (0) target = $region65
    $region64: #{tpu_custom_call.1} parent=1 // pred_region
      %s113 = ssub.s32 32, 32
      %114 = vsyncadd [#allocation9], %s113
      %s115 = sshll.u32 [#allocation10], 4
      %s116 = int_to_ptr.vmem [resolvable:$true] %s115
      %121 = dma.hbm_to_vmem [thread:$0]  %s15, 32, %s116, [#allocation9], 16, 16, 1
    $region65: #{tpu_custom_call.1} parent=1 // pred_fallthru
      _
    // Predicated region
    $region66: #{tpu_custom_call.1} parent=1 // pred_check
      _
    $region67: #{tpu_custom_call.1} parent=1 // pred_check_branch
      %123 = sbr.rel (0) target = $region69
    $region68: #{tpu_custom_call.1} parent=1 // pred_region
      %s125 = ssub.s32 32, 32
      %126 = vsyncadd [#allocation12], %s125
      %s127 = sshll.u32 [#allocation11], 4
      %s128 = int_to_ptr.vmem [resolvable:$true] %s127
      %133 = dma.hbm_to_vmem [thread:$0]  %s16, 32, %s128, [#allocation12], 16, 16, 1
    $region69: #{tpu_custom_call.1} parent=1 // pred_fallthru
      _
    // Predicated region
    $region70: #{tpu_custom_call.1} parent=1 // pred_check
      _
    $region71: #{tpu_custom_call.1} parent=1 // pred_check_branch
      %135 = sbr.rel (0) target = $region73
    $region72: #{tpu_custom_call.1} parent=1 // pred_region
      %s137 = ssub.s32 32, 32
      %138 = vsyncadd [#allocation12], %s137
      %s139 = sshll.u32 [#allocation13], 4
      %s140 = int_to_ptr.vmem [resolvable:$true] %s139
      %145 = dma.hbm_to_vmem [thread:$0]  %s17, 32, %s140, [#allocation12], 16, 16, 1
    $region73: #{tpu_custom_call.1} parent=1 // pred_fallthru
      _
    // Predicated region
    $region74: #{tpu_custom_call.1} parent=1 // pred_check
      _
    $region75: #{tpu_custom_call.1} parent=1 // pred_check_branch
      %147 = sbr.rel (0) target = $region77
    $region76: #{tpu_custom_call.1} parent=1 // pred_region
      _
    $region77: #{tpu_custom_call.1} parent=1 // pred_fallthru
      _
    // Predicated region
    $region78: #{tpu_custom_call.1} parent=1 // pred_check
      _
    $region79: #{tpu_custom_call.1} parent=1 // pred_check_branch
      %149 = sbr.rel (0) target = $region81
    $region80: #{tpu_custom_call.1} parent=1 // pred_region
      %s151 = ssub.s32 32, 32
      %152 = vsyncadd [#allocation15], %s151
      %s153 = sshll.u32 [#allocation14], 4
      %s154 = int_to_ptr.vmem [resolvable:$true] %s153
      %159 = dma.hbm_to_vmem [thread:$0]  %s19, 32, %s154, [#allocation15], 16, 16, 1
    $region81: #{tpu_custom_call.1} parent=1 // pred_fallthru
      _
    // Predicated region
    $region82: #{tpu_custom_call.1} parent=1 // pred_check
      _
    $region83: #{tpu_custom_call.1} parent=1 // pred_check_branch
      %161 = sbr.rel (0) target = $region85
    $region84: #{tpu_custom_call.1} parent=1 // pred_region
      _
    $region85: #{tpu_custom_call.1} parent=1 // pred_fallthru
      _
    // Predicated region
    $region86: #{tpu_custom_call.1} parent=1 // pred_check
      _
    $region87: #{tpu_custom_call.1} parent=1 // pred_check_branch
      %163 = sbr.rel (0) target = $region89
    $region88: #{tpu_custom_call.1} parent=1 // pred_region
      %s165 = ssub.s32 32, 32
      %166 = vsyncadd [#allocation15], %s165
      %s167 = sshll.u32 [#allocation16], 4
      %s168 = int_to_ptr.vmem [resolvable:$true] %s167
      %173 = dma.hbm_to_vmem [thread:$0]  %s21, 32, %s168, [#allocation15], 16, 16, 1
    $region89: #{tpu_custom_call.1} parent=1 // pred_fallthru
      _
    // Predicated region
    $region90: #{tpu_custom_call.1} parent=1 // pred_check
      _
    $region91: #{tpu_custom_call.1} parent=1 // pred_check_branch
      %175 = sbr.rel (0) target = $region93
    $region92: #{tpu_custom_call.1} parent=1 // pred_region
      _
    $region93: #{tpu_custom_call.1} parent=1 // pred_fallthru
      _
    // Predicated region
    $region94: #{tpu_custom_call.1} parent=1 // pred_check
      _
    $region95: #{tpu_custom_call.1} parent=1 // pred_check_branch
      %177 = sbr.rel (0) target = $region97
    $region96: #{tpu_custom_call.1} parent=1 // pred_region
      _
    $region97: #{tpu_custom_call.1} parent=1 // pred_fallthru
      _
    // Predicated region
    $region98: #{tpu_custom_call.1} parent=1 // pred_check
      _
    $region99: #{tpu_custom_call.1} parent=1 // pred_check_branch
      %179 = sbr.rel (0) target = $region101
    $region100: #{tpu_custom_call.1} parent=1 // pred_region
      _
    $region101: #{tpu_custom_call.1} parent=1 // pred_fallthru
      _
    // Predicated region
    $region102: #{tpu_custom_call.1} parent=1 // pred_check
      _
    $region103: #{tpu_custom_call.1} parent=1 // pred_check_branch
      %181 = sbr.rel (0) target = $region105
    $region104: #{tpu_custom_call.1} parent=1 // pred_region
      _
    $region105: #{tpu_custom_call.1} parent=1 // pred_fallthru
      _
    // Predicated region
    $region106: #{tpu_custom_call.1} parent=1 // pred_check
      _
    $region107: #{tpu_custom_call.1} parent=1 // pred_check_branch
      %183 = sbr.rel (0) target = $region109
    $region108: #{tpu_custom_call.1} parent=1 // pred_region
      %184 = dma.done [#allocation3], 256
    $region109: #{tpu_custom_call.1} parent=1 // pred_fallthru
      _
    // Predicated region
    $region110: #{tpu_custom_call.1} parent=1 // pred_check
      _
    $region111: #{tpu_custom_call.1} parent=1 // pred_check_branch
      %186 = sbr.rel (0) target = $region113
    $region112: #{tpu_custom_call.1} parent=1 // pred_region
      %187 = dma.done [#allocation6], 256
    $region113: #{tpu_custom_call.1} parent=1 // pred_fallthru
      _
    // Predicated region
    $region114: #{tpu_custom_call.1} parent=1 // pred_check
      _
    $region115: #{tpu_custom_call.1} parent=1 // pred_check_branch
      %189 = sbr.rel (0) target = $region117
    $region116: #{tpu_custom_call.1} parent=1 // pred_region
      %190 = dma.done [#allocation6], 32
    $region117: #{tpu_custom_call.1} parent=1 // pred_fallthru
      _
    // Predicated region
    $region118: #{tpu_custom_call.1} parent=1 // pred_check
      _
    $region119: #{tpu_custom_call.1} parent=1 // pred_check_branch
      %192 = sbr.rel (0) target = $region121
    $region120: #{tpu_custom_call.1} parent=1 // pred_region
      %193 = dma.done [#allocation9], 32
    $region121: #{tpu_custom_call.1} parent=1 // pred_fallthru
      _
    // Predicated region
    $region122: #{tpu_custom_call.1} parent=1 // pred_check
      _
    $region123: #{tpu_custom_call.1} parent=1 // pred_check_branch
      %195 = sbr.rel (0) target = $region125
    $region124: #{tpu_custom_call.1} parent=1 // pred_region
      %196 = dma.done [#allocation9], 32
    $region125: #{tpu_custom_call.1} parent=1 // pred_fallthru
      _
    // Predicated region
    $region126: #{tpu_custom_call.1} parent=1 // pred_check
      _
    $region127: #{tpu_custom_call.1} parent=1 // pred_check_branch
      %198 = sbr.rel (0) target = $region129
    $region128: #{tpu_custom_call.1} parent=1 // pred_region
      %199 = dma.done [#allocation12], 32
    $region129: #{tpu_custom_call.1} parent=1 // pred_fallthru
      _
    // Predicated region
    $region130: #{tpu_custom_call.1} parent=1 // pred_check
      _
    $region131: #{tpu_custom_call.1} parent=1 // pred_check_branch
      %201 = sbr.rel (0) target = $region133
    $region132: #{tpu_custom_call.1} parent=1 // pred_region
      %202 = dma.done [#allocation12], 32
    $region133: #{tpu_custom_call.1} parent=1 // pred_fallthru
      _
    // Predicated region
    $region134: #{tpu_custom_call.1} parent=1 // pred_check
      _
    $region135: #{tpu_custom_call.1} parent=1 // pred_check_branch
      %204 = sbr.rel (0) target = $region137
    $region136: #{tpu_custom_call.1} parent=1 // pred_region
      %205 = dma.done [#allocation15], 32
    $region137: #{tpu_custom_call.1} parent=1 // pred_fallthru
      _
    // Predicated region
    $region138: #{tpu_custom_call.1} parent=1 // pred_check
      _
    $region139: #{tpu_custom_call.1} parent=1 // pred_check_branch
      %207 = sbr.rel (0) target = $region141
    $region140: #{tpu_custom_call.1} parent=1 // pred_region
      %208 = dma.done [#allocation15], 32
    $region141: #{tpu_custom_call.1} parent=1 // pred_fallthru
      _
    %v209 = vld [vmem:[%s0] sm:$0xff]
    %v210 = vld [vmem:[%s0 + $0x8] sm:$0xff]
    %v211 = vld [vmem:[%s0 + $0x10] sm:$0x3]
    %v212 = vld [vmem:[%s0 + $0x18] sm:$0x3]
    %v213 = vld [vmem:[%s1] sm:$0xff]
    %v214 = vld [vmem:[%s1 + $0x8] sm:$0xff]
    %v215 = vld [vmem:[%s1 + $0x10] sm:$0xff]
    %v216 = vld [vmem:[%s1 + $0x18] sm:$0xff]
    %v217 = vld [vmem:[%s1 + $0x20] sm:$0xff]
    %v218 = vld [vmem:[%s1 + $0x28] sm:$0xff]
    %v219 = vld [vmem:[%s1 + $0x30] sm:$0xff]
    %v220 = vld [vmem:[%s1 + $0x38] sm:$0xff]
    %v221 = vld [vmem:[%s1 + $0x40] sm:$0xff]
    %v222 = vld [vmem:[%s1 + $0x48] sm:$0xff]
    %v223 = vld [vmem:[%s1 + $0x50] sm:$0xff]
    %v224 = vld [vmem:[%s1 + $0x58] sm:$0xff]
    %v225 = vld [vmem:[%s1 + $0x60] sm:$0xff]
    %v226 = vld [vmem:[%s1 + $0x68] sm:$0xff]
    %v227 = vld [vmem:[%s1 + $0x70] sm:$0xff]
    %v228 = vld [vmem:[%s1 + $0x78] sm:$0xff]
    %v229 = vld [vmem:[%s1 + $0x80] sm:$0xff]
    %v230 = vld [vmem:[%s1 + $0x88] sm:$0xff]
    %v231 = vld [vmem:[%s1 + $0x90] sm:$0xff]
    %v232 = vld [vmem:[%s1 + $0x98] sm:$0xff]
    %v233 = vld [vmem:[%s1 + $0xa0] sm:$0xff]
    %v234 = vld [vmem:[%s1 + $0xa8] sm:$0xff]
    %v235 = vld [vmem:[%s1 + $0xb0] sm:$0xff]
    %v236 = vld [vmem:[%s1 + $0xb8] sm:$0xff]
    %v237 = vld [vmem:[#allocation2] sm:$0xff]
    %v238 = vld [vmem:[#allocation2 + $0x8] sm:$0x3]
    %vm239 = vcmask 523264
    %v241 = vsel %vm239, %v210, 0
    %v244 = vsel %vm239, %v212, 0
    %246 = vmatprep.subr.mxu0 0.0
    %247 = vmatpush1.msra.mxu0 %v213
    %248 = vmatprep.subr.mxu0 0.0
    %249 = vmatpush1.msra.mxu0 %v214
    %250 = vmatprep.subr.mxu0 0.0
    %251 = vmatpush1.msra.mxu0 %v215
    %252 = vmatprep.subr.mxu0 0.0
    %253 = vmatpush1.msra.mxu0 %v216
    %254 = vmatprep.subr.mxu0 0.0
    %255 = vmatpush1.msra.mxu0 %v217
    %256 = vmatprep.subr.mxu0 0.0
    %257 = vmatpush1.msra.mxu0 %v218
    %258 = vmatprep.subr.mxu0 0.0
    %259 = vmatpush1.msra.mxu0 %v219
    %260 = vmatprep.subr.mxu0 0.0
    %261 = vmatpush1.msra.mxu0 %v220
    %262 = vmatprep.subr.mxu0 0.0
    %263 = vmatpush1.msra.mxu0 %v221
    %264 = vmatprep.subr.mxu0 0.0
    %265 = vmatpush1.msra.mxu0 %v222
    %266 = vmatprep.subr.mxu0 0.0
    %267 = vmatpush1.msra.mxu0 %v223
    %268 = vmatprep.subr.mxu0 0.0
    %269 = vmatpush1.msra.mxu0 %v224
    %270 = vmatprep.subr.mxu0 0.0
    %271 = vmatpush1.msra.mxu0 %v225
    %272 = vmatprep.subr.mxu0 0.0
    %273 = vmatpush1.msra.mxu0 %v226
    %274 = vmatprep.subr.mxu0 0.0
    %275 = vmatpush1.msra.mxu0 %v227
    %276 = vmatprep.subr.mxu0 0.0
    %277 = vmatpush1.msra.mxu0 %v228
    %278 = vmatprep.subr.mxu0 0.0
    %279 = vmatpush1.msra.mxu0 %v229
    %280 = vmatprep.subr.mxu0 0.0
    %281 = vmatpush1.msra.mxu0 %v230
    %282 = vmatprep.subr.mxu0 0.0
    %283 = vmatpush1.msra.mxu0 %v231
    %284 = vmatprep.subr.mxu0 0.0
    %285 = vmatpush1.msra.mxu0 %v232
    %286 = vmatprep.subr.mxu0 0.0
    %287 = vmatpush1.msra.mxu0 %v233
    %288 = vmatprep.subr.mxu0 0.0
    %289 = vmatpush1.msra.mxu0 %v234
    %290 = vmatprep.subr.mxu0 0.0
    %291 = vmatpush1.msra.mxu0 %v235
    %292 = vmatprep.subr.mxu0 0.0
    %293 = vmatpush1.msra.mxu0 %v236
    %294 = vmatprep.subr.mxu0 0.0
    %295 = vmatpush1.msra.mxu0 0.0
    %296 = vmatprep.subr.mxu0 0.0
    %297 = vmatpush1.msra.mxu0 0.0
    %298 = vmatprep.subr.mxu0 0.0
    %299 = vmatpush1.msra.mxu0 0.0
    %300 = vmatprep.subr.mxu0 0.0
    %301 = vmatpush1.msra.mxu0 0.0
    %302 = vmatprep.subr.mxu0 0.0
    %303 = vmatpush1.msra.mxu0 0.0
    %304 = vmatprep.subr.mxu0 0.0
    %305 = vmatpush1.msra.mxu0 0.0
    %306 = vmatprep.subr.mxu0 0.0
    %307 = vmatpush1.msra.mxu0 0.0
    %308 = vmatprep.subr.mxu0 0.0
    %309 = vmatpush1.msra.mxu0 0.0
    %310 = vmatprep.mubr.f32.mxu0 %v241
    %311 = vmatmul.mubr.f32.gmra.mrb[0].mxu0 %v209
    %v312 = vpop.f32.mrb[0].mxu0
    %v313 = vadd.f32 %v237, %v312
    %v314 = vpop.f32.mrb[0].mxu0
    %315 = vmatprep.mubr.f32.mxu0 %v244
    %316 = vmatmul.mubr.f32.gmra.mrb[0].mxu0 %v211
    %v317 = vpop.f32.mrb[0].mxu0
    %v318 = vadd.f32 %v238, %v317
    %v319 = vpop.f32.mrb[0].mxu0
    %320 = vdwg.mxu0
    %v321 = vld [vmem:[#allocation5] sm:$0xff]
    %v322 = vld [vmem:[#allocation5 + $0x8] sm:$0x3]
    %v323 = vld [vmem:[%s6] sm:$0x1]
    %v324 = vld [vmem:[%s7] sm:$0x1]
    %vm325 = vcmask 261120
    %v326 = vsel %vm325, %v313, 0.0
    %327 = vadd.xlane.f32.xlu0 %v326
    %v328 = vpop.xlane.xlu0 %327
    %vm329 = vcmask 254976
    %v330 = vsel %vm329, %v318, 0.0
    %331 = vadd.xlane.f32.xlu0 %v330
    %v332 = vpop.xlane.xlu0 %331
    %v333 = vrcp.pop 32.0
    %v334 = vmul.f32 %v328, %v333
    %v335 = vmul.f32 %v332, %v333
    %v336 = vsub.f32 %v313, %v334
    %v337 = vsub.f32 %v318, %v335
    %v338 = vmul.f32 %v336, %v336
    %v339 = vmul.f32 %v337, %v337
    %v340 = vsel %vm325, %v338, 0.0
    %341 = vadd.xlane.f32.xlu0 %v340
    %v342 = vpop.xlane.xlu0 %341
    %v343 = vsel %vm329, %v339, 0.0
    %344 = vadd.xlane.f32.xlu0 %v343
    %v345 = vpop.xlane.xlu0 %344
    %v346 = vmul.f32 %v342, %v333
    %v347 = vmul.f32 %v345, %v333
    %v348 = vadd.f32 %v346, 1e-12
    %v349 = vadd.f32 %v347, 1e-12
    %v350 = vrsqrt.pop %v348
    %v351 = vrsqrt.pop %v349
    %v352 = vmul.f32 %v336, %v350
    %v353 = vmul.f32 %v337, %v351
    %v355 = vlaneseq
    %v356 = vshrl.u32 %v355, 7
    %v357 = vsub.s32 0, %v356
    %v358 = vrot.slane %v323, %v357
    %v360 = vmul.f32 %v352, %v358
    %v361 = vmul.f32 %v353, %v358
    %v363 = vlaneseq
    %v364 = vshrl.u32 %v363, 7
    %v365 = vsub.s32 0, %v364
    %v366 = vrot.slane %v324, %v365
    %v368 = vadd.f32 %v360, %v366
    %v369 = vadd.f32 %v361, %v366
    %v370 = vld [vmem:[%s8] sm:$0xff]
    %v371 = vld [vmem:[%s8 + $0x8] sm:$0xff]
    %v372 = vld [vmem:[%s8 + $0x10] sm:$0xff]
    %v373 = vld [vmem:[%s8 + $0x18] sm:$0xff]
    %v374 = vld [vmem:[%s9] sm:$0x1]
    %v376 = vlaneseq
    %v377 = vshrl.u32 %v376, 7
    %v378 = vsub.s32 0, %v377
    %v379 = vrot.slane %v374, %v378
    %v382 = vsel %vm325, %v368, 0
    %v385 = vsel %vm325, %v369, 0
    %387 = vmatprep.subr.mxu0 0.0
    %388 = vmatpush1.msra.mxu0 %v370
    %389 = vmatprep.subr.mxu0 0.0
    %390 = vmatpush1.msra.mxu0 %v371
    %391 = vmatprep.subr.mxu0 0.0
    %392 = vmatpush1.msra.mxu0 %v372
    %393 = vmatprep.subr.mxu0 0.0
    %394 = vmatpush1.msra.mxu0 %v373
    %395 = vmatprep.subr.mxu0 0.0
    %396 = vmatpush1.msra.mxu0 0.0
    %397 = vmatprep.subr.mxu0 0.0
    %398 = vmatpush1.msra.mxu0 0.0
    %399 = vmatprep.subr.mxu0 0.0
    %400 = vmatpush1.msra.mxu0 0.0
    %401 = vmatprep.subr.mxu0 0.0
    %402 = vmatpush1.msra.mxu0 0.0
    %403 = vmatprep.subr.mxu0 0.0
    %404 = vmatpush1.msra.mxu0 0.0
    %405 = vmatprep.subr.mxu0 0.0
    %406 = vmatpush1.msra.mxu0 0.0
    %407 = vmatprep.subr.mxu0 0.0
    %408 = vmatpush1.msra.mxu0 0.0
    %409 = vmatprep.subr.mxu0 0.0
    %410 = vmatpush1.msra.mxu0 0.0
    %411 = vmatprep.subr.mxu0 0.0
    %412 = vmatpush1.msra.mxu0 0.0
    %413 = vmatprep.subr.mxu0 0.0
    %414 = vmatpush1.msra.mxu0 0.0
    %415 = vmatprep.subr.mxu0 0.0
    %416 = vmatpush1.msra.mxu0 0.0
    %417 = vmatprep.subr.mxu0 0.0
    %418 = vmatpush1.msra.mxu0 0.0
    %419 = vmatprep.subr.mxu0 0.0
    %420 = vmatpush1.msra.mxu0 0.0
    %421 = vmatprep.subr.mxu0 0.0
    %422 = vmatpush1.msra.mxu0 0.0
    %423 = vmatprep.subr.mxu0 0.0
    %424 = vmatpush1.msra.mxu0 0.0
    %425 = vmatprep.subr.mxu0 0.0
    %426 = vmatpush1.msra.mxu0 0.0
    %427 = vmatprep.subr.mxu0 0.0
    %428 = vmatpush1.msra.mxu0 0.0
    %429 = vmatprep.subr.mxu0 0.0
    %430 = vmatpush1.msra.mxu0 0.0
    %431 = vmatprep.subr.mxu0 0.0
    %432 = vmatpush1.msra.mxu0 0.0
    %433 = vmatprep.subr.mxu0 0.0
    %434 = vmatpush1.msra.mxu0 0.0
    %435 = vmatprep.subr.mxu0 0.0
    %436 = vmatpush1.msra.mxu0 0.0
    %437 = vmatprep.subr.mxu0 0.0
    %438 = vmatpush1.msra.mxu0 0.0
    %439 = vmatprep.subr.mxu0 0.0
    %440 = vmatpush1.msra.mxu0 0.0
    %441 = vmatprep.subr.mxu0 0.0
    %442 = vmatpush1.msra.mxu0 0.0
    %443 = vmatprep.subr.mxu0 0.0
    %444 = vmatpush1.msra.mxu0 0.0
    %445 = vmatprep.subr.mxu0 0.0
    %446 = vmatpush1.msra.mxu0 0.0
    %447 = vmatprep.subr.mxu0 0.0
    %448 = vmatpush1.msra.mxu0 0.0
    %449 = vmatprep.subr.mxu0 0.0
    %450 = vmatpush1.msra.mxu0 0.0
    %451 = vmatprep.mubr.f32.mxu0 0.0
    %452 = vmatmul.mubr.f32.gmra.mrb[0].mxu0 %v382
    %v453 = vpop.f32.mrb[0].mxu0
    %v454 = vadd.f32 %v379, %v453
    %v455 = vpop.f32.mrb[0].mxu0
    %456 = vmatprep.mubr.f32.mxu0 0.0
    %457 = vmatmul.mubr.f32.gmra.mrb[0].mxu0 %v385
    %v458 = vpop.f32.mrb[0].mxu0
    %v459 = vadd.f32 %v379, %v458
    %v460 = vpop.f32.mrb[0].mxu0
    %461 = vdwg.mxu0
    %v462 = vld [vmem:[%s10] sm:$0xff]
    %v463 = vld [vmem:[%s10 + $0x8] sm:$0xff]
    %v464 = vld [vmem:[%s10 + $0x10] sm:$0xff]
    %v465 = vld [vmem:[%s10 + $0x18] sm:$0xff]
    %v466 = vld [vmem:[#allocation7] sm:$0x1]
    %v468 = vlaneseq
    %v469 = vshrl.u32 %v468, 7
    %v470 = vsub.s32 0, %v469
    %v471 = vrot.slane %v466, %v470
    %473 = vmatprep.subr.mxu0 0.0
    %474 = vmatpush1.msra.mxu0 %v462
    %475 = vmatprep.subr.mxu0 0.0
    %476 = vmatpush1.msra.mxu0 %v463
    %477 = vmatprep.subr.mxu0 0.0
    %478 = vmatpush1.msra.mxu0 %v464
    %479 = vmatprep.subr.mxu0 0.0
    %480 = vmatpush1.msra.mxu0 %v465
    %481 = vmatprep.subr.mxu0 0.0
    %482 = vmatpush1.msra.mxu0 0.0
    %483 = vmatprep.subr.mxu0 0.0
    %484 = vmatpush1.msra.mxu0 0.0
    %485 = vmatprep.subr.mxu0 0.0
    %486 = vmatpush1.msra.mxu0 0.0
    %487 = vmatprep.subr.mxu0 0.0
    %488 = vmatpush1.msra.mxu0 0.0
    %489 = vmatprep.subr.mxu0 0.0
    %490 = vmatpush1.msra.mxu0 0.0
    %491 = vmatprep.subr.mxu0 0.0
    %492 = vmatpush1.msra.mxu0 0.0
    %493 = vmatprep.subr.mxu0 0.0
    %494 = vmatpush1.msra.mxu0 0.0
    %495 = vmatprep.subr.mxu0 0.0
    %496 = vmatpush1.msra.mxu0 0.0
    %497 = vmatprep.subr.mxu0 0.0
    %498 = vmatpush1.msra.mxu0 0.0
    %499 = vmatprep.subr.mxu0 0.0
    %500 = vmatpush1.msra.mxu0 0.0
    %501 = vmatprep.subr.mxu0 0.0
    %502 = vmatpush1.msra.mxu0 0.0
    %503 = vmatprep.subr.mxu0 0.0
    %504 = vmatpush1.msra.mxu0 0.0
    %505 = vmatprep.subr.mxu0 0.0
    %506 = vmatpush1.msra.mxu0 0.0
    %507 = vmatprep.subr.mxu0 0.0
    %508 = vmatpush1.msra.mxu0 0.0
    %509 = vmatprep.subr.mxu0 0.0
    %510 = vmatpush1.msra.mxu0 0.0
    %511 = vmatprep.subr.mxu0 0.0
    %512 = vmatpush1.msra.mxu0 0.0
    %513 = vmatprep.subr.mxu0 0.0
    %514 = vmatpush1.msra.mxu0 0.0
    %515 = vmatprep.subr.mxu0 0.0
    %516 = vmatpush1.msra.mxu0 0.0
    %517 = vmatprep.subr.mxu0 0.0
    %518 = vmatpush1.msra.mxu0 0.0
    %519 = vmatprep.subr.mxu0 0.0
    %520 = vmatpush1.msra.mxu0 0.0
    %521 = vmatprep.subr.mxu0 0.0
    %522 = vmatpush1.msra.mxu0 0.0
    %523 = vmatprep.subr.mxu0 0.0
    %524 = vmatpush1.msra.mxu0 0.0
    %525 = vmatprep.subr.mxu0 0.0
    %526 = vmatpush1.msra.mxu0 0.0
    %527 = vmatprep.subr.mxu0 0.0
    %528 = vmatpush1.msra.mxu0 0.0
    %529 = vmatprep.subr.mxu0 0.0
    %530 = vmatpush1.msra.mxu0 0.0
    %531 = vmatprep.subr.mxu0 0.0
    %532 = vmatpush1.msra.mxu0 0.0
    %533 = vmatprep.subr.mxu0 0.0
    %534 = vmatpush1.msra.mxu0 0.0
    %535 = vmatprep.subr.mxu0 0.0
    %536 = vmatpush1.msra.mxu0 0.0
    %537 = vmatprep.mubr.f32.mxu0 0.0
    %538 = vmatmul.mubr.f32.gmra.mrb[0].mxu0 %v382
    %v539 = vpop.f32.mrb[0].mxu0
    %v540 = vadd.f32 %v471, %v539
    %v541 = vpop.f32.mrb[0].mxu0
    %542 = vmatprep.mubr.f32.mxu0 0.0
    %543 = vmatmul.mubr.f32.gmra.mrb[0].mxu0 %v385
    %v544 = vpop.f32.mrb[0].mxu0
    %v545 = vadd.f32 %v471, %v544
    %v546 = vpop.f32.mrb[0].mxu0
    %547 = vdwg.mxu0
    %v548 = vld [vmem:[%s12] sm:$0xff]
    %v549 = vld [vmem:[%s12 + $0x8] sm:$0xff]
    %v550 = vld [vmem:[%s12 + $0x10] sm:$0xff]
    %v551 = vld [vmem:[%s12 + $0x18] sm:$0xff]
    %v552 = vld [vmem:[#allocation8] sm:$0x1]
    %v554 = vlaneseq
    %v555 = vshrl.u32 %v554, 7
    %v556 = vsub.s32 0, %v555
    %v557 = vrot.slane %v552, %v556
    %559 = vmatprep.subr.mxu0 0.0
    %560 = vmatpush1.msra.mxu0 %v548
    %561 = vmatprep.subr.mxu0 0.0
    %562 = vmatpush1.msra.mxu0 %v549
    %563 = vmatprep.subr.mxu0 0.0
    %564 = vmatpush1.msra.mxu0 %v550
    %565 = vmatprep.subr.mxu0 0.0
    %566 = vmatpush1.msra.mxu0 %v551
    %567 = vmatprep.subr.mxu0 0.0
    %568 = vmatpush1.msra.mxu0 0.0
    %569 = vmatprep.subr.mxu0 0.0
    %570 = vmatpush1.msra.mxu0 0.0
    %571 = vmatprep.subr.mxu0 0.0
    %572 = vmatpush1.msra.mxu0 0.0
    %573 = vmatprep.subr.mxu0 0.0
    %574 = vmatpush1.msra.mxu0 0.0
    %575 = vmatprep.subr.mxu0 0.0
    %576 = vmatpush1.msra.mxu0 0.0
    %577 = vmatprep.subr.mxu0 0.0
    %578 = vmatpush1.msra.mxu0 0.0
    %579 = vmatprep.subr.mxu0 0.0
    %580 = vmatpush1.msra.mxu0 0.0
    %581 = vmatprep.subr.mxu0 0.0
    %582 = vmatpush1.msra.mxu0 0.0
    %583 = vmatprep.subr.mxu0 0.0
    %584 = vmatpush1.msra.mxu0 0.0
    %585 = vmatprep.subr.mxu0 0.0
    %586 = vmatpush1.msra.mxu0 0.0
    %587 = vmatprep.subr.mxu0 0.0
    %588 = vmatpush1.msra.mxu0 0.0
    %589 = vmatprep.subr.mxu0 0.0
    %590 = vmatpush1.msra.mxu0 0.0
    %591 = vmatprep.subr.mxu0 0.0
    %592 = vmatpush1.msra.mxu0 0.0
    %593 = vmatprep.subr.mxu0 0.0
    %594 = vmatpush1.msra.mxu0 0.0
    %595 = vmatprep.subr.mxu0 0.0
    %596 = vmatpush1.msra.mxu0 0.0
    %597 = vmatprep.subr.mxu0 0.0
    %598 = vmatpush1.msra.mxu0 0.0
    %599 = vmatprep.subr.mxu0 0.0
    %600 = vmatpush1.msra.mxu0 0.0
    %601 = vmatprep.subr.mxu0 0.0
    %602 = vmatpush1.msra.mxu0 0.0
    %603 = vmatprep.subr.mxu0 0.0
    %604 = vmatpush1.msra.mxu0 0.0
    %605 = vmatprep.subr.mxu0 0.0
    %606 = vmatpush1.msra.mxu0 0.0
    %607 = vmatprep.subr.mxu0 0.0
    %608 = vmatpush1.msra.mxu0 0.0
    %609 = vmatprep.subr.mxu0 0.0
    %610 = vmatpush1.msra.mxu0 0.0
    %611 = vmatprep.subr.mxu0 0.0
    %612 = vmatpush1.msra.mxu0 0.0
    %613 = vmatprep.subr.mxu0 0.0
    %614 = vmatpush1.msra.mxu0 0.0
    %615 = vmatprep.subr.mxu0 0.0
    %616 = vmatpush1.msra.mxu0 0.0
    %617 = vmatprep.subr.mxu0 0.0
    %618 = vmatpush1.msra.mxu0 0.0
    %619 = vmatprep.subr.mxu0 0.0
    %620 = vmatpush1.msra.mxu0 0.0
    %621 = vmatprep.subr.mxu0 0.0
    %622 = vmatpush1.msra.mxu0 0.0
    %623 = vmatprep.mubr.f32.mxu0 0.0
    %624 = vmatmul.mubr.f32.gmra.mrb[0].mxu0 %v382
    %v625 = vpop.f32.mrb[0].mxu0
    %v626 = vadd.f32 %v557, %v625
    %v627 = vpop.f32.mrb[0].mxu0
    %628 = vmatprep.mubr.f32.mxu0 0.0
    %629 = vmatmul.mubr.f32.gmra.mrb[0].mxu0 %v385
    %v630 = vpop.f32.mrb[0].mxu0
    %v631 = vadd.f32 %v557, %v630
    %v632 = vpop.f32.mrb[0].mxu0
    %633 = vdwg.mxu0
    %v634 = vld [vmem:[%s4] sm:$0x1]
    %v636 = vlaneseq
    %v637 = vshrl.u32 %v636, 7
    %v638 = vsub.s32 0, %v637
    %v639 = vrot.slane %v634, %v638
    %v641 = vmul.f32 %v540, %v639
    %v642 = vmul.f32 %v545, %v639
    %v644 = vsel %vm325, %v454, 0
    %v647 = vsel %vm325, %v459, 0
    %v650 = vsel %vm325, %v641, 0
    %v653 = vsel %vm325, %v642, 0
    %655 = vmatprep.subr.mxu0 0.0
    %656 = vmatpush1.xpose.msra.mxu0 %v650
    %657 = vmatprep.subr.mxu0 0.0
    %658 = vmatpush1.xpose.msra.mxu0 %v653
    %659 = vmatprep.subr.mxu0 0.0
    %660 = vmatpush1.xpose.msra.mxu0 0.0
    %661 = vmatprep.subr.mxu0 0.0
    %662 = vmatpush1.xpose.msra.mxu0 0.0
    %663 = vmatprep.subr.mxu0 0.0
    %664 = vmatpush1.xpose.msra.mxu0 0.0
    %665 = vmatprep.subr.mxu0 0.0
    %666 = vmatpush1.xpose.msra.mxu0 0.0
    %667 = vmatprep.subr.mxu0 0.0
    %668 = vmatpush1.xpose.msra.mxu0 0.0
    %669 = vmatprep.subr.mxu0 0.0
    %670 = vmatpush1.xpose.msra.mxu0 0.0
    %671 = vmatprep.subr.mxu0 0.0
    %672 = vmatpush1.xpose.msra.mxu0 0.0
    %673 = vmatprep.subr.mxu0 0.0
    %674 = vmatpush1.xpose.msra.mxu0 0.0
    %675 = vmatprep.subr.mxu0 0.0
    %676 = vmatpush1.xpose.msra.mxu0 0.0
    %677 = vmatprep.subr.mxu0 0.0
    %678 = vmatpush1.xpose.msra.mxu0 0.0
    %679 = vmatprep.subr.mxu0 0.0
    %680 = vmatpush1.xpose.msra.mxu0 0.0
    %681 = vmatprep.subr.mxu0 0.0
    %682 = vmatpush1.xpose.msra.mxu0 0.0
    %683 = vmatprep.subr.mxu0 0.0
    %684 = vmatpush1.xpose.msra.mxu0 0.0
    %685 = vmatprep.subr.mxu0 0.0
    %686 = vmatpush1.xpose.msra.mxu0 0.0
    %687 = vmatprep.subr.mxu0 0.0
    %688 = vmatpush1.xpose.msra.mxu0 0.0
    %689 = vmatprep.subr.mxu0 0.0
    %690 = vmatpush1.xpose.msra.mxu0 0.0
    %691 = vmatprep.subr.mxu0 0.0
    %692 = vmatpush1.xpose.msra.mxu0 0.0
    %693 = vmatprep.subr.mxu0 0.0
    %694 = vmatpush1.xpose.msra.mxu0 0.0
    %695 = vmatprep.subr.mxu0 0.0
    %696 = vmatpush1.xpose.msra.mxu0 0.0
    %697 = vmatprep.subr.mxu0 0.0
    %698 = vmatpush1.xpose.msra.mxu0 0.0
    %699 = vmatprep.subr.mxu0 0.0
    %700 = vmatpush1.xpose.msra.mxu0 0.0
    %701 = vmatprep.subr.mxu0 0.0
    %702 = vmatpush1.xpose.msra.mxu0 0.0
    %703 = vmatprep.subr.mxu0 0.0
    %704 = vmatpush1.xpose.msra.mxu0 0.0
    %705 = vmatprep.subr.mxu0 0.0
    %706 = vmatpush1.xpose.msra.mxu0 0.0
    %707 = vmatprep.subr.mxu0 0.0
    %708 = vmatpush1.xpose.msra.mxu0 0.0
    %709 = vmatprep.subr.mxu0 0.0
    %710 = vmatpush1.xpose.msra.mxu0 0.0
    %711 = vmatprep.subr.mxu0 0.0
    %712 = vmatpush1.xpose.msra.mxu0 0.0
    %713 = vmatprep.subr.mxu0 0.0
    %714 = vmatpush1.xpose.msra.mxu0 0.0
    %715 = vmatprep.subr.mxu0 0.0
    %716 = vmatpush1.xpose.msra.mxu0 0.0
    %717 = vmatprep.subr.mxu0 0.0
    %718 = vmatpush1.xpose.msra.mxu0 0.0
    %719 = vmatprep.mubr.f32.mxu0 0.0
    %720 = vmatmul.mubr.f32.gmra.mrb[0].mxu0 %v644
    %v721 = vpop.f32.mrb[0].mxu0
    %v722 = vadd.f32 0.0, %v721
    %v723 = vpop.f32.mrb[0].mxu0
    %724 = vmatprep.mubr.f32.mxu0 0.0
    %725 = vmatmul.mubr.f32.gmra.mrb[0].mxu0 %v647
    %v726 = vpop.f32.mrb[0].mxu0
    %v727 = vadd.f32 0.0, %v726
    %v728 = vpop.f32.mrb[0].mxu0
    %729 = vdwg.mxu0
    %v730 = vmul.f32 %v722, 0.25
    %v731 = vmul.f32 %v727, 0.25
    %v732 = vadd.f32 %v730, %v321
    %v733 = vadd.f32 %v731, %v322
    %vm734 = vcmask 80896
    %v735 = vsel %vm734, %v732, -inf
    %736 = vmax.xlane.f32.xlu0 %v735
    %v737 = vpop.xlane.xlu0 %736
    %vm738 = vcmask 74752
    %v739 = vsel %vm738, %v733, -inf
    %740 = vmax.xlane.f32.xlu0 %v739
    %v741 = vpop.xlane.xlu0 %740
    %v742 = vsub.f32 %v732, %v737
    %v743 = vsub.f32 %v733, %v741
    %v744 = vmul.f32 %v742, 1.442695
    %v745 = vpow.pop %v744
    %v746 = vmul.f32 %v743, 1.442695
    %v747 = vpow.pop %v746
    %v748 = vsel %vm734, %v745, 0.0
    %749 = vadd.xlane.f32.xlu0 %v748
    %v750 = vpop.xlane.xlu0 %749
    %v751 = vsel %vm738, %v747, 0.0
    %752 = vadd.xlane.f32.xlu0 %v751
    %v753 = vpop.xlane.xlu0 %752
    %v754 = vrcp.pop %v750
    %v755 = vrcp.pop %v753
    %v756 = vmul.f32 %v745, %v754
    %v757 = vmul.f32 %v747, %v755
    %v758 = vmul.f32 %v626, %v639
    %v759 = vmul.f32 %v631, %v639
    %s760 = scalar_lea.vmem %s4, 1
    %v761 = vld [vmem:[%s760] sm:$0x1]
    %v763 = vlaneseq
    %v764 = vshrl.u32 %v763, 7
    %v765 = vsub.s32 0, %v764
    %v766 = vrot.slane %v761, %v765
    %v768 = vmul.f32 %v540, %v766
    %v769 = vmul.f32 %v545, %v766
    %v771 = vsel %vm325, %v768, 0
    %v774 = vsel %vm325, %v769, 0
    %776 = vmatprep.subr.mxu0 0.0
    %777 = vmatpush1.xpose.msra.mxu0 %v771
    %778 = vmatprep.subr.mxu0 0.0
    %779 = vmatpush1.xpose.msra.mxu0 %v774
    %780 = vmatprep.subr.mxu0 0.0
    %781 = vmatpush1.xpose.msra.mxu0 0.0
    %782 = vmatprep.subr.mxu0 0.0
    %783 = vmatpush1.xpose.msra.mxu0 0.0
    %784 = vmatprep.subr.mxu0 0.0
    %785 = vmatpush1.xpose.msra.mxu0 0.0
    %786 = vmatprep.subr.mxu0 0.0
    %787 = vmatpush1.xpose.msra.mxu0 0.0
    %788 = vmatprep.subr.mxu0 0.0
    %789 = vmatpush1.xpose.msra.mxu0 0.0
    %790 = vmatprep.subr.mxu0 0.0
    %791 = vmatpush1.xpose.msra.mxu0 0.0
    %792 = vmatprep.subr.mxu0 0.0
    %793 = vmatpush1.xpose.msra.mxu0 0.0
    %794 = vmatprep.subr.mxu0 0.0
    %795 = vmatpush1.xpose.msra.mxu0 0.0
    %796 = vmatprep.subr.mxu0 0.0
    %797 = vmatpush1.xpose.msra.mxu0 0.0
    %798 = vmatprep.subr.mxu0 0.0
    %799 = vmatpush1.xpose.msra.mxu0 0.0
    %800 = vmatprep.subr.mxu0 0.0
    %801 = vmatpush1.xpose.msra.mxu0 0.0
    %802 = vmatprep.subr.mxu0 0.0
    %803 = vmatpush1.xpose.msra.mxu0 0.0
    %804 = vmatprep.subr.mxu0 0.0
    %805 = vmatpush1.xpose.msra.mxu0 0.0
    %806 = vmatprep.subr.mxu0 0.0
    %807 = vmatpush1.xpose.msra.mxu0 0.0
    %808 = vmatprep.subr.mxu0 0.0
    %809 = vmatpush1.xpose.msra.mxu0 0.0
    %810 = vmatprep.subr.mxu0 0.0
    %811 = vmatpush1.xpose.msra.mxu0 0.0
    %812 = vmatprep.subr.mxu0 0.0
    %813 = vmatpush1.xpose.msra.mxu0 0.0
    %814 = vmatprep.subr.mxu0 0.0
    %815 = vmatpush1.xpose.msra.mxu0 0.0
    %816 = vmatprep.subr.mxu0 0.0
    %817 = vmatpush1.xpose.msra.mxu0 0.0
    %818 = vmatprep.subr.mxu0 0.0
    %819 = vmatpush1.xpose.msra.mxu0 0.0
    %820 = vmatprep.subr.mxu0 0.0
    %821 = vmatpush1.xpose.msra.mxu0 0.0
    %822 = vmatprep.subr.mxu0 0.0
    %823 = vmatpush1.xpose.msra.mxu0 0.0
    %824 = vmatprep.subr.mxu0 0.0
    %825 = vmatpush1.xpose.msra.mxu0 0.0
    %826 = vmatprep.subr.mxu0 0.0
    %827 = vmatpush1.xpose.msra.mxu0 0.0
    %828 = vmatprep.subr.mxu0 0.0
    %829 = vmatpush1.xpose.msra.mxu0 0.0
    %830 = vmatprep.subr.mxu0 0.0
    %831 = vmatpush1.xpose.msra.mxu0 0.0
    %832 = vmatprep.subr.mxu0 0.0
    %833 = vmatpush1.xpose.msra.mxu0 0.0
    %834 = vmatprep.subr.mxu0 0.0
    %835 = vmatpush1.xpose.msra.mxu0 0.0
    %836 = vmatprep.subr.mxu0 0.0
    %837 = vmatpush1.xpose.msra.mxu0 0.0
    %838 = vmatprep.subr.mxu0 0.0
    %839 = vmatpush1.xpose.msra.mxu0 0.0
    %840 = vmatprep.mubr.f32.mxu0 0.0
    %841 = vmatmul.mubr.f32.gmra.mrb[0].mxu0 %v644
    %v842 = vpop.f32.mrb[0].mxu0
    %v843 = vadd.f32 0.0, %v842
    %v844 = vpop.f32.mrb[0].mxu0
    %845 = vmatprep.mubr.f32.mxu0 0.0
    %846 = vmatmul.mubr.f32.gmra.mrb[0].mxu0 %v647
    %v847 = vpop.f32.mrb[0].mxu0
    %v848 = vadd.f32 0.0, %v847
    %v849 = vpop.f32.mrb[0].mxu0
    %850 = vdwg.mxu0
    %v851 = vmul.f32 %v843, 0.25
    %v852 = vmul.f32 %v848, 0.25
    %v853 = vadd.f32 %v851, %v321
    %v854 = vadd.f32 %v852, %v322
    %v855 = vsel %vm734, %v853, -inf
    %856 = vmax.xlane.f32.xlu0 %v855
    %v857 = vpop.xlane.xlu0 %856
    %v858 = vsel %vm738, %v854, -inf
    %859 = vmax.xlane.f32.xlu0 %v858
    %v860 = vpop.xlane.xlu0 %859
    %v861 = vsub.f32 %v853, %v857
    %v862 = vsub.f32 %v854, %v860
    %v863 = vmul.f32 %v861, 1.442695
    %v864 = vpow.pop %v863
    %v865 = vmul.f32 %v862, 1.442695
    %v866 = vpow.pop %v865
    %v867 = vsel %vm734, %v864, 0.0
    %868 = vadd.xlane.f32.xlu0 %v867
    %v869 = vpop.xlane.xlu0 %868
    %v870 = vsel %vm738, %v866, 0.0
    %871 = vadd.xlane.f32.xlu0 %v870
    %v872 = vpop.xlane.xlu0 %871
    %v873 = vrcp.pop %v869
    %v874 = vrcp.pop %v872
    %v875 = vmul.f32 %v864, %v873
    %v876 = vmul.f32 %v866, %v874
    %v877 = vmul.f32 %v626, %v766
    %v878 = vmul.f32 %v631, %v766
    %v880 = vsel %vm734, %v875, 0
    %v883 = vsel %vm734, %v876, 0
    %vm885 = vcmask 1041408
    %v887 = vsel %vm885, %v878, 0
    %889 = vmatprep.subr.mxu0 0.0
    %890 = vmatpush1.msra.mxu0 %v877
    %891 = vmatprep.subr.mxu0 0.0
    %892 = vmatpush1.msra.mxu0 %v887
    %893 = vmatprep.subr.mxu0 0.0
    %894 = vmatpush1.msra.mxu0 0.0
    %895 = vmatprep.subr.mxu0 0.0
    %896 = vmatpush1.msra.mxu0 0.0
    %897 = vmatprep.subr.mxu0 0.0
    %898 = vmatpush1.msra.mxu0 0.0
    %899 = vmatprep.subr.mxu0 0.0
    %900 = vmatpush1.msra.mxu0 0.0
    %901 = vmatprep.subr.mxu0 0.0
    %902 = vmatpush1.msra.mxu0 0.0
    %903 = vmatprep.subr.mxu0 0.0
    %904 = vmatpush1.msra.mxu0 0.0
    %905 = vmatprep.subr.mxu0 0.0
    %906 = vmatpush1.msra.mxu0 0.0
    %907 = vmatprep.subr.mxu0 0.0
    %908 = vmatpush1.msra.mxu0 0.0
    %909 = vmatprep.subr.mxu0 0.0
    %910 = vmatpush1.msra.mxu0 0.0
    %911 = vmatprep.subr.mxu0 0.0
    %912 = vmatpush1.msra.mxu0 0.0
    %913 = vmatprep.subr.mxu0 0.0
    %914 = vmatpush1.msra.mxu0 0.0
    %915 = vmatprep.subr.mxu0 0.0
    %916 = vmatpush1.msra.mxu0 0.0
    %917 = vmatprep.subr.mxu0 0.0
    %918 = vmatpush1.msra.mxu0 0.0
    %919 = vmatprep.subr.mxu0 0.0
    %920 = vmatpush1.msra.mxu0 0.0
    %921 = vmatprep.subr.mxu0 0.0
    %922 = vmatpush1.msra.mxu0 0.0
    %923 = vmatprep.subr.mxu0 0.0
    %924 = vmatpush1.msra.mxu0 0.0
    %925 = vmatprep.subr.mxu0 0.0
    %926 = vmatpush1.msra.mxu0 0.0
    %927 = vmatprep.subr.mxu0 0.0
    %928 = vmatpush1.msra.mxu0 0.0
    %929 = vmatprep.subr.mxu0 0.0
    %930 = vmatpush1.msra.mxu0 0.0
    %931 = vmatprep.subr.mxu0 0.0
    %932 = vmatpush1.msra.mxu0 0.0
    %933 = vmatprep.subr.mxu0 0.0
    %934 = vmatpush1.msra.mxu0 0.0
    %935 = vmatprep.subr.mxu0 0.0
    %936 = vmatpush1.msra.mxu0 0.0
    %937 = vmatprep.subr.mxu0 0.0
    %938 = vmatpush1.msra.mxu0 0.0
    %939 = vmatprep.subr.mxu0 0.0
    %940 = vmatpush1.msra.mxu0 0.0
    %941 = vmatprep.subr.mxu0 0.0
    %942 = vmatpush1.msra.mxu0 0.0
    %943 = vmatprep.subr.mxu0 0.0
    %944 = vmatpush1.msra.mxu0 0.0
    %945 = vmatprep.subr.mxu0 0.0
    %946 = vmatpush1.msra.mxu0 0.0
    %947 = vmatprep.subr.mxu0 0.0
    %948 = vmatpush1.msra.mxu0 0.0
    %949 = vmatprep.subr.mxu0 0.0
    %950 = vmatpush1.msra.mxu0 0.0
    %951 = vmatprep.subr.mxu0 0.0
    %952 = vmatpush1.msra.mxu0 0.0
    %953 = vmatprep.mubr.f32.mxu0 0.0
    %954 = vmatmul.mubr.f32.gmra.mrb[0].mxu0 %v880
    %v955 = vpop.f32.mrb[0].mxu0
    %v956 = vadd.f32 0.0, %v955
    %v957 = vpop.f32.mrb[0].mxu0
    %958 = vmatprep.mubr.f32.mxu0 0.0
    %959 = vmatmul.mubr.f32.gmra.mrb[0].mxu0 %v883
    %v960 = vpop.f32.mrb[0].mxu0
    %v961 = vadd.f32 0.0, %v960
    %v962 = vpop.f32.mrb[0].mxu0
    %963 = vdwg.mxu0
    %v965 = vsel %vm734, %v756, 0
    %v968 = vsel %vm734, %v757, 0
    %v971 = vsel %vm885, %v759, 0
    %973 = vmatprep.subr.mxu0 0.0
    %974 = vmatpush1.msra.mxu0 %v758
    %975 = vmatprep.subr.mxu0 0.0
    %976 = vmatpush1.msra.mxu0 %v971
    %977 = vmatprep.subr.mxu0 0.0
    %978 = vmatpush1.msra.mxu0 0.0
    %979 = vmatprep.subr.mxu0 0.0
    %980 = vmatpush1.msra.mxu0 0.0
    %981 = vmatprep.subr.mxu0 0.0
    %982 = vmatpush1.msra.mxu0 0.0
    %983 = vmatprep.subr.mxu0 0.0
    %984 = vmatpush1.msra.mxu0 0.0
    %985 = vmatprep.subr.mxu0 0.0
    %986 = vmatpush1.msra.mxu0 0.0
    %987 = vmatprep.subr.mxu0 0.0
    %988 = vmatpush1.msra.mxu0 0.0
    %989 = vmatprep.subr.mxu0 0.0
    %990 = vmatpush1.msra.mxu0 0.0
    %991 = vmatprep.subr.mxu0 0.0
    %992 = vmatpush1.msra.mxu0 0.0
    %993 = vmatprep.subr.mxu0 0.0
    %994 = vmatpush1.msra.mxu0 0.0
    %995 = vmatprep.subr.mxu0 0.0
    %996 = vmatpush1.msra.mxu0 0.0
    %997 = vmatprep.subr.mxu0 0.0
    %998 = vmatpush1.msra.mxu0 0.0
    %999 = vmatprep.subr.mxu0 0.0
    %1000 = vmatpush1.msra.mxu0 0.0
    %1001 = vmatprep.subr.mxu0 0.0
    %1002 = vmatpush1.msra.mxu0 0.0
    %1003 = vmatprep.subr.mxu0 0.0
    %1004 = vmatpush1.msra.mxu0 0.0
    %1005 = vmatprep.subr.mxu0 0.0
    %1006 = vmatpush1.msra.mxu0 0.0
    %1007 = vmatprep.subr.mxu0 0.0
    %1008 = vmatpush1.msra.mxu0 0.0
    %1009 = vmatprep.subr.mxu0 0.0
    %1010 = vmatpush1.msra.mxu0 0.0
    %1011 = vmatprep.subr.mxu0 0.0
    %1012 = vmatpush1.msra.mxu0 0.0
    %1013 = vmatprep.subr.mxu0 0.0
    %1014 = vmatpush1.msra.mxu0 0.0
    %1015 = vmatprep.subr.mxu0 0.0
    %1016 = vmatpush1.msra.mxu0 0.0
    %1017 = vmatprep.subr.mxu0 0.0
    %1018 = vmatpush1.msra.mxu0 0.0
    %1019 = vmatprep.subr.mxu0 0.0
    %1020 = vmatpush1.msra.mxu0 0.0
    %1021 = vmatprep.subr.mxu0 0.0
    %1022 = vmatpush1.msra.mxu0 0.0
    %1023 = vmatprep.subr.mxu0 0.0
    %1024 = vmatpush1.msra.mxu0 0.0
    %1025 = vmatprep.subr.mxu0 0.0
    %1026 = vmatpush1.msra.mxu0 0.0
    %1027 = vmatprep.subr.mxu0 0.0
    %1028 = vmatpush1.msra.mxu0 0.0
    %1029 = vmatprep.subr.mxu0 0.0
    %1030 = vmatpush1.msra.mxu0 0.0
    %1031 = vmatprep.subr.mxu0 0.0
    %1032 = vmatpush1.msra.mxu0 0.0
    %1033 = vmatprep.subr.mxu0 0.0
    %1034 = vmatpush1.msra.mxu0 0.0
    %1035 = vmatprep.subr.mxu0 0.0
    %1036 = vmatpush1.msra.mxu0 0.0
    %1037 = vmatprep.mubr.f32.mxu0 0.0
    %1038 = vmatmul.mubr.f32.gmra.mrb[0].mxu0 %v965
    %v1039 = vpop.f32.mrb[0].mxu0
    %v1040 = vadd.f32 %v956, %v1039
    %v1041 = vpop.f32.mrb[0].mxu0
    %1042 = vmatprep.mubr.f32.mxu0 0.0
    %1043 = vmatmul.mubr.f32.gmra.mrb[0].mxu0 %v968
    %v1044 = vpop.f32.mrb[0].mxu0
    %v1045 = vadd.f32 %v961, %v1044
    %v1046 = vpop.f32.mrb[0].mxu0
    %1047 = vdwg.mxu0
    %v1048 = vld [vmem:[%s14] sm:$0xff]
    %v1049 = vld [vmem:[%s14 + $0x8] sm:$0xff]
    %v1050 = vld [vmem:[%s14 + $0x10] sm:$0xff]
    %v1051 = vld [vmem:[%s14 + $0x18] sm:$0xff]
    %v1053 = vsel %vm325, %v1040, 0
    %v1056 = vsel %vm325, %v1045, 0
    %1058 = vmatprep.subr.mxu0 0.0
    %1059 = vmatpush1.msra.mxu0 %v1048
    %1060 = vmatprep.subr.mxu0 0.0
    %1061 = vmatpush1.msra.mxu0 %v1049
    %1062 = vmatprep.subr.mxu0 0.0
    %1063 = vmatpush1.msra.mxu0 %v1050
    %1064 = vmatprep.subr.mxu0 0.0
    %1065 = vmatpush1.msra.mxu0 %v1051
    %1066 = vmatprep.subr.mxu0 0.0
    %1067 = vmatpush1.msra.mxu0 0.0
    %1068 = vmatprep.subr.mxu0 0.0
    %1069 = vmatpush1.msra.mxu0 0.0
    %1070 = vmatprep.subr.mxu0 0.0
    %1071 = vmatpush1.msra.mxu0 0.0
    %1072 = vmatprep.subr.mxu0 0.0
    %1073 = vmatpush1.msra.mxu0 0.0
    %1074 = vmatprep.subr.mxu0 0.0
    %1075 = vmatpush1.msra.mxu0 0.0
    %1076 = vmatprep.subr.mxu0 0.0
    %1077 = vmatpush1.msra.mxu0 0.0
    %1078 = vmatprep.subr.mxu0 0.0
    %1079 = vmatpush1.msra.mxu0 0.0
    %1080 = vmatprep.subr.mxu0 0.0
    %1081 = vmatpush1.msra.mxu0 0.0
    %1082 = vmatprep.subr.mxu0 0.0
    %1083 = vmatpush1.msra.mxu0 0.0
    %1084 = vmatprep.subr.mxu0 0.0
    %1085 = vmatpush1.msra.mxu0 0.0
    %1086 = vmatprep.subr.mxu0 0.0
    %1087 = vmatpush1.msra.mxu0 0.0
    %1088 = vmatprep.subr.mxu0 0.0
    %1089 = vmatpush1.msra.mxu0 0.0
    %1090 = vmatprep.subr.mxu0 0.0
    %1091 = vmatpush1.msra.mxu0 0.0
    %1092 = vmatprep.subr.mxu0 0.0
    %1093 = vmatpush1.msra.mxu0 0.0
    %1094 = vmatprep.subr.mxu0 0.0
    %1095 = vmatpush1.msra.mxu0 0.0
    %1096 = vmatprep.subr.mxu0 0.0
    %1097 = vmatpush1.msra.mxu0 0.0
    %1098 = vmatprep.subr.mxu0 0.0
    %1099 = vmatpush1.msra.mxu0 0.0
    %1100 = vmatprep.subr.mxu0 0.0
    %1101 = vmatpush1.msra.mxu0 0.0
    %1102 = vmatprep.subr.mxu0 0.0
    %1103 = vmatpush1.msra.mxu0 0.0
    %1104 = vmatprep.subr.mxu0 0.0
    %1105 = vmatpush1.msra.mxu0 0.0
    %1106 = vmatprep.subr.mxu0 0.0
    %1107 = vmatpush1.msra.mxu0 0.0
    %1108 = vmatprep.subr.mxu0 0.0
    %1109 = vmatpush1.msra.mxu0 0.0
    %1110 = vmatprep.subr.mxu0 0.0
    %1111 = vmatpush1.msra.mxu0 0.0
    %1112 = vmatprep.subr.mxu0 0.0
    %1113 = vmatpush1.msra.mxu0 0.0
    %1114 = vmatprep.subr.mxu0 0.0
    %1115 = vmatpush1.msra.mxu0 0.0
    %1116 = vmatprep.subr.mxu0 0.0
    %1117 = vmatpush1.msra.mxu0 0.0
    %1118 = vmatprep.subr.mxu0 0.0
    %1119 = vmatpush1.msra.mxu0 0.0
    %1120 = vmatprep.subr.mxu0 0.0
    %1121 = vmatpush1.msra.mxu0 0.0
    %1122 = vmatprep.mubr.f32.mxu0 0.0
    %1123 = vmatmul.mubr.f32.gmra.mrb[0].mxu0 %v1053
    %v1124 = vpop.f32.mrb[0].mxu0
    %v1125 = vadd.f32 0.0, %v1124
    %v1126 = vpop.f32.mrb[0].mxu0
    %1127 = vmatprep.mubr.f32.mxu0 0.0
    %1128 = vmatmul.mubr.f32.gmra.mrb[0].mxu0 %v1056
    %v1129 = vpop.f32.mrb[0].mxu0
    %v1130 = vadd.f32 0.0, %v1129
    %v1131 = vpop.f32.mrb[0].mxu0
    %1132 = vdwg.mxu0
    %v1133 = vadd.f32 %v313, %v1125
    %v1134 = vadd.f32 %v318, %v1130
    %v1135 = vld [vmem:[#allocation10] sm:$0x1]
    %v1137 = vlaneseq
    %v1138 = vshrl.u32 %v1137, 7
    %v1139 = vsub.s32 0, %v1138
    %v1140 = vrot.slane %v1135, %v1139
    %v1142 = vadd.f32 %v1133, %v1140
    %v1143 = vadd.f32 %v1134, %v1140
    %v1144 = vld [vmem:[#allocation11] sm:$0x1]
    %v1145 = vld [vmem:[#allocation13] sm:$0x1]
    %v1146 = vsel %vm325, %v1142, 0.0
    %1147 = vadd.xlane.f32.xlu0 %v1146
    %v1148 = vpop.xlane.xlu0 %1147
    %v1149 = vsel %vm329, %v1143, 0.0
    %1150 = vadd.xlane.f32.xlu0 %v1149
    %v1151 = vpop.xlane.xlu0 %1150
    %v1152 = vmul.f32 %v1148, %v333
    %v1153 = vmul.f32 %v1151, %v333
    %v1154 = vsub.f32 %v1142, %v1152
    %v1155 = vsub.f32 %v1143, %v1153
    %v1156 = vmul.f32 %v1154, %v1154
    %v1157 = vmul.f32 %v1155, %v1155
    %v1158 = vsel %vm325, %v1156, 0.0
    %1159 = vadd.xlane.f32.xlu0 %v1158
    %v1160 = vpop.xlane.xlu0 %1159
    %v1161 = vsel %vm329, %v1157, 0.0
    %1162 = vadd.xlane.f32.xlu0 %v1161
    %v1163 = vpop.xlane.xlu0 %1162
    %v1164 = vmul.f32 %v1160, %v333
    %v1165 = vmul.f32 %v1163, %v333
    %v1166 = vadd.f32 %v1164, 1e-12
    %v1167 = vadd.f32 %v1165, 1e-12
    %v1168 = vrsqrt.pop %v1166
    %v1169 = vrsqrt.pop %v1167
    %v1170 = vmul.f32 %v1154, %v1168
    %v1171 = vmul.f32 %v1155, %v1169
    %v1173 = vlaneseq
    %v1174 = vshrl.u32 %v1173, 7
    %v1175 = vsub.s32 0, %v1174
    %v1176 = vrot.slane %v1144, %v1175
    %v1178 = vmul.f32 %v1170, %v1176
    %v1179 = vmul.f32 %v1171, %v1176
    %v1181 = vlaneseq
    %v1182 = vshrl.u32 %v1181, 7
    %v1183 = vsub.s32 0, %v1182
    %v1184 = vrot.slane %v1145, %v1183
    %v1186 = vadd.f32 %v1178, %v1184
    %v1187 = vadd.f32 %v1179, %v1184
    %v1188 = vld [vmem:[%s18] sm:$0xff]
    %v1189 = vld [vmem:[%s18 + $0x8] sm:$0xff]
    %v1190 = vld [vmem:[%s18 + $0x10] sm:$0xff]
    %v1191 = vld [vmem:[%s18 + $0x18] sm:$0xff]
    %v1192 = vld [vmem:[#allocation14] sm:$0x1]
    %v1194 = vlaneseq
    %v1195 = vshrl.u32 %v1194, 7
    %v1196 = vsub.s32 0, %v1195
    %v1197 = vrot.slane %v1192, %v1196
    %v1200 = vsel %vm325, %v1186, 0
    %v1203 = vsel %vm325, %v1187, 0
    %1205 = vmatprep.subr.mxu0 0.0
    %1206 = vmatpush1.msra.mxu0 %v1188
    %1207 = vmatprep.subr.mxu0 0.0
    %1208 = vmatpush1.msra.mxu0 %v1189
    %1209 = vmatprep.subr.mxu0 0.0
    %1210 = vmatpush1.msra.mxu0 %v1190
    %1211 = vmatprep.subr.mxu0 0.0
    %1212 = vmatpush1.msra.mxu0 %v1191
    %1213 = vmatprep.subr.mxu0 0.0
    %1214 = vmatpush1.msra.mxu0 0.0
    %1215 = vmatprep.subr.mxu0 0.0
    %1216 = vmatpush1.msra.mxu0 0.0
    %1217 = vmatprep.subr.mxu0 0.0
    %1218 = vmatpush1.msra.mxu0 0.0
    %1219 = vmatprep.subr.mxu0 0.0
    %1220 = vmatpush1.msra.mxu0 0.0
    %1221 = vmatprep.subr.mxu0 0.0
    %1222 = vmatpush1.msra.mxu0 0.0
    %1223 = vmatprep.subr.mxu0 0.0
    %1224 = vmatpush1.msra.mxu0 0.0
    %1225 = vmatprep.subr.mxu0 0.0
    %1226 = vmatpush1.msra.mxu0 0.0
    %1227 = vmatprep.subr.mxu0 0.0
    %1228 = vmatpush1.msra.mxu0 0.0
    %1229 = vmatprep.subr.mxu0 0.0
    %1230 = vmatpush1.msra.mxu0 0.0
    %1231 = vmatprep.subr.mxu0 0.0
    %1232 = vmatpush1.msra.mxu0 0.0
    %1233 = vmatprep.subr.mxu0 0.0
    %1234 = vmatpush1.msra.mxu0 0.0
    %1235 = vmatprep.subr.mxu0 0.0
    %1236 = vmatpush1.msra.mxu0 0.0
    %1237 = vmatprep.subr.mxu0 0.0
    %1238 = vmatpush1.msra.mxu0 0.0
    %1239 = vmatprep.subr.mxu0 0.0
    %1240 = vmatpush1.msra.mxu0 0.0
    %1241 = vmatprep.subr.mxu0 0.0
    %1242 = vmatpush1.msra.mxu0 0.0
    %1243 = vmatprep.subr.mxu0 0.0
    %1244 = vmatpush1.msra.mxu0 0.0
    %1245 = vmatprep.subr.mxu0 0.0
    %1246 = vmatpush1.msra.mxu0 0.0
    %1247 = vmatprep.subr.mxu0 0.0
    %1248 = vmatpush1.msra.mxu0 0.0
    %1249 = vmatprep.subr.mxu0 0.0
    %1250 = vmatpush1.msra.mxu0 0.0
    %1251 = vmatprep.subr.mxu0 0.0
    %1252 = vmatpush1.msra.mxu0 0.0
    %1253 = vmatprep.subr.mxu0 0.0
    %1254 = vmatpush1.msra.mxu0 0.0
    %1255 = vmatprep.subr.mxu0 0.0
    %1256 = vmatpush1.msra.mxu0 0.0
    %1257 = vmatprep.subr.mxu0 0.0
    %1258 = vmatpush1.msra.mxu0 0.0
    %1259 = vmatprep.subr.mxu0 0.0
    %1260 = vmatpush1.msra.mxu0 0.0
    %1261 = vmatprep.subr.mxu0 0.0
    %1262 = vmatpush1.msra.mxu0 0.0
    %1263 = vmatprep.subr.mxu0 0.0
    %1264 = vmatpush1.msra.mxu0 0.0
    %1265 = vmatprep.subr.mxu0 0.0
    %1266 = vmatpush1.msra.mxu0 0.0
    %1267 = vmatprep.subr.mxu0 0.0
    %1268 = vmatpush1.msra.mxu0 0.0
    %1269 = vmatprep.mubr.f32.mxu0 0.0
    %1270 = vmatmul.mubr.f32.gmra.mrb[0].mxu0 %v1200
    %v1271 = vpop.f32.mrb[0].mxu0
    %v1272 = vadd.f32 %v1197, %v1271
    %v1273 = vpop.f32.mrb[0].mxu0
    %1274 = vmatprep.mubr.f32.mxu0 0.0
    %1275 = vmatmul.mubr.f32.gmra.mrb[0].mxu0 %v1203
    %v1276 = vpop.f32.mrb[0].mxu0
    %v1277 = vadd.f32 %v1197, %v1276
    %v1278 = vpop.f32.mrb[0].mxu0
    %1279 = vdwg.mxu0
    %v1280 = vmul.f32 %v1272, %v1272
    %v1281 = vmul.f32 %v1277, %v1277
    %v1282 = vmul.f32 %v1272, %v1280
    %v1283 = vmul.f32 %v1277, %v1281
    %v1284 = vmul.f32 %v1282, 0.044715
    %v1285 = vmul.f32 %v1283, 0.044715
    %v1286 = vadd.f32 %v1272, %v1284
    %v1287 = vadd.f32 %v1277, %v1285
    %v1288 = vmul.f32 %v1286, 0.7978846
    %v1289 = vmul.f32 %v1287, 0.7978846
    %v1290 = vtanh.pop %v1288
    %v1291 = vtanh.pop %v1289
    %v1292 = vadd.f32 %v1290, 1.0
    %v1293 = vadd.f32 %v1291, 1.0
    %v1294 = vmul.f32 %v1292, 0.5
    %v1295 = vmul.f32 %v1293, 0.5
    %v1296 = vmul.f32 %v1272, %v1294
    %v1297 = vmul.f32 %v1277, %v1295
    %v1298 = vld [vmem:[%s20] sm:$0xff]
    %v1299 = vld [vmem:[%s20 + $0x8] sm:$0xff]
    %v1300 = vld [vmem:[%s20 + $0x10] sm:$0xff]
    %v1301 = vld [vmem:[%s20 + $0x18] sm:$0xff]
    %v1302 = vld [vmem:[%s20 + $0x20] sm:$0xff]
    %v1303 = vld [vmem:[%s20 + $0x28] sm:$0xff]
    %v1304 = vld [vmem:[%s20 + $0x30] sm:$0xff]
    %v1305 = vld [vmem:[%s20 + $0x38] sm:$0xff]
    %v1307 = vsel %vm239, %v1296, 0
    %v1310 = vsel %vm239, %v1297, 0
    %1312 = vmatprep.subr.mxu0 0.0
    %1313 = vmatpush1.msra.mxu0 %v1298
    %1314 = vmatprep.subr.mxu0 0.0
    %1315 = vmatpush1.msra.mxu0 %v1299
    %1316 = vmatprep.subr.mxu0 0.0
    %1317 = vmatpush1.msra.mxu0 %v1300
    %1318 = vmatprep.subr.mxu0 0.0
    %1319 = vmatpush1.msra.mxu0 %v1301
    %1320 = vmatprep.subr.mxu0 0.0
    %1321 = vmatpush1.msra.mxu0 %v1302
    %1322 = vmatprep.subr.mxu0 0.0
    %1323 = vmatpush1.msra.mxu0 %v1303
    %1324 = vmatprep.subr.mxu0 0.0
    %1325 = vmatpush1.msra.mxu0 %v1304
    %1326 = vmatprep.subr.mxu0 0.0
    %1327 = vmatpush1.msra.mxu0 %v1305
    %1328 = vmatprep.subr.mxu0 0.0
    %1329 = vmatpush1.msra.mxu0 0.0
    %1330 = vmatprep.subr.mxu0 0.0
    %1331 = vmatpush1.msra.mxu0 0.0
    %1332 = vmatprep.subr.mxu0 0.0
    %1333 = vmatpush1.msra.mxu0 0.0
    %1334 = vmatprep.subr.mxu0 0.0
    %1335 = vmatpush1.msra.mxu0 0.0
    %1336 = vmatprep.subr.mxu0 0.0
    %1337 = vmatpush1.msra.mxu0 0.0
    %1338 = vmatprep.subr.mxu0 0.0
    %1339 = vmatpush1.msra.mxu0 0.0
    %1340 = vmatprep.subr.mxu0 0.0
    %1341 = vmatpush1.msra.mxu0 0.0
    %1342 = vmatprep.subr.mxu0 0.0
    %1343 = vmatpush1.msra.mxu0 0.0
    %1344 = vmatprep.subr.mxu0 0.0
    %1345 = vmatpush1.msra.mxu0 0.0
    %1346 = vmatprep.subr.mxu0 0.0
    %1347 = vmatpush1.msra.mxu0 0.0
    %1348 = vmatprep.subr.mxu0 0.0
    %1349 = vmatpush1.msra.mxu0 0.0
    %1350 = vmatprep.subr.mxu0 0.0
    %1351 = vmatpush1.msra.mxu0 0.0
    %1352 = vmatprep.subr.mxu0 0.0
    %1353 = vmatpush1.msra.mxu0 0.0
    %1354 = vmatprep.subr.mxu0 0.0
    %1355 = vmatpush1.msra.mxu0 0.0
    %1356 = vmatprep.subr.mxu0 0.0
    %1357 = vmatpush1.msra.mxu0 0.0
    %1358 = vmatprep.subr.mxu0 0.0
    %1359 = vmatpush1.msra.mxu0 0.0
    %1360 = vmatprep.subr.mxu0 0.0
    %1361 = vmatpush1.msra.mxu0 0.0
    %1362 = vmatprep.subr.mxu0 0.0
    %1363 = vmatpush1.msra.mxu0 0.0
    %1364 = vmatprep.subr.mxu0 0.0
    %1365 = vmatpush1.msra.mxu0 0.0
    %1366 = vmatprep.subr.mxu0 0.0
    %1367 = vmatpush1.msra.mxu0 0.0
    %1368 = vmatprep.subr.mxu0 0.0
    %1369 = vmatpush1.msra.mxu0 0.0
    %1370 = vmatprep.subr.mxu0 0.0
    %1371 = vmatpush1.msra.mxu0 0.0
    %1372 = vmatprep.subr.mxu0 0.0
    %1373 = vmatpush1.msra.mxu0 0.0
    %1374 = vmatprep.subr.mxu0 0.0
    %1375 = vmatpush1.msra.mxu0 0.0
    %1376 = vmatprep.mubr.f32.mxu0 0.0
    %1377 = vmatmul.mubr.f32.gmra.mrb[0].mxu0 %v1307
    %v1378 = vpop.f32.mrb[0].mxu0
    %v1379 = vadd.f32 0.0, %v1378
    %v1380 = vpop.f32.mrb[0].mxu0
    %1381 = vmatprep.mubr.f32.mxu0 0.0
    %1382 = vmatmul.mubr.f32.gmra.mrb[0].mxu0 %v1310
    %v1383 = vpop.f32.mrb[0].mxu0
    %v1384 = vadd.f32 0.0, %v1383
    %v1385 = vpop.f32.mrb[0].mxu0
    %1386 = vdwg.mxu0
    %v1387 = vadd.f32 %v1142, %v1379
    %v1388 = vadd.f32 %v1143, %v1384
    %v1389 = vld [vmem:[#allocation16] sm:$0x1]
    %v1391 = vlaneseq
    %v1392 = vshrl.u32 %v1391, 7
    %v1393 = vsub.s32 0, %v1392
    %v1394 = vrot.slane %v1389, %v1393
    %v1396 = vadd.f32 %v1387, %v1394
    %v1397 = vadd.f32 %v1388, %v1394
    %s1398 = scalar_lea.vmem %s6, 1
    %v1399 = vld [vmem:[%s1398] sm:$0x1]
    %s1400 = scalar_lea.vmem %s7, 1
    %v1401 = vld [vmem:[%s1400] sm:$0x1]
    %v1402 = vsel %vm325, %v1396, 0.0
    %1403 = vadd.xlane.f32.xlu0 %v1402
    %v1404 = vpop.xlane.xlu0 %1403
    %v1405 = vsel %vm329, %v1397, 0.0
    %1406 = vadd.xlane.f32.xlu0 %v1405
    %v1407 = vpop.xlane.xlu0 %1406
    %v1408 = vmul.f32 %v1404, %v333
    %v1409 = vmul.f32 %v1407, %v333
    %v1410 = vsub.f32 %v1396, %v1408
    %v1411 = vsub.f32 %v1397, %v1409
    %v1412 = vmul.f32 %v1410, %v1410
    %v1413 = vmul.f32 %v1411, %v1411
    %v1414 = vsel %vm325, %v1412, 0.0
    %1415 = vadd.xlane.f32.xlu0 %v1414
    %v1416 = vpop.xlane.xlu0 %1415
    %v1417 = vsel %vm329, %v1413, 0.0
    %1418 = vadd.xlane.f32.xlu0 %v1417
    %v1419 = vpop.xlane.xlu0 %1418
    %v1420 = vmul.f32 %v1416, %v333
    %v1421 = vmul.f32 %v1419, %v333
    %v1422 = vadd.f32 %v1420, 1e-12
    %v1423 = vadd.f32 %v1421, 1e-12
    %v1424 = vrsqrt.pop %v1422
    %v1425 = vrsqrt.pop %v1423
    %v1426 = vmul.f32 %v1410, %v1424
    %v1427 = vmul.f32 %v1411, %v1425
    %v1429 = vlaneseq
    %v1430 = vshrl.u32 %v1429, 7
    %v1431 = vsub.s32 0, %v1430
    %v1432 = vrot.slane %v1399, %v1431
    %v1434 = vmul.f32 %v1426, %v1432
    %v1435 = vmul.f32 %v1427, %v1432
    %v1437 = vlaneseq
    %v1438 = vshrl.u32 %v1437, 7
    %v1439 = vsub.s32 0, %v1438
    %v1440 = vrot.slane %v1401, %v1439
    %v1442 = vadd.f32 %v1434, %v1440
    %v1443 = vadd.f32 %v1435, %v1440
    %s1444 = scalar_lea.vmem %s8, 32
    %v1445 = vld [vmem:[%s1444] sm:$0xff]
    %v1446 = vld [vmem:[%s1444 + $0x8] sm:$0xff]
    %v1447 = vld [vmem:[%s1444 + $0x10] sm:$0xff]
    %v1448 = vld [vmem:[%s1444 + $0x18] sm:$0xff]
    %s1449 = scalar_lea.vmem %s9, 1
    %v1450 = vld [vmem:[%s1449] sm:$0x1]
    %v1452 = vlaneseq
    %v1453 = vshrl.u32 %v1452, 7
    %v1454 = vsub.s32 0, %v1453
    %v1455 = vrot.slane %v1450, %v1454
    %v1458 = vsel %vm325, %v1442, 0
    %v1461 = vsel %vm325, %v1443, 0
    %1463 = vmatprep.subr.mxu0 0.0
    %1464 = vmatpush1.msra.mxu0 %v1445
    %1465 = vmatprep.subr.mxu0 0.0
    %1466 = vmatpush1.msra.mxu0 %v1446
    %1467 = vmatprep.subr.mxu0 0.0
    %1468 = vmatpush1.msra.mxu0 %v1447
    %1469 = vmatprep.subr.mxu0 0.0
    %1470 = vmatpush1.msra.mxu0 %v1448
    %1471 = vmatprep.subr.mxu0 0.0
    %1472 = vmatpush1.msra.mxu0 0.0
    %1473 = vmatprep.subr.mxu0 0.0
    %1474 = vmatpush1.msra.mxu0 0.0
    %1475 = vmatprep.subr.mxu0 0.0
    %1476 = vmatpush1.msra.mxu0 0.0
    %1477 = vmatprep.subr.mxu0 0.0
    %1478 = vmatpush1.msra.mxu0 0.0
    %1479 = vmatprep.subr.mxu0 0.0
    %1480 = vmatpush1.msra.mxu0 0.0
    %1481 = vmatprep.subr.mxu0 0.0
    %1482 = vmatpush1.msra.mxu0 0.0
    %1483 = vmatprep.subr.mxu0 0.0
    %1484 = vmatpush1.msra.mxu0 0.0
    %1485 = vmatprep.subr.mxu0 0.0
    %1486 = vmatpush1.msra.mxu0 0.0
    %1487 = vmatprep.subr.mxu0 0.0
    %1488 = vmatpush1.msra.mxu0 0.0
    %1489 = vmatprep.subr.mxu0 0.0
    %1490 = vmatpush1.msra.mxu0 0.0
    %1491 = vmatprep.subr.mxu0 0.0
    %1492 = vmatpush1.msra.mxu0 0.0
    %1493 = vmatprep.subr.mxu0 0.0
    %1494 = vmatpush1.msra.mxu0 0.0
    %1495 = vmatprep.subr.mxu0 0.0
    %1496 = vmatpush1.msra.mxu0 0.0
    %1497 = vmatprep.subr.mxu0 0.0
    %1498 = vmatpush1.msra.mxu0 0.0
    %1499 = vmatprep.subr.mxu0 0.0
    %1500 = vmatpush1.msra.mxu0 0.0
    %1501 = vmatprep.subr.mxu0 0.0
    %1502 = vmatpush1.msra.mxu0 0.0
    %1503 = vmatprep.subr.mxu0 0.0
    %1504 = vmatpush1.msra.mxu0 0.0
    %1505 = vmatprep.subr.mxu0 0.0
    %1506 = vmatpush1.msra.mxu0 0.0
    %1507 = vmatprep.subr.mxu0 0.0
    %1508 = vmatpush1.msra.mxu0 0.0
    %1509 = vmatprep.subr.mxu0 0.0
    %1510 = vmatpush1.msra.mxu0 0.0
    %1511 = vmatprep.subr.mxu0 0.0
    %1512 = vmatpush1.msra.mxu0 0.0
    %1513 = vmatprep.subr.mxu0 0.0
    %1514 = vmatpush1.msra.mxu0 0.0
    %1515 = vmatprep.subr.mxu0 0.0
    %1516 = vmatpush1.msra.mxu0 0.0
    %1517 = vmatprep.subr.mxu0 0.0
    %1518 = vmatpush1.msra.mxu0 0.0
    %1519 = vmatprep.subr.mxu0 0.0
    %1520 = vmatpush1.msra.mxu0 0.0
    %1521 = vmatprep.subr.mxu0 0.0
    %1522 = vmatpush1.msra.mxu0 0.0
    %1523 = vmatprep.subr.mxu0 0.0
    %1524 = vmatpush1.msra.mxu0 0.0
    %1525 = vmatprep.subr.mxu0 0.0
    %1526 = vmatpush1.msra.mxu0 0.0
    %1527 = vmatprep.mubr.f32.mxu0 0.0
    %1528 = vmatmul.mubr.f32.gmra.mrb[0].mxu0 %v1458
    %v1529 = vpop.f32.mrb[0].mxu0
    %v1530 = vadd.f32 %v1455, %v1529
    %v1531 = vpop.f32.mrb[0].mxu0
    %1532 = vmatprep.mubr.f32.mxu0 0.0
    %1533 = vmatmul.mubr.f32.gmra.mrb[0].mxu0 %v1461
    %v1534 = vpop.f32.mrb[0].mxu0
    %v1535 = vadd.f32 %v1455, %v1534
    %v1536 = vpop.f32.mrb[0].mxu0
    %1537 = vdwg.mxu0
    %s1538 = scalar_lea.vmem %s10, 32
    %v1539 = vld [vmem:[%s1538] sm:$0xff]
    %v1540 = vld [vmem:[%s1538 + $0x8] sm:$0xff]
    %v1541 = vld [vmem:[%s1538 + $0x10] sm:$0xff]
    %v1542 = vld [vmem:[%s1538 + $0x18] sm:$0xff]
    %s1543 = scalar_lea.vmem [#allocation7], 1
    %v1544 = vld [vmem:[%s1543] sm:$0x1]
    %v1546 = vlaneseq
    %v1547 = vshrl.u32 %v1546, 7
    %v1548 = vsub.s32 0, %v1547
    %v1549 = vrot.slane %v1544, %v1548
    %1551 = vmatprep.subr.mxu0 0.0
    %1552 = vmatpush1.msra.mxu0 %v1539
    %1553 = vmatprep.subr.mxu0 0.0
    %1554 = vmatpush1.msra.mxu0 %v1540
    %1555 = vmatprep.subr.mxu0 0.0
    %1556 = vmatpush1.msra.mxu0 %v1541
    %1557 = vmatprep.subr.mxu0 0.0
    %1558 = vmatpush1.msra.mxu0 %v1542
    %1559 = vmatprep.subr.mxu0 0.0
    %1560 = vmatpush1.msra.mxu0 0.0
    %1561 = vmatprep.subr.mxu0 0.0
    %1562 = vmatpush1.msra.mxu0 0.0
    %1563 = vmatprep.subr.mxu0 0.0
    %1564 = vmatpush1.msra.mxu0 0.0
    %1565 = vmatprep.subr.mxu0 0.0
    %1566 = vmatpush1.msra.mxu0 0.0
    %1567 = vmatprep.subr.mxu0 0.0
    %1568 = vmatpush1.msra.mxu0 0.0
    %1569 = vmatprep.subr.mxu0 0.0
    %1570 = vmatpush1.msra.mxu0 0.0
    %1571 = vmatprep.subr.mxu0 0.0
    %1572 = vmatpush1.msra.mxu0 0.0
    %1573 = vmatprep.subr.mxu0 0.0
    %1574 = vmatpush1.msra.mxu0 0.0
    %1575 = vmatprep.subr.mxu0 0.0
    %1576 = vmatpush1.msra.mxu0 0.0
    %1577 = vmatprep.subr.mxu0 0.0
    %1578 = vmatpush1.msra.mxu0 0.0
    %1579 = vmatprep.subr.mxu0 0.0
    %1580 = vmatpush1.msra.mxu0 0.0
    %1581 = vmatprep.subr.mxu0 0.0
    %1582 = vmatpush1.msra.mxu0 0.0
    %1583 = vmatprep.subr.mxu0 0.0
    %1584 = vmatpush1.msra.mxu0 0.0
    %1585 = vmatprep.subr.mxu0 0.0
    %1586 = vmatpush1.msra.mxu0 0.0
    %1587 = vmatprep.subr.mxu0 0.0
    %1588 = vmatpush1.msra.mxu0 0.0
    %1589 = vmatprep.subr.mxu0 0.0
    %1590 = vmatpush1.msra.mxu0 0.0
    %1591 = vmatprep.subr.mxu0 0.0
    %1592 = vmatpush1.msra.mxu0 0.0
    %1593 = vmatprep.subr.mxu0 0.0
    %1594 = vmatpush1.msra.mxu0 0.0
    %1595 = vmatprep.subr.mxu0 0.0
    %1596 = vmatpush1.msra.mxu0 0.0
    %1597 = vmatprep.subr.mxu0 0.0
    %1598 = vmatpush1.msra.mxu0 0.0
    %1599 = vmatprep.subr.mxu0 0.0
    %1600 = vmatpush1.msra.mxu0 0.0
    %1601 = vmatprep.subr.mxu0 0.0
    %1602 = vmatpush1.msra.mxu0 0.0
    %1603 = vmatprep.subr.mxu0 0.0
    %1604 = vmatpush1.msra.mxu0 0.0
    %1605 = vmatprep.subr.mxu0 0.0
    %1606 = vmatpush1.msra.mxu0 0.0
    %1607 = vmatprep.subr.mxu0 0.0
    %1608 = vmatpush1.msra.mxu0 0.0
    %1609 = vmatprep.subr.mxu0 0.0
    %1610 = vmatpush1.msra.mxu0 0.0
    %1611 = vmatprep.subr.mxu0 0.0
    %1612 = vmatpush1.msra.mxu0 0.0
    %1613 = vmatprep.subr.mxu0 0.0
    %1614 = vmatpush1.msra.mxu0 0.0
    %1615 = vmatprep.mubr.f32.mxu0 0.0
    %1616 = vmatmul.mubr.f32.gmra.mrb[0].mxu0 %v1458
    %v1617 = vpop.f32.mrb[0].mxu0
    %v1618 = vadd.f32 %v1549, %v1617
    %v1619 = vpop.f32.mrb[0].mxu0
    %1620 = vmatprep.mubr.f32.mxu0 0.0
    %1621 = vmatmul.mubr.f32.gmra.mrb[0].mxu0 %v1461
    %v1622 = vpop.f32.mrb[0].mxu0
    %v1623 = vadd.f32 %v1549, %v1622
    %v1624 = vpop.f32.mrb[0].mxu0
    %1625 = vdwg.mxu0
    %s1626 = scalar_lea.vmem %s12, 32
    %v1627 = vld [vmem:[%s1626] sm:$0xff]
    %v1628 = vld [vmem:[%s1626 + $0x8] sm:$0xff]
    %v1629 = vld [vmem:[%s1626 + $0x10] sm:$0xff]
    %v1630 = vld [vmem:[%s1626 + $0x18] sm:$0xff]
    %s1631 = scalar_lea.vmem [#allocation8], 1
    %v1632 = vld [vmem:[%s1631] sm:$0x1]
    %v1634 = vlaneseq
    %v1635 = vshrl.u32 %v1634, 7
    %v1636 = vsub.s32 0, %v1635
    %v1637 = vrot.slane %v1632, %v1636
    %1639 = vmatprep.subr.mxu0 0.0
    %1640 = vmatpush1.msra.mxu0 %v1627
    %1641 = vmatprep.subr.mxu0 0.0
    %1642 = vmatpush1.msra.mxu0 %v1628
    %1643 = vmatprep.subr.mxu0 0.0
    %1644 = vmatpush1.msra.mxu0 %v1629
    %1645 = vmatprep.subr.mxu0 0.0
    %1646 = vmatpush1.msra.mxu0 %v1630
    %1647 = vmatprep.subr.mxu0 0.0
    %1648 = vmatpush1.msra.mxu0 0.0
    %1649 = vmatprep.subr.mxu0 0.0
    %1650 = vmatpush1.msra.mxu0 0.0
    %1651 = vmatprep.subr.mxu0 0.0
    %1652 = vmatpush1.msra.mxu0 0.0
    %1653 = vmatprep.subr.mxu0 0.0
    %1654 = vmatpush1.msra.mxu0 0.0
    %1655 = vmatprep.subr.mxu0 0.0
    %1656 = vmatpush1.msra.mxu0 0.0
    %1657 = vmatprep.subr.mxu0 0.0
    %1658 = vmatpush1.msra.mxu0 0.0
    %1659 = vmatprep.subr.mxu0 0.0
    %1660 = vmatpush1.msra.mxu0 0.0
    %1661 = vmatprep.subr.mxu0 0.0
    %1662 = vmatpush1.msra.mxu0 0.0
    %1663 = vmatprep.subr.mxu0 0.0
    %1664 = vmatpush1.msra.mxu0 0.0
    %1665 = vmatprep.subr.mxu0 0.0
    %1666 = vmatpush1.msra.mxu0 0.0
    %1667 = vmatprep.subr.mxu0 0.0
    %1668 = vmatpush1.msra.mxu0 0.0
    %1669 = vmatprep.subr.mxu0 0.0
    %1670 = vmatpush1.msra.mxu0 0.0
    %1671 = vmatprep.subr.mxu0 0.0
    %1672 = vmatpush1.msra.mxu0 0.0
    %1673 = vmatprep.subr.mxu0 0.0
    %1674 = vmatpush1.msra.mxu0 0.0
    %1675 = vmatprep.subr.mxu0 0.0
    %1676 = vmatpush1.msra.mxu0 0.0
    %1677 = vmatprep.subr.mxu0 0.0
    %1678 = vmatpush1.msra.mxu0 0.0
    %1679 = vmatprep.subr.mxu0 0.0
    %1680 = vmatpush1.msra.mxu0 0.0
    %1681 = vmatprep.subr.mxu0 0.0
    %1682 = vmatpush1.msra.mxu0 0.0
    %1683 = vmatprep.subr.mxu0 0.0
    %1684 = vmatpush1.msra.mxu0 0.0
    %1685 = vmatprep.subr.mxu0 0.0
    %1686 = vmatpush1.msra.mxu0 0.0
    %1687 = vmatprep.subr.mxu0 0.0
    %1688 = vmatpush1.msra.mxu0 0.0
    %1689 = vmatprep.subr.mxu0 0.0
    %1690 = vmatpush1.msra.mxu0 0.0
    %1691 = vmatprep.subr.mxu0 0.0
    %1692 = vmatpush1.msra.mxu0 0.0
    %1693 = vmatprep.subr.mxu0 0.0
    %1694 = vmatpush1.msra.mxu0 0.0
    %1695 = vmatprep.subr.mxu0 0.0
    %1696 = vmatpush1.msra.mxu0 0.0
    %1697 = vmatprep.subr.mxu0 0.0
    %1698 = vmatpush1.msra.mxu0 0.0
    %1699 = vmatprep.subr.mxu0 0.0
    %1700 = vmatpush1.msra.mxu0 0.0
    %1701 = vmatprep.subr.mxu0 0.0
    %1702 = vmatpush1.msra.mxu0 0.0
    %1703 = vmatprep.mubr.f32.mxu0 0.0
    %1704 = vmatmul.mubr.f32.gmra.mrb[0].mxu0 %v1458
    %v1705 = vpop.f32.mrb[0].mxu0
    %v1706 = vadd.f32 %v1637, %v1705
    %v1707 = vpop.f32.mrb[0].mxu0
    %1708 = vmatprep.mubr.f32.mxu0 0.0
    %1709 = vmatmul.mubr.f32.gmra.mrb[0].mxu0 %v1461
    %v1710 = vpop.f32.mrb[0].mxu0
    %v1711 = vadd.f32 %v1637, %v1710
    %v1712 = vpop.f32.mrb[0].mxu0
    %1713 = vdwg.mxu0
    %v1714 = vmul.f32 %v1618, %v639
    %v1715 = vmul.f32 %v1623, %v639
    %v1717 = vsel %vm325, %v1530, 0
    %v1720 = vsel %vm325, %v1535, 0
    %v1723 = vsel %vm325, %v1714, 0
    %v1726 = vsel %vm325, %v1715, 0
    %1728 = vmatprep.subr.mxu0 0.0
    %1729 = vmatpush1.xpose.msra.mxu0 %v1723
    %1730 = vmatprep.subr.mxu0 0.0
    %1731 = vmatpush1.xpose.msra.mxu0 %v1726
    %1732 = vmatprep.subr.mxu0 0.0
    %1733 = vmatpush1.xpose.msra.mxu0 0.0
    %1734 = vmatprep.subr.mxu0 0.0
    %1735 = vmatpush1.xpose.msra.mxu0 0.0
    %1736 = vmatprep.subr.mxu0 0.0
    %1737 = vmatpush1.xpose.msra.mxu0 0.0
    %1738 = vmatprep.subr.mxu0 0.0
    %1739 = vmatpush1.xpose.msra.mxu0 0.0
    %1740 = vmatprep.subr.mxu0 0.0
    %1741 = vmatpush1.xpose.msra.mxu0 0.0
    %1742 = vmatprep.subr.mxu0 0.0
    %1743 = vmatpush1.xpose.msra.mxu0 0.0
    %1744 = vmatprep.subr.mxu0 0.0
    %1745 = vmatpush1.xpose.msra.mxu0 0.0
    %1746 = vmatprep.subr.mxu0 0.0
    %1747 = vmatpush1.xpose.msra.mxu0 0.0
    %1748 = vmatprep.subr.mxu0 0.0
    %1749 = vmatpush1.xpose.msra.mxu0 0.0
    %1750 = vmatprep.subr.mxu0 0.0
    %1751 = vmatpush1.xpose.msra.mxu0 0.0
    %1752 = vmatprep.subr.mxu0 0.0
    %1753 = vmatpush1.xpose.msra.mxu0 0.0
    %1754 = vmatprep.subr.mxu0 0.0
    %1755 = vmatpush1.xpose.msra.mxu0 0.0
    %1756 = vmatprep.subr.mxu0 0.0
    %1757 = vmatpush1.xpose.msra.mxu0 0.0
    %1758 = vmatprep.subr.mxu0 0.0
    %1759 = vmatpush1.xpose.msra.mxu0 0.0
    %1760 = vmatprep.subr.mxu0 0.0
    %1761 = vmatpush1.xpose.msra.mxu0 0.0
    %1762 = vmatprep.subr.mxu0 0.0
    %1763 = vmatpush1.xpose.msra.mxu0 0.0
    %1764 = vmatprep.subr.mxu0 0.0
    %1765 = vmatpush1.xpose.msra.mxu0 0.0
    %1766 = vmatprep.subr.mxu0 0.0
    %1767 = vmatpush1.xpose.msra.mxu0 0.0
    %1768 = vmatprep.subr.mxu0 0.0
    %1769 = vmatpush1.xpose.msra.mxu0 0.0
    %1770 = vmatprep.subr.mxu0 0.0
    %1771 = vmatpush1.xpose.msra.mxu0 0.0
    %1772 = vmatprep.subr.mxu0 0.0
    %1773 = vmatpush1.xpose.msra.mxu0 0.0
    %1774 = vmatprep.subr.mxu0 0.0
    %1775 = vmatpush1.xpose.msra.mxu0 0.0
    %1776 = vmatprep.subr.mxu0 0.0
    %1777 = vmatpush1.xpose.msra.mxu0 0.0
    %1778 = vmatprep.subr.mxu0 0.0
    %1779 = vmatpush1.xpose.msra.mxu0 0.0
    %1780 = vmatprep.subr.mxu0 0.0
    %1781 = vmatpush1.xpose.msra.mxu0 0.0
    %1782 = vmatprep.subr.mxu0 0.0
    %1783 = vmatpush1.xpose.msra.mxu0 0.0
    %1784 = vmatprep.subr.mxu0 0.0
    %1785 = vmatpush1.xpose.msra.mxu0 0.0
    %1786 = vmatprep.subr.mxu0 0.0
    %1787 = vmatpush1.xpose.msra.mxu0 0.0
    %1788 = vmatprep.subr.mxu0 0.0
    %1789 = vmatpush1.xpose.msra.mxu0 0.0
    %1790 = vmatprep.subr.mxu0 0.0
    %1791 = vmatpush1.xpose.msra.mxu0 0.0
    %1792 = vmatprep.mubr.f32.mxu0 0.0
    %1793 = vmatmul.mubr.f32.gmra.mrb[0].mxu0 %v1717
    %v1794 = vpop.f32.mrb[0].mxu0
    %v1795 = vadd.f32 0.0, %v1794
    %v1796 = vpop.f32.mrb[0].mxu0
    %1797 = vmatprep.mubr.f32.mxu0 0.0
    %1798 = vmatmul.mubr.f32.gmra.mrb[0].mxu0 %v1720
    %v1799 = vpop.f32.mrb[0].mxu0
    %v1800 = vadd.f32 0.0, %v1799
    %v1801 = vpop.f32.mrb[0].mxu0
    %1802 = vdwg.mxu0
    %v1803 = vmul.f32 %v1795, 0.25
    %v1804 = vmul.f32 %v1800, 0.25
    %v1805 = vadd.f32 %v1803, %v321
    %v1806 = vadd.f32 %v1804, %v322
    %v1807 = vsel %vm734, %v1805, -inf
    %1808 = vmax.xlane.f32.xlu0 %v1807
    %v1809 = vpop.xlane.xlu0 %1808
    %v1810 = vsel %vm738, %v1806, -inf
    %1811 = vmax.xlane.f32.xlu0 %v1810
    %v1812 = vpop.xlane.xlu0 %1811
    %v1813 = vsub.f32 %v1805, %v1809
    %v1814 = vsub.f32 %v1806, %v1812
    %v1815 = vmul.f32 %v1813, 1.442695
    %v1816 = vpow.pop %v1815
    %v1817 = vmul.f32 %v1814, 1.442695
    %v1818 = vpow.pop %v1817
    %v1819 = vsel %vm734, %v1816, 0.0
    %1820 = vadd.xlane.f32.xlu0 %v1819
    %v1821 = vpop.xlane.xlu0 %1820
    %v1822 = vsel %vm738, %v1818, 0.0
    %1823 = vadd.xlane.f32.xlu0 %v1822
    %v1824 = vpop.xlane.xlu0 %1823
    %v1825 = vrcp.pop %v1821
    %v1826 = vrcp.pop %v1824
    %v1827 = vmul.f32 %v1816, %v1825
    %v1828 = vmul.f32 %v1818, %v1826
    %v1829 = vmul.f32 %v1706, %v639
    %v1830 = vmul.f32 %v1711, %v639
    %v1831 = vmul.f32 %v1618, %v766
    %v1832 = vmul.f32 %v1623, %v766
    %v1834 = vsel %vm325, %v1831, 0
    %v1837 = vsel %vm325, %v1832, 0
    %1839 = vmatprep.subr.mxu0 0.0
    %1840 = vmatpush1.xpose.msra.mxu0 %v1834
    %1841 = vmatprep.subr.mxu0 0.0
    %1842 = vmatpush1.xpose.msra.mxu0 %v1837
    %1843 = vmatprep.subr.mxu0 0.0
    %1844 = vmatpush1.xpose.msra.mxu0 0.0
    %1845 = vmatprep.subr.mxu0 0.0
    %1846 = vmatpush1.xpose.msra.mxu0 0.0
    %1847 = vmatprep.subr.mxu0 0.0
    %1848 = vmatpush1.xpose.msra.mxu0 0.0
    %1849 = vmatprep.subr.mxu0 0.0
    %1850 = vmatpush1.xpose.msra.mxu0 0.0
    %1851 = vmatprep.subr.mxu0 0.0
    %1852 = vmatpush1.xpose.msra.mxu0 0.0
    %1853 = vmatprep.subr.mxu0 0.0
    %1854 = vmatpush1.xpose.msra.mxu0 0.0
    %1855 = vmatprep.subr.mxu0 0.0
    %1856 = vmatpush1.xpose.msra.mxu0 0.0
    %1857 = vmatprep.subr.mxu0 0.0
    %1858 = vmatpush1.xpose.msra.mxu0 0.0
    %1859 = vmatprep.subr.mxu0 0.0
    %1860 = vmatpush1.xpose.msra.mxu0 0.0
    %1861 = vmatprep.subr.mxu0 0.0
    %1862 = vmatpush1.xpose.msra.mxu0 0.0
    %1863 = vmatprep.subr.mxu0 0.0
    %1864 = vmatpush1.xpose.msra.mxu0 0.0
    %1865 = vmatprep.subr.mxu0 0.0
    %1866 = vmatpush1.xpose.msra.mxu0 0.0
    %1867 = vmatprep.subr.mxu0 0.0
    %1868 = vmatpush1.xpose.msra.mxu0 0.0
    %1869 = vmatprep.subr.mxu0 0.0
    %1870 = vmatpush1.xpose.msra.mxu0 0.0
    %1871 = vmatprep.subr.mxu0 0.0
    %1872 = vmatpush1.xpose.msra.mxu0 0.0
    %1873 = vmatprep.subr.mxu0 0.0
    %1874 = vmatpush1.xpose.msra.mxu0 0.0
    %1875 = vmatprep.subr.mxu0 0.0
    %1876 = vmatpush1.xpose.msra.mxu0 0.0
    %1877 = vmatprep.subr.mxu0 0.0
    %1878 = vmatpush1.xpose.msra.mxu0 0.0
    %1879 = vmatprep.subr.mxu0 0.0
    %1880 = vmatpush1.xpose.msra.mxu0 0.0
    %1881 = vmatprep.subr.mxu0 0.0
    %1882 = vmatpush1.xpose.msra.mxu0 0.0
    %1883 = vmatprep.subr.mxu0 0.0
    %1884 = vmatpush1.xpose.msra.mxu0 0.0
    %1885 = vmatprep.subr.mxu0 0.0
    %1886 = vmatpush1.xpose.msra.mxu0 0.0
    %1887 = vmatprep.subr.mxu0 0.0
    %1888 = vmatpush1.xpose.msra.mxu0 0.0
    %1889 = vmatprep.subr.mxu0 0.0
    %1890 = vmatpush1.xpose.msra.mxu0 0.0
    %1891 = vmatprep.subr.mxu0 0.0
    %1892 = vmatpush1.xpose.msra.mxu0 0.0
    %1893 = vmatprep.subr.mxu0 0.0
    %1894 = vmatpush1.xpose.msra.mxu0 0.0
    %1895 = vmatprep.subr.mxu0 0.0
    %1896 = vmatpush1.xpose.msra.mxu0 0.0
    %1897 = vmatprep.subr.mxu0 0.0
    %1898 = vmatpush1.xpose.msra.mxu0 0.0
    %1899 = vmatprep.subr.mxu0 0.0
    %1900 = vmatpush1.xpose.msra.mxu0 0.0
    %1901 = vmatprep.subr.mxu0 0.0
    %1902 = vmatpush1.xpose.msra.mxu0 0.0
    %1903 = vmatprep.mubr.f32.mxu0 0.0
    %1904 = vmatmul.mubr.f32.gmra.mrb[0].mxu0 %v1717
    %v1905 = vpop.f32.mrb[0].mxu0
    %v1906 = vadd.f32 0.0, %v1905
    %v1907 = vpop.f32.mrb[0].mxu0
    %1908 = vmatprep.mubr.f32.mxu0 0.0
    %1909 = vmatmul.mubr.f32.gmra.mrb[0].mxu0 %v1720
    %v1910 = vpop.f32.mrb[0].mxu0
    %v1911 = vadd.f32 0.0, %v1910
    %v1912 = vpop.f32.mrb[0].mxu0
    %1913 = vdwg.mxu0
    %v1914 = vmul.f32 %v1906, 0.25
    %v1915 = vmul.f32 %v1911, 0.25
    %v1916 = vadd.f32 %v1914, %v321
    %v1917 = vadd.f32 %v1915, %v322
    %v1918 = vsel %vm734, %v1916, -inf
    %1919 = vmax.xlane.f32.xlu0 %v1918
    %v1920 = vpop.xlane.xlu0 %1919
    %v1921 = vsel %vm738, %v1917, -inf
    %1922 = vmax.xlane.f32.xlu0 %v1921
    %v1923 = vpop.xlane.xlu0 %1922
    %v1924 = vsub.f32 %v1916, %v1920
    %v1925 = vsub.f32 %v1917, %v1923
    %v1926 = vmul.f32 %v1924, 1.442695
    %v1927 = vpow.pop %v1926
    %v1928 = vmul.f32 %v1925, 1.442695
    %v1929 = vpow.pop %v1928
    %v1930 = vsel %vm734, %v1927, 0.0
    %1931 = vadd.xlane.f32.xlu0 %v1930
    %v1932 = vpop.xlane.xlu0 %1931
    %v1933 = vsel %vm738, %v1929, 0.0
    %1934 = vadd.xlane.f32.xlu0 %v1933
    %v1935 = vpop.xlane.xlu0 %1934
    %v1936 = vrcp.pop %v1932
    %v1937 = vrcp.pop %v1935
    %v1938 = vmul.f32 %v1927, %v1936
    %v1939 = vmul.f32 %v1929, %v1937
    %v1940 = vmul.f32 %v1706, %v766
    %v1941 = vmul.f32 %v1711, %v766
    %v1943 = vsel %vm734, %v1938, 0
    %v1946 = vsel %vm734, %v1939, 0
    %v1949 = vsel %vm885, %v1941, 0
    %1951 = vmatprep.subr.mxu0 0.0
    %1952 = vmatpush1.msra.mxu0 %v1940
    %1953 = vmatprep.subr.mxu0 0.0
    %1954 = vmatpush1.msra.mxu0 %v1949
    %1955 = vmatprep.subr.mxu0 0.0
    %1956 = vmatpush1.msra.mxu0 0.0
    %1957 = vmatprep.subr.mxu0 0.0
    %1958 = vmatpush1.msra.mxu0 0.0
    %1959 = vmatprep.subr.mxu0 0.0
    %1960 = vmatpush1.msra.mxu0 0.0
    %1961 = vmatprep.subr.mxu0 0.0
    %1962 = vmatpush1.msra.mxu0 0.0
    %1963 = vmatprep.subr.mxu0 0.0
    %1964 = vmatpush1.msra.mxu0 0.0
    %1965 = vmatprep.subr.mxu0 0.0
    %1966 = vmatpush1.msra.mxu0 0.0
    %1967 = vmatprep.subr.mxu0 0.0
    %1968 = vmatpush1.msra.mxu0 0.0
    %1969 = vmatprep.subr.mxu0 0.0
    %1970 = vmatpush1.msra.mxu0 0.0
    %1971 = vmatprep.subr.mxu0 0.0
    %1972 = vmatpush1.msra.mxu0 0.0
    %1973 = vmatprep.subr.mxu0 0.0
    %1974 = vmatpush1.msra.mxu0 0.0
    %1975 = vmatprep.subr.mxu0 0.0
    %1976 = vmatpush1.msra.mxu0 0.0
    %1977 = vmatprep.subr.mxu0 0.0
    %1978 = vmatpush1.msra.mxu0 0.0
    %1979 = vmatprep.subr.mxu0 0.0
    %1980 = vmatpush1.msra.mxu0 0.0
    %1981 = vmatprep.subr.mxu0 0.0
    %1982 = vmatpush1.msra.mxu0 0.0
    %1983 = vmatprep.subr.mxu0 0.0
    %1984 = vmatpush1.msra.mxu0 0.0
    %1985 = vmatprep.subr.mxu0 0.0
    %1986 = vmatpush1.msra.mxu0 0.0
    %1987 = vmatprep.subr.mxu0 0.0
    %1988 = vmatpush1.msra.mxu0 0.0
    %1989 = vmatprep.subr.mxu0 0.0
    %1990 = vmatpush1.msra.mxu0 0.0
    %1991 = vmatprep.subr.mxu0 0.0
    %1992 = vmatpush1.msra.mxu0 0.0
    %1993 = vmatprep.subr.mxu0 0.0
    %1994 = vmatpush1.msra.mxu0 0.0
    %1995 = vmatprep.subr.mxu0 0.0
    %1996 = vmatpush1.msra.mxu0 0.0
    %1997 = vmatprep.subr.mxu0 0.0
    %1998 = vmatpush1.msra.mxu0 0.0
    %1999 = vmatprep.subr.mxu0 0.0
    %2000 = vmatpush1.msra.mxu0 0.0
    %2001 = vmatprep.subr.mxu0 0.0
    %2002 = vmatpush1.msra.mxu0 0.0
    %2003 = vmatprep.subr.mxu0 0.0
    %2004 = vmatpush1.msra.mxu0 0.0
    %2005 = vmatprep.subr.mxu0 0.0
    %2006 = vmatpush1.msra.mxu0 0.0
    %2007 = vmatprep.subr.mxu0 0.0
    %2008 = vmatpush1.msra.mxu0 0.0
    %2009 = vmatprep.subr.mxu0 0.0
    %2010 = vmatpush1.msra.mxu0 0.0
    %2011 = vmatprep.subr.mxu0 0.0
    %2012 = vmatpush1.msra.mxu0 0.0
    %2013 = vmatprep.subr.mxu0 0.0
    %2014 = vmatpush1.msra.mxu0 0.0
    %2015 = vmatprep.mubr.f32.mxu0 0.0
    %2016 = vmatmul.mubr.f32.gmra.mrb[0].mxu0 %v1943
    %v2017 = vpop.f32.mrb[0].mxu0
    %v2018 = vadd.f32 0.0, %v2017
    %v2019 = vpop.f32.mrb[0].mxu0
    %2020 = vmatprep.mubr.f32.mxu0 0.0
    %2021 = vmatmul.mubr.f32.gmra.mrb[0].mxu0 %v1946
    %v2022 = vpop.f32.mrb[0].mxu0
    %v2023 = vadd.f32 0.0, %v2022
    %v2024 = vpop.f32.mrb[0].mxu0
    %2025 = vdwg.mxu0
    %v2027 = vsel %vm734, %v1827, 0
    %v2030 = vsel %vm734, %v1828, 0
    %v2033 = vsel %vm885, %v1830, 0
    %2035 = vmatprep.subr.mxu0 0.0
    %2036 = vmatpush1.msra.mxu0 %v1829
    %2037 = vmatprep.subr.mxu0 0.0
    %2038 = vmatpush1.msra.mxu0 %v2033
    %2039 = vmatprep.subr.mxu0 0.0
    %2040 = vmatpush1.msra.mxu0 0.0
    %2041 = vmatprep.subr.mxu0 0.0
    %2042 = vmatpush1.msra.mxu0 0.0
    %2043 = vmatprep.subr.mxu0 0.0
    %2044 = vmatpush1.msra.mxu0 0.0
    %2045 = vmatprep.subr.mxu0 0.0
    %2046 = vmatpush1.msra.mxu0 0.0
    %2047 = vmatprep.subr.mxu0 0.0
    %2048 = vmatpush1.msra.mxu0 0.0
    %2049 = vmatprep.subr.mxu0 0.0
    %2050 = vmatpush1.msra.mxu0 0.0
    %2051 = vmatprep.subr.mxu0 0.0
    %2052 = vmatpush1.msra.mxu0 0.0
    %2053 = vmatprep.subr.mxu0 0.0
    %2054 = vmatpush1.msra.mxu0 0.0
    %2055 = vmatprep.subr.mxu0 0.0
    %2056 = vmatpush1.msra.mxu0 0.0
    %2057 = vmatprep.subr.mxu0 0.0
    %2058 = vmatpush1.msra.mxu0 0.0
    %2059 = vmatprep.subr.mxu0 0.0
    %2060 = vmatpush1.msra.mxu0 0.0
    %2061 = vmatprep.subr.mxu0 0.0
    %2062 = vmatpush1.msra.mxu0 0.0
    %2063 = vmatprep.subr.mxu0 0.0
    %2064 = vmatpush1.msra.mxu0 0.0
    %2065 = vmatprep.subr.mxu0 0.0
    %2066 = vmatpush1.msra.mxu0 0.0
    %2067 = vmatprep.subr.mxu0 0.0
    %2068 = vmatpush1.msra.mxu0 0.0
    %2069 = vmatprep.subr.mxu0 0.0
    %2070 = vmatpush1.msra.mxu0 0.0
    %2071 = vmatprep.subr.mxu0 0.0
    %2072 = vmatpush1.msra.mxu0 0.0
    %2073 = vmatprep.subr.mxu0 0.0
    %2074 = vmatpush1.msra.mxu0 0.0
    %2075 = vmatprep.subr.mxu0 0.0
    %2076 = vmatpush1.msra.mxu0 0.0
    %2077 = vmatprep.subr.mxu0 0.0
    %2078 = vmatpush1.msra.mxu0 0.0
    %2079 = vmatprep.subr.mxu0 0.0
    %2080 = vmatpush1.msra.mxu0 0.0
    %2081 = vmatprep.subr.mxu0 0.0
    %2082 = vmatpush1.msra.mxu0 0.0
    %2083 = vmatprep.subr.mxu0 0.0
    %2084 = vmatpush1.msra.mxu0 0.0
    %2085 = vmatprep.subr.mxu0 0.0
    %2086 = vmatpush1.msra.mxu0 0.0
    %2087 = vmatprep.subr.mxu0 0.0
    %2088 = vmatpush1.msra.mxu0 0.0
    %2089 = vmatprep.subr.mxu0 0.0
    %2090 = vmatpush1.msra.mxu0 0.0
    %2091 = vmatprep.subr.mxu0 0.0
    %2092 = vmatpush1.msra.mxu0 0.0
    %2093 = vmatprep.subr.mxu0 0.0
    %2094 = vmatpush1.msra.mxu0 0.0
    %2095 = vmatprep.subr.mxu0 0.0
    %2096 = vmatpush1.msra.mxu0 0.0
    %2097 = vmatprep.subr.mxu0 0.0
    %2098 = vmatpush1.msra.mxu0 0.0
    %2099 = vmatprep.mubr.f32.mxu0 0.0
    %2100 = vmatmul.mubr.f32.gmra.mrb[0].mxu0 %v2027
    %v2101 = vpop.f32.mrb[0].mxu0
    %v2102 = vadd.f32 %v2018, %v2101
    %v2103 = vpop.f32.mrb[0].mxu0
    %2104 = vmatprep.mubr.f32.mxu0 0.0
    %2105 = vmatmul.mubr.f32.gmra.mrb[0].mxu0 %v2030
    %v2106 = vpop.f32.mrb[0].mxu0
    %v2107 = vadd.f32 %v2023, %v2106
    %v2108 = vpop.f32.mrb[0].mxu0
    %2109 = vdwg.mxu0
    %s2110 = scalar_lea.vmem %s14, 32
    %v2111 = vld [vmem:[%s2110] sm:$0xff]
    %v2112 = vld [vmem:[%s2110 + $0x8] sm:$0xff]
    %v2113 = vld [vmem:[%s2110 + $0x10] sm:$0xff]
    %v2114 = vld [vmem:[%s2110 + $0x18] sm:$0xff]
    %v2116 = vsel %vm325, %v2102, 0
    %v2119 = vsel %vm325, %v2107, 0
    %2121 = vmatprep.subr.mxu0 0.0
    %2122 = vmatpush1.msra.mxu0 %v2111
    %2123 = vmatprep.subr.mxu0 0.0
    %2124 = vmatpush1.msra.mxu0 %v2112
    %2125 = vmatprep.subr.mxu0 0.0
    %2126 = vmatpush1.msra.mxu0 %v2113
    %2127 = vmatprep.subr.mxu0 0.0
    %2128 = vmatpush1.msra.mxu0 %v2114
    %2129 = vmatprep.subr.mxu0 0.0
    %2130 = vmatpush1.msra.mxu0 0.0
    %2131 = vmatprep.subr.mxu0 0.0
    %2132 = vmatpush1.msra.mxu0 0.0
    %2133 = vmatprep.subr.mxu0 0.0
    %2134 = vmatpush1.msra.mxu0 0.0
    %2135 = vmatprep.subr.mxu0 0.0
    %2136 = vmatpush1.msra.mxu0 0.0
    %2137 = vmatprep.subr.mxu0 0.0
    %2138 = vmatpush1.msra.mxu0 0.0
    %2139 = vmatprep.subr.mxu0 0.0
    %2140 = vmatpush1.msra.mxu0 0.0
    %2141 = vmatprep.subr.mxu0 0.0
    %2142 = vmatpush1.msra.mxu0 0.0
    %2143 = vmatprep.subr.mxu0 0.0
    %2144 = vmatpush1.msra.mxu0 0.0
    %2145 = vmatprep.subr.mxu0 0.0
    %2146 = vmatpush1.msra.mxu0 0.0
    %2147 = vmatprep.subr.mxu0 0.0
    %2148 = vmatpush1.msra.mxu0 0.0
    %2149 = vmatprep.subr.mxu0 0.0
    %2150 = vmatpush1.msra.mxu0 0.0
    %2151 = vmatprep.subr.mxu0 0.0
    %2152 = vmatpush1.msra.mxu0 0.0
    %2153 = vmatprep.subr.mxu0 0.0
    %2154 = vmatpush1.msra.mxu0 0.0
    %2155 = vmatprep.subr.mxu0 0.0
    %2156 = vmatpush1.msra.mxu0 0.0
    %2157 = vmatprep.subr.mxu0 0.0
    %2158 = vmatpush1.msra.mxu0 0.0
    %2159 = vmatprep.subr.mxu0 0.0
    %2160 = vmatpush1.msra.mxu0 0.0
    %2161 = vmatprep.subr.mxu0 0.0
    %2162 = vmatpush1.msra.mxu0 0.0
    %2163 = vmatprep.subr.mxu0 0.0
    %2164 = vmatpush1.msra.mxu0 0.0
    %2165 = vmatprep.subr.mxu0 0.0
    %2166 = vmatpush1.msra.mxu0 0.0
    %2167 = vmatprep.subr.mxu0 0.0
    %2168 = vmatpush1.msra.mxu0 0.0
    %2169 = vmatprep.subr.mxu0 0.0
    %2170 = vmatpush1.msra.mxu0 0.0
    %2171 = vmatprep.subr.mxu0 0.0
    %2172 = vmatpush1.msra.mxu0 0.0
    %2173 = vmatprep.subr.mxu0 0.0
    %2174 = vmatpush1.msra.mxu0 0.0
    %2175 = vmatprep.subr.mxu0 0.0
    %2176 = vmatpush1.msra.mxu0 0.0
    %2177 = vmatprep.subr.mxu0 0.0
    %2178 = vmatpush1.msra.mxu0 0.0
    %2179 = vmatprep.subr.mxu0 0.0
    %2180 = vmatpush1.msra.mxu0 0.0
    %2181 = vmatprep.subr.mxu0 0.0
    %2182 = vmatpush1.msra.mxu0 0.0
    %2183 = vmatprep.subr.mxu0 0.0
    %2184 = vmatpush1.msra.mxu0 0.0
    %2185 = vmatprep.mubr.f32.mxu0 0.0
    %2186 = vmatmul.mubr.f32.gmra.mrb[0].mxu0 %v2116
    %v2187 = vpop.f32.mrb[0].mxu0
    %v2188 = vadd.f32 0.0, %v2187
    %v2189 = vpop.f32.mrb[0].mxu0
    %2190 = vmatprep.mubr.f32.mxu0 0.0
    %2191 = vmatmul.mubr.f32.gmra.mrb[0].mxu0 %v2119
    %v2192 = vpop.f32.mrb[0].mxu0
    %v2193 = vadd.f32 0.0, %v2192
    %v2194 = vpop.f32.mrb[0].mxu0
    %2195 = vdwg.mxu0
    %v2196 = vadd.f32 %v1396, %v2188
    %v2197 = vadd.f32 %v1397, %v2193
    %s2198 = scalar_lea.vmem [#allocation10], 1
    %v2199 = vld [vmem:[%s2198] sm:$0x1]
    %v2201 = vlaneseq
    %v2202 = vshrl.u32 %v2201, 7
    %v2203 = vsub.s32 0, %v2202
    %v2204 = vrot.slane %v2199, %v2203
    %v2206 = vadd.f32 %v2196, %v2204
    %v2207 = vadd.f32 %v2197, %v2204
    %s2208 = scalar_lea.vmem [#allocation11], 1
    %v2209 = vld [vmem:[%s2208] sm:$0x1]
    %s2210 = scalar_lea.vmem [#allocation13], 1
    %v2211 = vld [vmem:[%s2210] sm:$0x1]
    %v2212 = vsel %vm325, %v2206, 0.0
    %2213 = vadd.xlane.f32.xlu0 %v2212
    %v2214 = vpop.xlane.xlu0 %2213
    %v2215 = vsel %vm329, %v2207, 0.0
    %2216 = vadd.xlane.f32.xlu0 %v2215
    %v2217 = vpop.xlane.xlu0 %2216
    %v2218 = vmul.f32 %v2214, %v333
    %v2219 = vmul.f32 %v2217, %v333
    %v2220 = vsub.f32 %v2206, %v2218
    %v2221 = vsub.f32 %v2207, %v2219
    %v2222 = vmul.f32 %v2220, %v2220
    %v2223 = vmul.f32 %v2221, %v2221
    %v2224 = vsel %vm325, %v2222, 0.0
    %2225 = vadd.xlane.f32.xlu0 %v2224
    %v2226 = vpop.xlane.xlu0 %2225
    %v2227 = vsel %vm329, %v2223, 0.0
    %2228 = vadd.xlane.f32.xlu0 %v2227
    %v2229 = vpop.xlane.xlu0 %2228
    %v2230 = vmul.f32 %v2226, %v333
    %v2231 = vmul.f32 %v2229, %v333
    %v2232 = vadd.f32 %v2230, 1e-12
    %v2233 = vadd.f32 %v2231, 1e-12
    %v2234 = vrsqrt.pop %v2232
    %v2235 = vrsqrt.pop %v2233
    %v2236 = vmul.f32 %v2220, %v2234
    %v2237 = vmul.f32 %v2221, %v2235
    %v2239 = vlaneseq
    %v2240 = vshrl.u32 %v2239, 7
    %v2241 = vsub.s32 0, %v2240
    %v2242 = vrot.slane %v2209, %v2241
    %v2244 = vmul.f32 %v2236, %v2242
    %v2245 = vmul.f32 %v2237, %v2242
    %v2247 = vlaneseq
    %v2248 = vshrl.u32 %v2247, 7
    %v2249 = vsub.s32 0, %v2248
    %v2250 = vrot.slane %v2211, %v2249
    %v2252 = vadd.f32 %v2244, %v2250
    %v2253 = vadd.f32 %v2245, %v2250
    %s2254 = scalar_lea.vmem %s18, 32
    %v2255 = vld [vmem:[%s2254] sm:$0xff]
    %v2256 = vld [vmem:[%s2254 + $0x8] sm:$0xff]
    %v2257 = vld [vmem:[%s2254 + $0x10] sm:$0xff]
    %v2258 = vld [vmem:[%s2254 + $0x18] sm:$0xff]
    %s2259 = scalar_lea.vmem [#allocation14], 1
    %v2260 = vld [vmem:[%s2259] sm:$0x1]
    %v2262 = vlaneseq
    %v2263 = vshrl.u32 %v2262, 7
    %v2264 = vsub.s32 0, %v2263
    %v2265 = vrot.slane %v2260, %v2264
    %v2268 = vsel %vm325, %v2252, 0
    %v2271 = vsel %vm325, %v2253, 0
    %2273 = vmatprep.subr.mxu0 0.0
    %2274 = vmatpush1.msra.mxu0 %v2255
    %2275 = vmatprep.subr.mxu0 0.0
    %2276 = vmatpush1.msra.mxu0 %v2256
    %2277 = vmatprep.subr.mxu0 0.0
    %2278 = vmatpush1.msra.mxu0 %v2257
    %2279 = vmatprep.subr.mxu0 0.0
    %2280 = vmatpush1.msra.mxu0 %v2258
    %2281 = vmatprep.subr.mxu0 0.0
    %2282 = vmatpush1.msra.mxu0 0.0
    %2283 = vmatprep.subr.mxu0 0.0
    %2284 = vmatpush1.msra.mxu0 0.0
    %2285 = vmatprep.subr.mxu0 0.0
    %2286 = vmatpush1.msra.mxu0 0.0
    %2287 = vmatprep.subr.mxu0 0.0
    %2288 = vmatpush1.msra.mxu0 0.0
    %2289 = vmatprep.subr.mxu0 0.0
    %2290 = vmatpush1.msra.mxu0 0.0
    %2291 = vmatprep.subr.mxu0 0.0
    %2292 = vmatpush1.msra.mxu0 0.0
    %2293 = vmatprep.subr.mxu0 0.0
    %2294 = vmatpush1.msra.mxu0 0.0
    %2295 = vmatprep.subr.mxu0 0.0
    %2296 = vmatpush1.msra.mxu0 0.0
    %2297 = vmatprep.subr.mxu0 0.0
    %2298 = vmatpush1.msra.mxu0 0.0
    %2299 = vmatprep.subr.mxu0 0.0
    %2300 = vmatpush1.msra.mxu0 0.0
    %2301 = vmatprep.subr.mxu0 0.0
    %2302 = vmatpush1.msra.mxu0 0.0
    %2303 = vmatprep.subr.mxu0 0.0
    %2304 = vmatpush1.msra.mxu0 0.0
    %2305 = vmatprep.subr.mxu0 0.0
    %2306 = vmatpush1.msra.mxu0 0.0
    %2307 = vmatprep.subr.mxu0 0.0
    %2308 = vmatpush1.msra.mxu0 0.0
    %2309 = vmatprep.subr.mxu0 0.0
    %2310 = vmatpush1.msra.mxu0 0.0
    %2311 = vmatprep.subr.mxu0 0.0
    %2312 = vmatpush1.msra.mxu0 0.0
    %2313 = vmatprep.subr.mxu0 0.0
    %2314 = vmatpush1.msra.mxu0 0.0
    %2315 = vmatprep.subr.mxu0 0.0
    %2316 = vmatpush1.msra.mxu0 0.0
    %2317 = vmatprep.subr.mxu0 0.0
    %2318 = vmatpush1.msra.mxu0 0.0
    %2319 = vmatprep.subr.mxu0 0.0
    %2320 = vmatpush1.msra.mxu0 0.0
    %2321 = vmatprep.subr.mxu0 0.0
    %2322 = vmatpush1.msra.mxu0 0.0
    %2323 = vmatprep.subr.mxu0 0.0
    %2324 = vmatpush1.msra.mxu0 0.0
    %2325 = vmatprep.subr.mxu0 0.0
    %2326 = vmatpush1.msra.mxu0 0.0
    %2327 = vmatprep.subr.mxu0 0.0
    %2328 = vmatpush1.msra.mxu0 0.0
    %2329 = vmatprep.subr.mxu0 0.0
    %2330 = vmatpush1.msra.mxu0 0.0
    %2331 = vmatprep.subr.mxu0 0.0
    %2332 = vmatpush1.msra.mxu0 0.0
    %2333 = vmatprep.subr.mxu0 0.0
    %2334 = vmatpush1.msra.mxu0 0.0
    %2335 = vmatprep.subr.mxu0 0.0
    %2336 = vmatpush1.msra.mxu0 0.0
    %2337 = vmatprep.mubr.f32.mxu0 0.0
    %2338 = vmatmul.mubr.f32.gmra.mrb[0].mxu0 %v2268
    %v2339 = vpop.f32.mrb[0].mxu0
    %v2340 = vadd.f32 %v2265, %v2339
    %v2341 = vpop.f32.mrb[0].mxu0
    %2342 = vmatprep.mubr.f32.mxu0 0.0
    %2343 = vmatmul.mubr.f32.gmra.mrb[0].mxu0 %v2271
    %v2344 = vpop.f32.mrb[0].mxu0
    %v2345 = vadd.f32 %v2265, %v2344
    %v2346 = vpop.f32.mrb[0].mxu0
    %2347 = vdwg.mxu0
    %v2348 = vmul.f32 %v2340, %v2340
    %v2349 = vmul.f32 %v2345, %v2345
    %v2350 = vmul.f32 %v2340, %v2348
    %v2351 = vmul.f32 %v2345, %v2349
    %v2352 = vmul.f32 %v2350, 0.044715
    %v2353 = vmul.f32 %v2351, 0.044715
    %v2354 = vadd.f32 %v2340, %v2352
    %v2355 = vadd.f32 %v2345, %v2353
    %v2356 = vmul.f32 %v2354, 0.7978846
    %v2357 = vmul.f32 %v2355, 0.7978846
    %v2358 = vtanh.pop %v2356
    %v2359 = vtanh.pop %v2357
    %v2360 = vadd.f32 %v2358, 1.0
    %v2361 = vadd.f32 %v2359, 1.0
    %v2362 = vmul.f32 %v2360, 0.5
    %v2363 = vmul.f32 %v2361, 0.5
    %v2364 = vmul.f32 %v2340, %v2362
    %v2365 = vmul.f32 %v2345, %v2363
    %s2366 = scalar_lea.vmem %s20, 64
    %v2367 = vld [vmem:[%s2366] sm:$0xff]
    %v2368 = vld [vmem:[%s2366 + $0x8] sm:$0xff]
    %v2369 = vld [vmem:[%s2366 + $0x10] sm:$0xff]
    %v2370 = vld [vmem:[%s2366 + $0x18] sm:$0xff]
    %v2371 = vld [vmem:[%s2366 + $0x20] sm:$0xff]
    %v2372 = vld [vmem:[%s2366 + $0x28] sm:$0xff]
    %v2373 = vld [vmem:[%s2366 + $0x30] sm:$0xff]
    %v2374 = vld [vmem:[%s2366 + $0x38] sm:$0xff]
    %v2376 = vsel %vm239, %v2364, 0
    %v2379 = vsel %vm239, %v2365, 0
    %2381 = vmatprep.subr.mxu0 0.0
    %2382 = vmatpush1.msra.mxu0 %v2367
    %2383 = vmatprep.subr.mxu0 0.0
    %2384 = vmatpush1.msra.mxu0 %v2368
    %2385 = vmatprep.subr.mxu0 0.0
    %2386 = vmatpush1.msra.mxu0 %v2369
    %2387 = vmatprep.subr.mxu0 0.0
    %2388 = vmatpush1.msra.mxu0 %v2370
    %2389 = vmatprep.subr.mxu0 0.0
    %2390 = vmatpush1.msra.mxu0 %v2371
    %2391 = vmatprep.subr.mxu0 0.0
    %2392 = vmatpush1.msra.mxu0 %v2372
    %2393 = vmatprep.subr.mxu0 0.0
    %2394 = vmatpush1.msra.mxu0 %v2373
    %2395 = vmatprep.subr.mxu0 0.0
    %2396 = vmatpush1.msra.mxu0 %v2374
    %2397 = vmatprep.subr.mxu0 0.0
    %2398 = vmatpush1.msra.mxu0 0.0
    %2399 = vmatprep.subr.mxu0 0.0
    %2400 = vmatpush1.msra.mxu0 0.0
    %2401 = vmatprep.subr.mxu0 0.0
    %2402 = vmatpush1.msra.mxu0 0.0
    %2403 = vmatprep.subr.mxu0 0.0
    %2404 = vmatpush1.msra.mxu0 0.0
    %2405 = vmatprep.subr.mxu0 0.0
    %2406 = vmatpush1.msra.mxu0 0.0
    %2407 = vmatprep.subr.mxu0 0.0
    %2408 = vmatpush1.msra.mxu0 0.0
    %2409 = vmatprep.subr.mxu0 0.0
    %2410 = vmatpush1.msra.mxu0 0.0
    %2411 = vmatprep.subr.mxu0 0.0
    %2412 = vmatpush1.msra.mxu0 0.0
    %2413 = vmatprep.subr.mxu0 0.0
    %2414 = vmatpush1.msra.mxu0 0.0
    %2415 = vmatprep.subr.mxu0 0.0
    %2416 = vmatpush1.msra.mxu0 0.0
    %2417 = vmatprep.subr.mxu0 0.0
    %2418 = vmatpush1.msra.mxu0 0.0
    %2419 = vmatprep.subr.mxu0 0.0
    %2420 = vmatpush1.msra.mxu0 0.0
    %2421 = vmatprep.subr.mxu0 0.0
    %2422 = vmatpush1.msra.mxu0 0.0
    %2423 = vmatprep.subr.mxu0 0.0
    %2424 = vmatpush1.msra.mxu0 0.0
    %2425 = vmatprep.subr.mxu0 0.0
    %2426 = vmatpush1.msra.mxu0 0.0
    %2427 = vmatprep.subr.mxu0 0.0
    %2428 = vmatpush1.msra.mxu0 0.0
    %2429 = vmatprep.subr.mxu0 0.0
    %2430 = vmatpush1.msra.mxu0 0.0
    %2431 = vmatprep.subr.mxu0 0.0
    %2432 = vmatpush1.msra.mxu0 0.0
    %2433 = vmatprep.subr.mxu0 0.0
    %2434 = vmatpush1.msra.mxu0 0.0
    %2435 = vmatprep.subr.mxu0 0.0
    %2436 = vmatpush1.msra.mxu0 0.0
    %2437 = vmatprep.subr.mxu0 0.0
    %2438 = vmatpush1.msra.mxu0 0.0
    %2439 = vmatprep.subr.mxu0 0.0
    %2440 = vmatpush1.msra.mxu0 0.0
    %2441 = vmatprep.subr.mxu0 0.0
    %2442 = vmatpush1.msra.mxu0 0.0
    %2443 = vmatprep.subr.mxu0 0.0
    %2444 = vmatpush1.msra.mxu0 0.0
    %2445 = vmatprep.mubr.f32.mxu0 0.0
    %2446 = vmatmul.mubr.f32.gmra.mrb[0].mxu0 %v2376
    %v2447 = vpop.f32.mrb[0].mxu0
    %v2448 = vadd.f32 0.0, %v2447
    %v2449 = vpop.f32.mrb[0].mxu0
    %2450 = vmatprep.mubr.f32.mxu0 0.0
    %2451 = vmatmul.mubr.f32.gmra.mrb[0].mxu0 %v2379
    %v2452 = vpop.f32.mrb[0].mxu0
    %v2453 = vadd.f32 0.0, %v2452
    %v2454 = vpop.f32.mrb[0].mxu0
    %2455 = vdwg.mxu0
    %v2456 = vadd.f32 %v2206, %v2448
    %v2457 = vadd.f32 %v2207, %v2453
    %s2458 = scalar_lea.vmem [#allocation16], 1
    %v2459 = vld [vmem:[%s2458] sm:$0x1]
    %v2461 = vlaneseq
    %v2462 = vshrl.u32 %v2461, 7
    %v2463 = vsub.s32 0, %v2462
    %v2464 = vrot.slane %v2459, %v2463
    %v2466 = vadd.f32 %v2456, %v2464
    %v2467 = vadd.f32 %v2457, %v2464
    %v2468 = vld [vmem:[%s22] sm:$0x1]
    %v2469 = vld [vmem:[%s23] sm:$0x1]
    %v2470 = vsel %vm325, %v2466, 0.0
    %2471 = vadd.xlane.f32.xlu0 %v2470
    %v2472 = vpop.xlane.xlu0 %2471
    %v2473 = vsel %vm329, %v2467, 0.0
    %2474 = vadd.xlane.f32.xlu0 %v2473
    %v2475 = vpop.xlane.xlu0 %2474
    %v2476 = vmul.f32 %v2472, %v333
    %v2477 = vmul.f32 %v2475, %v333
    %v2478 = vsub.f32 %v2466, %v2476
    %v2479 = vsub.f32 %v2467, %v2477
    %v2480 = vmul.f32 %v2478, %v2478
    %v2481 = vmul.f32 %v2479, %v2479
    %v2482 = vsel %vm325, %v2480, 0.0
    %2483 = vadd.xlane.f32.xlu0 %v2482
    %v2484 = vpop.xlane.xlu0 %2483
    %v2485 = vsel %vm329, %v2481, 0.0
    %2486 = vadd.xlane.f32.xlu0 %v2485
    %v2487 = vpop.xlane.xlu0 %2486
    %v2488 = vmul.f32 %v2484, %v333
    %v2489 = vmul.f32 %v2487, %v333
    %v2490 = vadd.f32 %v2488, 1e-12
    %v2491 = vadd.f32 %v2489, 1e-12
    %v2492 = vrsqrt.pop %v2490
    %v2493 = vrsqrt.pop %v2491
    %v2494 = vmul.f32 %v2478, %v2492
    %v2495 = vmul.f32 %v2479, %v2493
    %v2497 = vlaneseq
    %v2498 = vshrl.u32 %v2497, 7
    %v2499 = vsub.s32 0, %v2498
    %v2500 = vrot.slane %v2468, %v2499
    %v2502 = vmul.f32 %v2494, %v2500
    %v2503 = vmul.f32 %v2495, %v2500
    %v2505 = vlaneseq
    %v2506 = vshrl.u32 %v2505, 7
    %v2507 = vsub.s32 0, %v2506
    %v2508 = vrot.slane %v2469, %v2507
    %v2510 = vadd.f32 %v2502, %v2508
    %v2511 = vadd.f32 %v2503, %v2508
    %2512 = vst.msk [vmem:[#allocation17] sm:$0xff] %vm325, %v2510
    %2513 = vst.msk [vmem:[#allocation17 + $0x8] sm:$0x3] %vm329, %v2511
    %v2514 = vld [vmem:[%s5] sm:$0x3]
    %v2516 = vsel %vm734, %v2514, 0
    %v2519 = vsel %vm885, %v2511, 0
    %2521 = vmatprep.subr.mxu0 0.0
    %2522 = vmatpush1.msra.mxu0 %v2510
    %2523 = vmatprep.subr.mxu0 0.0
    %2524 = vmatpush1.msra.mxu0 %v2519
    %2525 = vmatprep.subr.mxu0 0.0
    %2526 = vmatpush1.msra.mxu0 0.0
    %2527 = vmatprep.subr.mxu0 0.0
    %2528 = vmatpush1.msra.mxu0 0.0
    %2529 = vmatprep.subr.mxu0 0.0
    %2530 = vmatpush1.msra.mxu0 0.0
    %2531 = vmatprep.subr.mxu0 0.0
    %2532 = vmatpush1.msra.mxu0 0.0
    %2533 = vmatprep.subr.mxu0 0.0
    %2534 = vmatpush1.msra.mxu0 0.0
    %2535 = vmatprep.subr.mxu0 0.0
    %2536 = vmatpush1.msra.mxu0 0.0
    %2537 = vmatprep.subr.mxu0 0.0
    %2538 = vmatpush1.msra.mxu0 0.0
    %2539 = vmatprep.subr.mxu0 0.0
    %2540 = vmatpush1.msra.mxu0 0.0
    %2541 = vmatprep.subr.mxu0 0.0
    %2542 = vmatpush1.msra.mxu0 0.0
    %2543 = vmatprep.subr.mxu0 0.0
    %2544 = vmatpush1.msra.mxu0 0.0
    %2545 = vmatprep.subr.mxu0 0.0
    %2546 = vmatpush1.msra.mxu0 0.0
    %2547 = vmatprep.subr.mxu0 0.0
    %2548 = vmatpush1.msra.mxu0 0.0
    %2549 = vmatprep.subr.mxu0 0.0
    %2550 = vmatpush1.msra.mxu0 0.0
    %2551 = vmatprep.subr.mxu0 0.0
    %2552 = vmatpush1.msra.mxu0 0.0
    %2553 = vmatprep.subr.mxu0 0.0
    %2554 = vmatpush1.msra.mxu0 0.0
    %2555 = vmatprep.subr.mxu0 0.0
    %2556 = vmatpush1.msra.mxu0 0.0
    %2557 = vmatprep.subr.mxu0 0.0
    %2558 = vmatpush1.msra.mxu0 0.0
    %2559 = vmatprep.subr.mxu0 0.0
    %2560 = vmatpush1.msra.mxu0 0.0
    %2561 = vmatprep.subr.mxu0 0.0
    %2562 = vmatpush1.msra.mxu0 0.0
    %2563 = vmatprep.subr.mxu0 0.0
    %2564 = vmatpush1.msra.mxu0 0.0
    %2565 = vmatprep.subr.mxu0 0.0
    %2566 = vmatpush1.msra.mxu0 0.0
    %2567 = vmatprep.subr.mxu0 0.0
    %2568 = vmatpush1.msra.mxu0 0.0
    %2569 = vmatprep.subr.mxu0 0.0
    %2570 = vmatpush1.msra.mxu0 0.0
    %2571 = vmatprep.subr.mxu0 0.0
    %2572 = vmatpush1.msra.mxu0 0.0
    %2573 = vmatprep.subr.mxu0 0.0
    %2574 = vmatpush1.msra.mxu0 0.0
    %2575 = vmatprep.subr.mxu0 0.0
    %2576 = vmatpush1.msra.mxu0 0.0
    %2577 = vmatprep.subr.mxu0 0.0
    %2578 = vmatpush1.msra.mxu0 0.0
    %2579 = vmatprep.subr.mxu0 0.0
    %2580 = vmatpush1.msra.mxu0 0.0
    %2581 = vmatprep.subr.mxu0 0.0
    %2582 = vmatpush1.msra.mxu0 0.0
    %2583 = vmatprep.subr.mxu0 0.0
    %2584 = vmatpush1.msra.mxu0 0.0
    %2585 = vmatprep.mubr.f32.mxu0 0.0
    %2586 = vmatmul.mubr.f32.gmra.mrb[0].mxu0 %v2516
    %v2587 = vpop.f32.mrb[0].mxu0
    %v2588 = vadd.f32 0.0, %v2587
    %v2589 = vpop.f32.mrb[0].mxu0
    %2590 = vdwg.mxu0
    %v2591 = vld [vmem:[%s24] sm:$0xff]
    %v2592 = vld [vmem:[%s24 + $0x8] sm:$0xff]
    %v2593 = vld [vmem:[%s24 + $0x10] sm:$0xff]
    %v2594 = vld [vmem:[%s24 + $0x18] sm:$0xff]
    %v2595 = vld [vmem:[%s25] sm:$0x1]
    %v2597 = vlaneseq
    %v2598 = vshrl.u32 %v2597, 7
    %v2599 = vsub.s32 0, %v2598
    %v2600 = vrot.slane %v2595, %v2599
    %v2603 = vsel %vm325, %v2588, 0
    %2605 = vmatprep.subr.mxu0 0.0
    %2606 = vmatpush1.msra.mxu0 %v2591
    %2607 = vmatprep.subr.mxu0 0.0
    %2608 = vmatpush1.msra.mxu0 %v2592
    %2609 = vmatprep.subr.mxu0 0.0
    %2610 = vmatpush1.msra.mxu0 %v2593
    %2611 = vmatprep.subr.mxu0 0.0
    %2612 = vmatpush1.msra.mxu0 %v2594
    %2613 = vmatprep.subr.mxu0 0.0
    %2614 = vmatpush1.msra.mxu0 0.0
    %2615 = vmatprep.subr.mxu0 0.0
    %2616 = vmatpush1.msra.mxu0 0.0
    %2617 = vmatprep.subr.mxu0 0.0
    %2618 = vmatpush1.msra.mxu0 0.0
    %2619 = vmatprep.subr.mxu0 0.0
    %2620 = vmatpush1.msra.mxu0 0.0
    %2621 = vmatprep.subr.mxu0 0.0
    %2622 = vmatpush1.msra.mxu0 0.0
    %2623 = vmatprep.subr.mxu0 0.0
    %2624 = vmatpush1.msra.mxu0 0.0
    %2625 = vmatprep.subr.mxu0 0.0
    %2626 = vmatpush1.msra.mxu0 0.0
    %2627 = vmatprep.subr.mxu0 0.0
    %2628 = vmatpush1.msra.mxu0 0.0
    %2629 = vmatprep.subr.mxu0 0.0
    %2630 = vmatpush1.msra.mxu0 0.0
    %2631 = vmatprep.subr.mxu0 0.0
    %2632 = vmatpush1.msra.mxu0 0.0
    %2633 = vmatprep.subr.mxu0 0.0
    %2634 = vmatpush1.msra.mxu0 0.0
    %2635 = vmatprep.subr.mxu0 0.0
    %2636 = vmatpush1.msra.mxu0 0.0
    %2637 = vmatprep.subr.mxu0 0.0
    %2638 = vmatpush1.msra.mxu0 0.0
    %2639 = vmatprep.subr.mxu0 0.0
    %2640 = vmatpush1.msra.mxu0 0.0
    %2641 = vmatprep.subr.mxu0 0.0
    %2642 = vmatpush1.msra.mxu0 0.0
    %2643 = vmatprep.subr.mxu0 0.0
    %2644 = vmatpush1.msra.mxu0 0.0
    %2645 = vmatprep.subr.mxu0 0.0
    %2646 = vmatpush1.msra.mxu0 0.0
    %2647 = vmatprep.subr.mxu0 0.0
    %2648 = vmatpush1.msra.mxu0 0.0
    %2649 = vmatprep.subr.mxu0 0.0
    %2650 = vmatpush1.msra.mxu0 0.0
    %2651 = vmatprep.subr.mxu0 0.0
    %2652 = vmatpush1.msra.mxu0 0.0
    %2653 = vmatprep.subr.mxu0 0.0
    %2654 = vmatpush1.msra.mxu0 0.0
    %2655 = vmatprep.subr.mxu0 0.0
    %2656 = vmatpush1.msra.mxu0 0.0
    %2657 = vmatprep.subr.mxu0 0.0
    %2658 = vmatpush1.msra.mxu0 0.0
    %2659 = vmatprep.subr.mxu0 0.0
    %2660 = vmatpush1.msra.mxu0 0.0
    %2661 = vmatprep.subr.mxu0 0.0
    %2662 = vmatpush1.msra.mxu0 0.0
    %2663 = vmatprep.subr.mxu0 0.0
    %2664 = vmatpush1.msra.mxu0 0.0
    %2665 = vmatprep.subr.mxu0 0.0
    %2666 = vmatpush1.msra.mxu0 0.0
    %2667 = vmatprep.subr.mxu0 0.0
    %2668 = vmatpush1.msra.mxu0 0.0
    %2669 = vmatprep.mubr.f32.mxu0 0.0
    %2670 = vmatmul.mubr.f32.gmra.mrb[0].mxu0 %v2603
    %v2671 = vpop.f32.mrb[0].mxu0
    %v2672 = vadd.f32 %v2600, %v2671
    %v2673 = vpop.f32.mrb[0].mxu0
    %2674 = vdwg.mxu0
    %v2675 = vtanh.pop %v2672
    %2676 = vst.msk [vmem:[#allocation18] sm:$0x3] %vm329, %v2675
    // Predicated region
    $region142: #{tpu_custom_call.1} parent=1 // pred_check
      _
    $region143: #{tpu_custom_call.1} parent=1 // pred_check_branch
      %2678 = sbr.rel (0) target = $region145
    $region144: #{tpu_custom_call.1} parent=1 // pred_region
      %s2680 = ssub.s32 256, 256
      %2681 = vsyncadd [#allocation4], %s2680
      %s2682 = sshll.u32 [#allocation17], 4
      %s2683 = int_to_ptr.vmem [resolvable:$true] %s2682
      %2688 = dma.vmem_to_hbm [thread:$0]  %s2683, 256, %s26, [#allocation4], 128, 128, 8
    $region145: #{tpu_custom_call.1} parent=1 // pred_fallthru
      _
    // Predicated region
    $region146: #{tpu_custom_call.1} parent=1 // pred_check
      _
    $region147: #{tpu_custom_call.1} parent=1 // pred_check_branch
      %2690 = sbr.rel (0) target = $region149
    $region148: #{tpu_custom_call.1} parent=1 // pred_region
      %s2692 = ssub.s32 32, 32
      %2693 = vsyncadd [#allocation19], %s2692
      %s2695 = sshll.u32 [#allocation18], 4
      %s2696 = int_to_ptr.vmem [resolvable:$true] %s2695
      %2698 = dma.vmem_to_hbm [thread:$0]  %s2696, 32, %s27, [#allocation19]
    $region149: #{tpu_custom_call.1} parent=1 // pred_fallthru
      _
    // Predicated region
    $region150: #{tpu_custom_call.1} parent=1 // pred_check
      _
    $region151: #{tpu_custom_call.1} parent=1 // pred_check_branch
      %2700 = sbr.rel (0) target = $region153
    $region152: #{tpu_custom_call.1} parent=1 // pred_region
      %2701 = dma.done [#allocation4], 256
    $region153: #{tpu_custom_call.1} parent=1 // pred_fallthru
      _
    // Predicated region
    $region154: #{tpu_custom_call.1} parent=1 // pred_check
      _
    $region155: #{tpu_custom_call.1} parent=1 // pred_check_branch
      %2703 = sbr.rel (0) target = $region157
    $region156: #{tpu_custom_call.1} parent=1 // pred_region
      %2704 = dma.done [#allocation19], 32
    $region157: #{tpu_custom_call.1} parent=1 // pred_fallthru
      _
    %2705 = vsyncpa [#allocation3], 1
    %2706 = vsyncpa [#allocation6], 1
    %2707 = vsyncpa [#allocation9], 1
    %2708 = vsyncpa [#allocation12], 1
    %2709 = vsyncpa [#allocation15], 1
    %2710 = vsyncpa [#allocation4], 1
    %2711 = vsyncpa [#allocation19], 1

</llo_original>
